<compile_context>
chip_gen: v7x
topology: tpu7x:2x2x1
jax: 0.10.0
libtpu: 0.0.40
codegen_flags: <defaults>
</compile_context>

<pallas_src>
import functools
import math

import numpy as np
import jax
import jax.numpy as jnp
from jax.experimental import pallas as pl
from jax.experimental.pallas import tpu as pltpu

LANE = 128


# ---------------------------------------------------------------------------
# Positional encoding buffer (same math as PositionalEncoding.__init__)
# ---------------------------------------------------------------------------
def make_positional_encoding(d_model: int, max_len: int = 5000) -> jnp.ndarray:
    even_d = d_model if d_model % 2 == 0 else d_model + 1
    position = np.arange(max_len, dtype=np.float32)[:, None]
    div_term = np.exp(
        np.arange(0, even_d, 2, dtype=np.float32) * (-np.log(10000.0) / d_model)
    )
    pe = np.zeros((max_len, even_d), dtype=np.float32)
    pe[:, 0::2] = np.sin(position * div_term)
    pe[:, 1::2] = np.cos(position * div_term)
    return jnp.asarray(pe[:, :d_model])


# ---------------------------------------------------------------------------
# Fused Pallas kernel: PE add -> L encoder layers -> classifier head
# ---------------------------------------------------------------------------
def _layernorm(x, w, b, eps=1e-5):
    mu = jnp.mean(x, axis=-1, keepdims=True)
    xc = x - mu
    var = jnp.mean(xc * xc, axis=-1, keepdims=True)
    return xc * jax.lax.rsqrt(var + eps) * w + b


def fused_forward_kernel(
    x_ref, pe_ref,
    wqkv_ref, bqkv_ref, wo_ref, bo_ref,
    ln1w_ref, ln1b_ref, w1_ref, b1_ref, w2_ref, b2_ref,
    ln2w_ref, ln2b_ref, clsw_ref, clsb_ref,
    out_ref,
    attn_scr, seqrep_scr,
    *, num_layers, nhead, batch, seq,
):
    BS, D = x_ref.shape                      # (B*S, D) activation slab
    dh = D // nhead

    # SkeletonEmbedding is a reshape (done in the wrapper); add positional enc.
    h = x_ref[...] + pe_ref[...]             # (BS, D)

    for l in range(num_layers):              # static layer loop (L = 2)
        # ---- multi-head self-attention ----------------------------------
        # 1/sqrt(dh) is pre-folded into the Q columns of wqkv/bqkv.
        qkv = jnp.dot(h, wqkv_ref[l], preferred_element_type=jnp.float32) + bqkv_ref[l]
        q = qkv[:, 0 * D:1 * D]
        k = qkv[:, 1 * D:2 * D]
        v = qkv[:, 2 * D:3 * D]

        for b in range(batch):               # static batch loop (softmax blocks)
            r0 = b * seq
            for hd in range(nhead):          # static head loop
                c0 = hd * dh
                qh = q[r0:r0 + seq, c0:c0 + dh]
                kh = k[r0:r0 + seq, c0:c0 + dh]
                vh = v[r0:r0 + seq, c0:c0 + dh]
                s = jnp.dot(qh, kh.T, preferred_element_type=jnp.float32)   # (S, S)
                s = s - jnp.max(s, axis=-1, keepdims=True)
                p = jnp.exp(s)
                p = p * pl.reciprocal(jnp.sum(p, axis=-1, keepdims=True), approx=True)
                # concat(heads) laid out directly in VMEM scratch at lane offset c0
                attn_scr[r0:r0 + seq, c0:c0 + dh] = jnp.dot(
                    p, vh, preferred_element_type=jnp.float32
                )

        # single out-projection over all batch rows / heads
        attn = jnp.dot(attn_scr[...], wo_ref[l], preferred_element_type=jnp.float32) + bo_ref[l]

        # ---- residual + LayerNorm 1 --------------------------------------
        y = _layernorm(h + attn, ln1w_ref[l], ln1b_ref[l])

        # ---- feed-forward (ReLU) ------------------------------------------
        hdn = jnp.maximum(
            jnp.dot(y, w1_ref[l], preferred_element_type=jnp.float32) + b1_ref[l], 0.0
        )
        ff = jnp.dot(hdn, w2_ref[l], preferred_element_type=jnp.float32) + b2_ref[l]

        # ---- residual + LayerNorm 2 ---------------------------------------
        h = _layernorm(y + ff, ln2w_ref[l], ln2b_ref[l])

    # ---- classifier head on encoded[:, 0] (row b*S of each batch element) ---
    for b in range(batch):
        seqrep_scr[b:b + 1, :] = h[b * seq:b * seq + 1, :]
    # lane-dense (128-wide, zero-padded) output store
    out_ref[...] = (
        jnp.dot(seqrep_scr[...], clsw_ref[...], preferred_element_type=jnp.float32)
        + clsb_ref[...]
    )


# ---------------------------------------------------------------------------
# Parameter prep: stack per-layer weights, fold attention scale, pad classifier
# ---------------------------------------------------------------------------
def prepare_fused_params(layer_params, cls_w, cls_b, nhead):
    D = layer_params[0]["wqkv"].shape[0]
    dh = D // nhead
    scale = 1.0 / math.sqrt(dh)

    stacked = {
        k: jnp.stack([p[k] for p in layer_params], axis=0) for k in layer_params[0]
    }
    # fold 1/sqrt(dh) into the Q projection (weights + bias)
    stacked["wqkv"] = stacked["wqkv"].at[:, :, :D].multiply(scale)
    stacked["bqkv"] = stacked["bqkv"].at[:, :, :D].multiply(scale)

    C = cls_w.shape[1]
    Cpad = ((C + LANE - 1) // LANE) * LANE
    clsw_pad = jnp.zeros((D, Cpad), jnp.float32).at[:, :C].set(cls_w)
    clsb_pad = jnp.zeros((1, Cpad), jnp.float32).at[:, :C].set(cls_b)
    return stacked, clsw_pad, clsb_pad


# ---------------------------------------------------------------------------
# Forward wrapper: single fused pallas_call
# ---------------------------------------------------------------------------
def skeleton_transformer_forward(x, pe, layer_params, cls_w, cls_b, nhead):
    B, S, J, C = x.shape
    D = J * C
    L = len(layer_params)
    num_classes = cls_w.shape[1]

    fused, clsw_pad, clsb_pad = prepare_fused_params(layer_params, cls_w, cls_b, nhead)
    F = fused["w1"].shape[-1]
    Cpad = clsw_pad.shape[1]

    x2d = x.reshape(B * S, D)                                   # SkeletonEmbedding
    pe_bs = jnp.broadcast_to(pe[:S][None], (B, S, D)).reshape(B * S, D)

    def full(shape):
        zeros = (0,) * len(shape)
        return pl.BlockSpec(shape, lambda i, _z=zeros: _z)

    kernel = functools.partial(
        fused_forward_kernel, num_layers=L, nhead=nhead, batch=B, seq=S
    )
    logits_pad = pl.pallas_call(
        kernel,
        out_shape=jax.ShapeDtypeStruct((B, Cpad), jnp.float32),
        grid=(1,),
        in_specs=[
            full((B * S, D)), full((B * S, D)),                 # x, pe
            full((L, D, 3 * D)), full((L, 1, 3 * D)),           # wqkv, bqkv
            full((L, D, D)), full((L, 1, D)),                   # wo, bo
            full((L, 1, D)), full((L, 1, D)),                   # ln1 w/b
            full((L, D, F)), full((L, 1, F)),                   # w1, b1
            full((L, F, D)), full((L, 1, D)),                   # w2, b2
            full((L, 1, D)), full((L, 1, D)),                   # ln2 w/b
            full((D, Cpad)), full((1, Cpad)),                   # classifier
        ],
        out_specs=full((B, Cpad)),
        scratch_shapes=[
            pltpu.VMEM((B * S, D), jnp.float32),                # concat(heads) buffer
            pltpu.VMEM((B, D), jnp.float32),                    # encoded[:, 0] rows
        ],
        compiler_params=pltpu.CompilerParams(dimension_semantics=("arbitrary",)),
    )(
        x2d, pe_bs,
        fused["wqkv"], fused["bqkv"], fused["wo"], fused["bo"],
        fused["ln1w"], fused["ln1b"], fused["w1"], fused["b1"],
        fused["w2"], fused["b2"], fused["ln2w"], fused["ln2b"],
        clsw_pad, clsb_pad,
    )
    return logits_pad[:, :num_classes]


# ---------------------------------------------------------------------------
# Parameter init (deterministic, synthetic)
# ---------------------------------------------------------------------------
def init_params(key, d_model, nhead, dim_ff, num_layers, num_classes):
    layers = []
    for l in range(num_layers):
        ks = jax.random.split(jax.random.fold_in(key, l), 6)
        layers.append(dict(
            wqkv=0.05 * jax.random.normal(ks[0], (d_model, 3 * d_model), jnp.float32),
            bqkv=0.01 * jax.random.normal(ks[1], (1, 3 * d_model), jnp.float32),
            wo=0.05 * jax.random.normal(ks[2], (d_model, d_model), jnp.float32),
            bo=jnp.zeros((1, d_model), jnp.float32),
            ln1w=jnp.ones((1, d_model), jnp.float32),
            ln1b=jnp.zeros((1, d_model), jnp.float32),
            w1=0.05 * jax.random.normal(ks[3], (d_model, dim_ff), jnp.float32),
            b1=jnp.zeros((1, dim_ff), jnp.float32),
            w2=0.05 * jax.random.normal(ks[4], (dim_ff, d_model), jnp.float32),
            b2=jnp.zeros((1, d_model), jnp.float32),
            ln2w=jnp.ones((1, d_model), jnp.float32),
            ln2b=jnp.zeros((1, d_model), jnp.float32),
        ))
    kc = jax.random.fold_in(key, 999)
    cls_w = 0.05 * jax.random.normal(kc, (d_model, num_classes), jnp.float32)
    cls_b = jnp.zeros((1, num_classes), jnp.float32)
    return layers, cls_w, cls_b


# ---------------------------------------------------------------------------
# Pure-JAX reference (same math, canonical unscaled params) for correctness
# ---------------------------------------------------------------------------
def _ref_ln(z, w, b, eps=1e-5):
    mu = z.mean(-1, keepdims=True)
    var = ((z - mu) ** 2).mean(-1, keepdims=True)
    return (z - mu) / jnp.sqrt(var + eps) * w[0] + b[0]


def ref_encoder_layer(x, p, nhead):
    B, S, D = x.shape
    dh = D // nhead
    scale = 1.0 / math.sqrt(dh)
    qkv = x @ p["wqkv"] + p["bqkv"][0]
    q, k, v = qkv[..., :D], qkv[..., D:2 * D], qkv[..., 2 * D:]
    qh = q.reshape(B, S, nhead, dh).transpose(0, 2, 1, 3)
    kh = k.reshape(B, S, nhead, dh).transpose(0, 2, 1, 3)
    vh = v.reshape(B, S, nhead, dh).transpose(0, 2, 1, 3)
    s = jnp.einsum("bhqd,bhkd->bhqk", qh, kh) * scale
    pa = jax.nn.softmax(s, axis=-1)
    o = jnp.einsum("bhqk,bhkd->bhqd", pa, vh).transpose(0, 2, 1, 3).reshape(B, S, D)
    o = o @ p["wo"] + p["bo"][0]
    y = _ref_ln(x + o, p["ln1w"], p["ln1b"])
    ff = jnp.maximum(y @ p["w1"] + p["b1"][0], 0.0) @ p["w2"] + p["b2"][0]
    return _ref_ln(y + ff, p["ln2w"], p["ln2b"])


def ref_forward(x, pe, layer_params, cls_w, cls_b, nhead):
    B, S, J, C = x.shape
    h = x.reshape(B, S, J * C) + pe[None, :S, :]
    for p in layer_params:
        h = ref_encoder_layer(h, p, nhead)
    return h[:, 0] @ cls_w + cls_b[0]


# ---------------------------------------------------------------------------
if __name__ == "__main__":
    key = jax.random.PRNGKey(0)

    # Small deterministic config (num_joints*coords == d_model, d_model % nhead == 0)
    B, S, J, C = 2, 8, 8, 4
    d_model = J * C            # 32
    nhead = 4
    dim_feedforward = 64
    num_encoder_layers = 2
    num_classes = 5

    x = jax.random.normal(jax.random.fold_in(key, 7), (B, S, J, C), jnp.float32)
    layer_params, cls_w, cls_b = init_params(
        key, d_model, nhead, dim_feedforward, num_encoder_layers, num_classes
    )
    pe = make_positional_encoding(d_model, max_len=5000)

    logits = skeleton_transformer_forward(x, pe, layer_params, cls_w, cls_b, nhead)
    logits = jax.block_until_ready(logits)

    ref = jax.block_until_ready(ref_forward(x, pe, layer_params, cls_w, cls_b, nhead))
    # slightly loose tolerance: softmax denom uses the EUP approx reciprocal
    np.testing.assert_allclose(np.asarray(logits), np.asarray(ref), atol=2e-3, rtol=2e-3)

    print("KERNEL_OK")
</pallas_src>

<mosaic_0001>
module attributes {stable_mosaic.version = 11 : i64} {
  func.func @fused_forward_kernel(%arg0: i32, %arg1: memref<16x32xf32, #tpu.memory_space<vmem>>, %arg2: memref<16x32xf32, #tpu.memory_space<vmem>>, %arg3: memref<2x32x96xf32, #tpu.memory_space<vmem>>, %arg4: memref<2x1x96xf32, #tpu.memory_space<vmem>>, %arg5: memref<2x32x32xf32, #tpu.memory_space<vmem>>, %arg6: memref<2x1x32xf32, #tpu.memory_space<vmem>>, %arg7: memref<2x1x32xf32, #tpu.memory_space<vmem>>, %arg8: memref<2x1x32xf32, #tpu.memory_space<vmem>>, %arg9: memref<2x32x64xf32, #tpu.memory_space<vmem>>, %arg10: memref<2x1x64xf32, #tpu.memory_space<vmem>>, %arg11: memref<2x64x32xf32, #tpu.memory_space<vmem>>, %arg12: memref<2x1x32xf32, #tpu.memory_space<vmem>>, %arg13: memref<2x1x32xf32, #tpu.memory_space<vmem>>, %arg14: memref<2x1x32xf32, #tpu.memory_space<vmem>>, %arg15: memref<32x128xf32, #tpu.memory_space<vmem>>, %arg16: memref<1x128xf32, #tpu.memory_space<vmem>>, %arg17: memref<2x128xf32, #tpu.memory_space<vmem>>, %arg18: memref<16x32xf32, #tpu.memory_space<vmem>>, %arg19: memref<2x32xf32, #tpu.memory_space<vmem>>) attributes {dimension_semantics = [#tpu.dimension_semantics<arbitrary>], iteration_bounds = array<i64: 1>, scalar_prefetch = 0 : i64, scratch_operands = 2 : i64, tpu.core_type = #tpu.core_type<tc>, window_params = [{pipeline_mode = #tpu.pipeline_mode<synchronous>, transform_indices = @transform_0, window_bounds = array<i64: 16, 32>}, {pipeline_mode = #tpu.pipeline_mode<synchronous>, transform_indices = @transform_1, window_bounds = array<i64: 16, 32>}, {pipeline_mode = #tpu.pipeline_mode<synchronous>, transform_indices = @transform_2, window_bounds = array<i64: 2, 32, 96>}, {pipeline_mode = #tpu.pipeline_mode<synchronous>, transform_indices = @transform_3, window_bounds = array<i64: 2, 1, 96>}, {pipeline_mode = #tpu.pipeline_mode<synchronous>, transform_indices = @transform_4, window_bounds = array<i64: 2, 32, 32>}, {pipeline_mode = #tpu.pipeline_mode<synchronous>, transform_indices = @transform_5, window_bounds = array<i64: 2, 1, 32>}, {pipeline_mode = #tpu.pipeline_mode<synchronous>, transform_indices = @transform_6, window_bounds = array<i64: 2, 1, 32>}, {pipeline_mode = #tpu.pipeline_mode<synchronous>, transform_indices = @transform_7, window_bounds = array<i64: 2, 1, 32>}, {pipeline_mode = #tpu.pipeline_mode<synchronous>, transform_indices = @transform_8, window_bounds = array<i64: 2, 32, 64>}, {pipeline_mode = #tpu.pipeline_mode<synchronous>, transform_indices = @transform_9, window_bounds = array<i64: 2, 1, 64>}, {pipeline_mode = #tpu.pipeline_mode<synchronous>, transform_indices = @transform_10, window_bounds = array<i64: 2, 64, 32>}, {pipeline_mode = #tpu.pipeline_mode<synchronous>, transform_indices = @transform_11, window_bounds = array<i64: 2, 1, 32>}, {pipeline_mode = #tpu.pipeline_mode<synchronous>, transform_indices = @transform_12, window_bounds = array<i64: 2, 1, 32>}, {pipeline_mode = #tpu.pipeline_mode<synchronous>, transform_indices = @transform_13, window_bounds = array<i64: 2, 1, 32>}, {pipeline_mode = #tpu.pipeline_mode<synchronous>, transform_indices = @transform_14, window_bounds = array<i64: 32, 128>}, {pipeline_mode = #tpu.pipeline_mode<synchronous>, transform_indices = @transform_15, window_bounds = array<i64: 1, 128>}, {pipeline_mode = #tpu.pipeline_mode<synchronous>, transform_indices = @transform_16, window_bounds = array<i64: 2, 128>}]} {
    %c0 = arith.constant 0 : index
    %c0_0 = arith.constant 0 : index
    %0 = vector.load %arg1[%c0, %c0_0] : memref<16x32xf32, #tpu.memory_space<vmem>>, vector<16x32xf32>
    %c0_1 = arith.constant 0 : index
    %c0_2 = arith.constant 0 : index
    %1 = vector.load %arg2[%c0_1, %c0_2] : memref<16x32xf32, #tpu.memory_space<vmem>>, vector<16x32xf32>
    %2 = arith.addf %0, %1 : vector<16x32xf32>
    %c0_3 = arith.constant 0 : index
    %c0_4 = arith.constant 0 : index
    %c0_5 = arith.constant 0 : index
    %3 = vector.load %arg3[%c0_3, %c0_4, %c0_5] : memref<2x32x96xf32, #tpu.memory_space<vmem>>, vector<1x32x96xf32>
    %4 = vector.shape_cast %3 : vector<1x32x96xf32> to vector<32x96xf32>
    %cst = arith.constant dense<0.000000e+00> : vector<16x96xf32>
    %5 = tpu.matmul %2, %4, %cst {dimension_numbers = #tpu.dot_dimension_numbers<[1], [0], [0], [1], [0, 0, 1, 1], [], []>} : vector<16x32xf32>, vector<32x96xf32>, vector<16x96xf32> -> vector<16x96xf32>
    %c0_6 = arith.constant 0 : index
    %c0_7 = arith.constant 0 : index
    %c0_8 = arith.constant 0 : index
    %6 = vector.load %arg4[%c0_6, %c0_7, %c0_8] : memref<2x1x96xf32, #tpu.memory_space<vmem>>, vector<1x1x96xf32>
    %7 = vector.shape_cast %6 : vector<1x1x96xf32> to vector<1x96xf32>
    %8 = vector.broadcast %7 : vector<1x96xf32> to vector<16x96xf32>
    %9 = arith.addf %5, %8 : vector<16x96xf32>
    %10 = vector.extract_strided_slice %9 {offsets = [0, 0], sizes = [16, 32], strides = [1, 1]} : vector<16x96xf32> to vector<16x32xf32>
    %11 = vector.extract_strided_slice %9 {offsets = [0, 32], sizes = [16, 32], strides = [1, 1]} : vector<16x96xf32> to vector<16x32xf32>
    %12 = vector.extract_strided_slice %9 {offsets = [0, 64], sizes = [16, 32], strides = [1, 1]} : vector<16x96xf32> to vector<16x32xf32>
    %13 = vector.extract_strided_slice %10 {offsets = [0, 0], sizes = [8, 8], strides = [1, 1]} : vector<16x32xf32> to vector<8x8xf32>
    %14 = vector.extract_strided_slice %11 {offsets = [0, 0], sizes = [8, 8], strides = [1, 1]} : vector<16x32xf32> to vector<8x8xf32>
    %15 = vector.extract_strided_slice %12 {offsets = [0, 0], sizes = [8, 8], strides = [1, 1]} : vector<16x32xf32> to vector<8x8xf32>
    %16 = tpu.transpose %14, [1, 0] : vector<8x8xf32> -> vector<8x8xf32>
    %cst_9 = arith.constant dense<0.000000e+00> : vector<8x8xf32>
    %17 = tpu.matmul %13, %16, %cst_9 {dimension_numbers = #tpu.dot_dimension_numbers<[1], [0], [0], [1], [0, 0, 1, 1], [], []>} : vector<8x8xf32>, vector<8x8xf32>, vector<8x8xf32> -> vector<8x8xf32>
    %cst_10 = arith.constant dense<0xFF800000> : vector<8xf32>
    %18 = vector.multi_reduction <maximumf>, %17, %cst_10 [1] : vector<8x8xf32> to vector<8xf32>
    %19 = vector.shape_cast %18 : vector<8xf32> to vector<8x1xf32>
    %20 = vector.broadcast %19 : vector<8x1xf32> to vector<8x8xf32>
    %21 = arith.subf %17, %20 : vector<8x8xf32>
    %22 = math.exp %21 : vector<8x8xf32>
    %cst_11 = arith.constant dense<0.000000e+00> : vector<8xf32>
    %23 = vector.multi_reduction <add>, %22, %cst_11 [1] : vector<8x8xf32> to vector<8xf32>
    %24 = vector.shape_cast %23 : vector<8xf32> to vector<8x1xf32>
    %25 = tpu.reciprocal %24 {approx = true} : vector<8x1xf32> -> vector<8x1xf32>
    %26 = vector.broadcast %25 : vector<8x1xf32> to vector<8x8xf32>
    %27 = arith.mulf %22, %26 : vector<8x8xf32>
    %cst_12 = arith.constant dense<0.000000e+00> : vector<8x8xf32>
    %28 = tpu.matmul %27, %15, %cst_12 {dimension_numbers = #tpu.dot_dimension_numbers<[1], [0], [0], [1], [0, 0, 1, 1], [], []>} : vector<8x8xf32>, vector<8x8xf32>, vector<8x8xf32> -> vector<8x8xf32>
    %c0_13 = arith.constant 0 : index
    %c0_14 = arith.constant 0 : index
    %29 = vector.load %arg18[%c0_13, %c0_14] : memref<16x32xf32, #tpu.memory_space<vmem>>, vector<8x8xf32>
    tpu.vector_store %arg18[%c0_13, %c0_14], %28 {strides = array<i32>} : memref<16x32xf32, #tpu.memory_space<vmem>>, vector<8x8xf32>,
    %30 = vector.extract_strided_slice %10 {offsets = [0, 8], sizes = [8, 8], strides = [1, 1]} : vector<16x32xf32> to vector<8x8xf32>
    %31 = vector.extract_strided_slice %11 {offsets = [0, 8], sizes = [8, 8], strides = [1, 1]} : vector<16x32xf32> to vector<8x8xf32>
    %32 = vector.extract_strided_slice %12 {offsets = [0, 8], sizes = [8, 8], strides = [1, 1]} : vector<16x32xf32> to vector<8x8xf32>
    %33 = tpu.transpose %31, [1, 0] : vector<8x8xf32> -> vector<8x8xf32>
    %cst_15 = arith.constant dense<0.000000e+00> : vector<8x8xf32>
    %34 = tpu.matmul %30, %33, %cst_15 {dimension_numbers = #tpu.dot_dimension_numbers<[1], [0], [0], [1], [0, 0, 1, 1], [], []>} : vector<8x8xf32>, vector<8x8xf32>, vector<8x8xf32> -> vector<8x8xf32>
    %cst_16 = arith.constant dense<0xFF800000> : vector<8xf32>
    %35 = vector.multi_reduction <maximumf>, %34, %cst_16 [1] : vector<8x8xf32> to vector<8xf32>
    %36 = vector.shape_cast %35 : vector<8xf32> to vector<8x1xf32>
    %37 = vector.broadcast %36 : vector<8x1xf32> to vector<8x8xf32>
    %38 = arith.subf %34, %37 : vector<8x8xf32>
    %39 = math.exp %38 : vector<8x8xf32>
    %cst_17 = arith.constant dense<0.000000e+00> : vector<8xf32>
    %40 = vector.multi_reduction <add>, %39, %cst_17 [1] : vector<8x8xf32> to vector<8xf32>
    %41 = vector.shape_cast %40 : vector<8xf32> to vector<8x1xf32>
    %42 = tpu.reciprocal %41 {approx = true} : vector<8x1xf32> -> vector<8x1xf32>
    %43 = vector.broadcast %42 : vector<8x1xf32> to vector<8x8xf32>
    %44 = arith.mulf %39, %43 : vector<8x8xf32>
    %cst_18 = arith.constant dense<0.000000e+00> : vector<8x8xf32>
    %45 = tpu.matmul %44, %32, %cst_18 {dimension_numbers = #tpu.dot_dimension_numbers<[1], [0], [0], [1], [0, 0, 1, 1], [], []>} : vector<8x8xf32>, vector<8x8xf32>, vector<8x8xf32> -> vector<8x8xf32>
    %c0_19 = arith.constant 0 : index
    %c8 = arith.constant 8 : index
    %46 = vector.load %arg18[%c0_19, %c8] : memref<16x32xf32, #tpu.memory_space<vmem>>, vector<8x8xf32>
    tpu.vector_store %arg18[%c0_19, %c8], %45 {strides = array<i32>} : memref<16x32xf32, #tpu.memory_space<vmem>>, vector<8x8xf32>,
    %47 = vector.extract_strided_slice %10 {offsets = [0, 16], sizes = [8, 8], strides = [1, 1]} : vector<16x32xf32> to vector<8x8xf32>
    %48 = vector.extract_strided_slice %11 {offsets = [0, 16], sizes = [8, 8], strides = [1, 1]} : vector<16x32xf32> to vector<8x8xf32>
    %49 = vector.extract_strided_slice %12 {offsets = [0, 16], sizes = [8, 8], strides = [1, 1]} : vector<16x32xf32> to vector<8x8xf32>
    %50 = tpu.transpose %48, [1, 0] : vector<8x8xf32> -> vector<8x8xf32>
    %cst_20 = arith.constant dense<0.000000e+00> : vector<8x8xf32>
    %51 = tpu.matmul %47, %50, %cst_20 {dimension_numbers = #tpu.dot_dimension_numbers<[1], [0], [0], [1], [0, 0, 1, 1], [], []>} : vector<8x8xf32>, vector<8x8xf32>, vector<8x8xf32> -> vector<8x8xf32>
    %cst_21 = arith.constant dense<0xFF800000> : vector<8xf32>
    %52 = vector.multi_reduction <maximumf>, %51, %cst_21 [1] : vector<8x8xf32> to vector<8xf32>
    %53 = vector.shape_cast %52 : vector<8xf32> to vector<8x1xf32>
    %54 = vector.broadcast %53 : vector<8x1xf32> to vector<8x8xf32>
    %55 = arith.subf %51, %54 : vector<8x8xf32>
    %56 = math.exp %55 : vector<8x8xf32>
    %cst_22 = arith.constant dense<0.000000e+00> : vector<8xf32>
    %57 = vector.multi_reduction <add>, %56, %cst_22 [1] : vector<8x8xf32> to vector<8xf32>
    %58 = vector.shape_cast %57 : vector<8xf32> to vector<8x1xf32>
    %59 = tpu.reciprocal %58 {approx = true} : vector<8x1xf32> -> vector<8x1xf32>
    %60 = vector.broadcast %59 : vector<8x1xf32> to vector<8x8xf32>
    %61 = arith.mulf %56, %60 : vector<8x8xf32>
    %cst_23 = arith.constant dense<0.000000e+00> : vector<8x8xf32>
    %62 = tpu.matmul %61, %49, %cst_23 {dimension_numbers = #tpu.dot_dimension_numbers<[1], [0], [0], [1], [0, 0, 1, 1], [], []>} : vector<8x8xf32>, vector<8x8xf32>, vector<8x8xf32> -> vector<8x8xf32>
    %c0_24 = arith.constant 0 : index
    %c16 = arith.constant 16 : index
    %63 = vector.load %arg18[%c0_24, %c16] : memref<16x32xf32, #tpu.memory_space<vmem>>, vector<8x8xf32>
    tpu.vector_store %arg18[%c0_24, %c16], %62 {strides = array<i32>} : memref<16x32xf32, #tpu.memory_space<vmem>>, vector<8x8xf32>,
    %64 = vector.extract_strided_slice %10 {offsets = [0, 24], sizes = [8, 8], strides = [1, 1]} : vector<16x32xf32> to vector<8x8xf32>
    %65 = vector.extract_strided_slice %11 {offsets = [0, 24], sizes = [8, 8], strides = [1, 1]} : vector<16x32xf32> to vector<8x8xf32>
    %66 = vector.extract_strided_slice %12 {offsets = [0, 24], sizes = [8, 8], strides = [1, 1]} : vector<16x32xf32> to vector<8x8xf32>
    %67 = tpu.transpose %65, [1, 0] : vector<8x8xf32> -> vector<8x8xf32>
    %cst_25 = arith.constant dense<0.000000e+00> : vector<8x8xf32>
    %68 = tpu.matmul %64, %67, %cst_25 {dimension_numbers = #tpu.dot_dimension_numbers<[1], [0], [0], [1], [0, 0, 1, 1], [], []>} : vector<8x8xf32>, vector<8x8xf32>, vector<8x8xf32> -> vector<8x8xf32>
    %cst_26 = arith.constant dense<0xFF800000> : vector<8xf32>
    %69 = vector.multi_reduction <maximumf>, %68, %cst_26 [1] : vector<8x8xf32> to vector<8xf32>
    %70 = vector.shape_cast %69 : vector<8xf32> to vector<8x1xf32>
    %71 = vector.broadcast %70 : vector<8x1xf32> to vector<8x8xf32>
    %72 = arith.subf %68, %71 : vector<8x8xf32>
    %73 = math.exp %72 : vector<8x8xf32>
    %cst_27 = arith.constant dense<0.000000e+00> : vector<8xf32>
    %74 = vector.multi_reduction <add>, %73, %cst_27 [1] : vector<8x8xf32> to vector<8xf32>
    %75 = vector.shape_cast %74 : vector<8xf32> to vector<8x1xf32>
    %76 = tpu.reciprocal %75 {approx = true} : vector<8x1xf32> -> vector<8x1xf32>
    %77 = vector.broadcast %76 : vector<8x1xf32> to vector<8x8xf32>
    %78 = arith.mulf %73, %77 : vector<8x8xf32>
    %cst_28 = arith.constant dense<0.000000e+00> : vector<8x8xf32>
    %79 = tpu.matmul %78, %66, %cst_28 {dimension_numbers = #tpu.dot_dimension_numbers<[1], [0], [0], [1], [0, 0, 1, 1], [], []>} : vector<8x8xf32>, vector<8x8xf32>, vector<8x8xf32> -> vector<8x8xf32>
    %c0_29 = arith.constant 0 : index
    %c24 = arith.constant 24 : index
    %80 = vector.load %arg18[%c0_29, %c24] : memref<16x32xf32, #tpu.memory_space<vmem>>, vector<8x8xf32>
    tpu.vector_store %arg18[%c0_29, %c24], %79 {strides = array<i32>} : memref<16x32xf32, #tpu.memory_space<vmem>>, vector<8x8xf32>,
    %81 = vector.extract_strided_slice %10 {offsets = [8, 0], sizes = [8, 8], strides = [1, 1]} : vector<16x32xf32> to vector<8x8xf32>
    %82 = vector.extract_strided_slice %11 {offsets = [8, 0], sizes = [8, 8], strides = [1, 1]} : vector<16x32xf32> to vector<8x8xf32>
    %83 = vector.extract_strided_slice %12 {offsets = [8, 0], sizes = [8, 8], strides = [1, 1]} : vector<16x32xf32> to vector<8x8xf32>
    %84 = tpu.transpose %82, [1, 0] : vector<8x8xf32> -> vector<8x8xf32>
    %cst_30 = arith.constant dense<0.000000e+00> : vector<8x8xf32>
    %85 = tpu.matmul %81, %84, %cst_30 {dimension_numbers = #tpu.dot_dimension_numbers<[1], [0], [0], [1], [0, 0, 1, 1], [], []>} : vector<8x8xf32>, vector<8x8xf32>, vector<8x8xf32> -> vector<8x8xf32>
    %cst_31 = arith.constant dense<0xFF800000> : vector<8xf32>
    %86 = vector.multi_reduction <maximumf>, %85, %cst_31 [1] : vector<8x8xf32> to vector<8xf32>
    %87 = vector.shape_cast %86 : vector<8xf32> to vector<8x1xf32>
    %88 = vector.broadcast %87 : vector<8x1xf32> to vector<8x8xf32>
    %89 = arith.subf %85, %88 : vector<8x8xf32>
    %90 = math.exp %89 : vector<8x8xf32>
    %cst_32 = arith.constant dense<0.000000e+00> : vector<8xf32>
    %91 = vector.multi_reduction <add>, %90, %cst_32 [1] : vector<8x8xf32> to vector<8xf32>
    %92 = vector.shape_cast %91 : vector<8xf32> to vector<8x1xf32>
    %93 = tpu.reciprocal %92 {approx = true} : vector<8x1xf32> -> vector<8x1xf32>
    %94 = vector.broadcast %93 : vector<8x1xf32> to vector<8x8xf32>
    %95 = arith.mulf %90, %94 : vector<8x8xf32>
    %cst_33 = arith.constant dense<0.000000e+00> : vector<8x8xf32>
    %96 = tpu.matmul %95, %83, %cst_33 {dimension_numbers = #tpu.dot_dimension_numbers<[1], [0], [0], [1], [0, 0, 1, 1], [], []>} : vector<8x8xf32>, vector<8x8xf32>, vector<8x8xf32> -> vector<8x8xf32>
    %c8_34 = arith.constant 8 : index
    %c0_35 = arith.constant 0 : index
    %97 = vector.load %arg18[%c8_34, %c0_35] : memref<16x32xf32, #tpu.memory_space<vmem>>, vector<8x8xf32>
    tpu.vector_store %arg18[%c8_34, %c0_35], %96 {strides = array<i32>} : memref<16x32xf32, #tpu.memory_space<vmem>>, vector<8x8xf32>,
    %98 = vector.extract_strided_slice %10 {offsets = [8, 8], sizes = [8, 8], strides = [1, 1]} : vector<16x32xf32> to vector<8x8xf32>
    %99 = vector.extract_strided_slice %11 {offsets = [8, 8], sizes = [8, 8], strides = [1, 1]} : vector<16x32xf32> to vector<8x8xf32>
    %100 = vector.extract_strided_slice %12 {offsets = [8, 8], sizes = [8, 8], strides = [1, 1]} : vector<16x32xf32> to vector<8x8xf32>
    %101 = tpu.transpose %99, [1, 0] : vector<8x8xf32> -> vector<8x8xf32>
    %cst_36 = arith.constant dense<0.000000e+00> : vector<8x8xf32>
    %102 = tpu.matmul %98, %101, %cst_36 {dimension_numbers = #tpu.dot_dimension_numbers<[1], [0], [0], [1], [0, 0, 1, 1], [], []>} : vector<8x8xf32>, vector<8x8xf32>, vector<8x8xf32> -> vector<8x8xf32>
    %cst_37 = arith.constant dense<0xFF800000> : vector<8xf32>
    %103 = vector.multi_reduction <maximumf>, %102, %cst_37 [1] : vector<8x8xf32> to vector<8xf32>
    %104 = vector.shape_cast %103 : vector<8xf32> to vector<8x1xf32>
    %105 = vector.broadcast %104 : vector<8x1xf32> to vector<8x8xf32>
    %106 = arith.subf %102, %105 : vector<8x8xf32>
    %107 = math.exp %106 : vector<8x8xf32>
    %cst_38 = arith.constant dense<0.000000e+00> : vector<8xf32>
    %108 = vector.multi_reduction <add>, %107, %cst_38 [1] : vector<8x8xf32> to vector<8xf32>
    %109 = vector.shape_cast %108 : vector<8xf32> to vector<8x1xf32>
    %110 = tpu.reciprocal %109 {approx = true} : vector<8x1xf32> -> vector<8x1xf32>
    %111 = vector.broadcast %110 : vector<8x1xf32> to vector<8x8xf32>
    %112 = arith.mulf %107, %111 : vector<8x8xf32>
    %cst_39 = arith.constant dense<0.000000e+00> : vector<8x8xf32>
    %113 = tpu.matmul %112, %100, %cst_39 {dimension_numbers = #tpu.dot_dimension_numbers<[1], [0], [0], [1], [0, 0, 1, 1], [], []>} : vector<8x8xf32>, vector<8x8xf32>, vector<8x8xf32> -> vector<8x8xf32>
    %c8_40 = arith.constant 8 : index
    %c8_41 = arith.constant 8 : index
    %114 = vector.load %arg18[%c8_40, %c8_41] : memref<16x32xf32, #tpu.memory_space<vmem>>, vector<8x8xf32>
    tpu.vector_store %arg18[%c8_40, %c8_41], %113 {strides = array<i32>} : memref<16x32xf32, #tpu.memory_space<vmem>>, vector<8x8xf32>,
    %115 = vector.extract_strided_slice %10 {offsets = [8, 16], sizes = [8, 8], strides = [1, 1]} : vector<16x32xf32> to vector<8x8xf32>
    %116 = vector.extract_strided_slice %11 {offsets = [8, 16], sizes = [8, 8], strides = [1, 1]} : vector<16x32xf32> to vector<8x8xf32>
    %117 = vector.extract_strided_slice %12 {offsets = [8, 16], sizes = [8, 8], strides = [1, 1]} : vector<16x32xf32> to vector<8x8xf32>
    %118 = tpu.transpose %116, [1, 0] : vector<8x8xf32> -> vector<8x8xf32>
    %cst_42 = arith.constant dense<0.000000e+00> : vector<8x8xf32>
    %119 = tpu.matmul %115, %118, %cst_42 {dimension_numbers = #tpu.dot_dimension_numbers<[1], [0], [0], [1], [0, 0, 1, 1], [], []>} : vector<8x8xf32>, vector<8x8xf32>, vector<8x8xf32> -> vector<8x8xf32>
    %cst_43 = arith.constant dense<0xFF800000> : vector<8xf32>
    %120 = vector.multi_reduction <maximumf>, %119, %cst_43 [1] : vector<8x8xf32> to vector<8xf32>
    %121 = vector.shape_cast %120 : vector<8xf32> to vector<8x1xf32>
    %122 = vector.broadcast %121 : vector<8x1xf32> to vector<8x8xf32>
    %123 = arith.subf %119, %122 : vector<8x8xf32>
    %124 = math.exp %123 : vector<8x8xf32>
    %cst_44 = arith.constant dense<0.000000e+00> : vector<8xf32>
    %125 = vector.multi_reduction <add>, %124, %cst_44 [1] : vector<8x8xf32> to vector<8xf32>
    %126 = vector.shape_cast %125 : vector<8xf32> to vector<8x1xf32>
    %127 = tpu.reciprocal %126 {approx = true} : vector<8x1xf32> -> vector<8x1xf32>
    %128 = vector.broadcast %127 : vector<8x1xf32> to vector<8x8xf32>
    %129 = arith.mulf %124, %128 : vector<8x8xf32>
    %cst_45 = arith.constant dense<0.000000e+00> : vector<8x8xf32>
    %130 = tpu.matmul %129, %117, %cst_45 {dimension_numbers = #tpu.dot_dimension_numbers<[1], [0], [0], [1], [0, 0, 1, 1], [], []>} : vector<8x8xf32>, vector<8x8xf32>, vector<8x8xf32> -> vector<8x8xf32>
    %c8_46 = arith.constant 8 : index
    %c16_47 = arith.constant 16 : index
    %131 = vector.load %arg18[%c8_46, %c16_47] : memref<16x32xf32, #tpu.memory_space<vmem>>, vector<8x8xf32>
    tpu.vector_store %arg18[%c8_46, %c16_47], %130 {strides = array<i32>} : memref<16x32xf32, #tpu.memory_space<vmem>>, vector<8x8xf32>,
    %132 = vector.extract_strided_slice %10 {offsets = [8, 24], sizes = [8, 8], strides = [1, 1]} : vector<16x32xf32> to vector<8x8xf32>
    %133 = vector.extract_strided_slice %11 {offsets = [8, 24], sizes = [8, 8], strides = [1, 1]} : vector<16x32xf32> to vector<8x8xf32>
    %134 = vector.extract_strided_slice %12 {offsets = [8, 24], sizes = [8, 8], strides = [1, 1]} : vector<16x32xf32> to vector<8x8xf32>
    %135 = tpu.transpose %133, [1, 0] : vector<8x8xf32> -> vector<8x8xf32>
    %cst_48 = arith.constant dense<0.000000e+00> : vector<8x8xf32>
    %136 = tpu.matmul %132, %135, %cst_48 {dimension_numbers = #tpu.dot_dimension_numbers<[1], [0], [0], [1], [0, 0, 1, 1], [], []>} : vector<8x8xf32>, vector<8x8xf32>, vector<8x8xf32> -> vector<8x8xf32>
    %cst_49 = arith.constant dense<0xFF800000> : vector<8xf32>
    %137 = vector.multi_reduction <maximumf>, %136, %cst_49 [1] : vector<8x8xf32> to vector<8xf32>
    %138 = vector.shape_cast %137 : vector<8xf32> to vector<8x1xf32>
    %139 = vector.broadcast %138 : vector<8x1xf32> to vector<8x8xf32>
    %140 = arith.subf %136, %139 : vector<8x8xf32>
    %141 = math.exp %140 : vector<8x8xf32>
    %cst_50 = arith.constant dense<0.000000e+00> : vector<8xf32>
    %142 = vector.multi_reduction <add>, %141, %cst_50 [1] : vector<8x8xf32> to vector<8xf32>
    %143 = vector.shape_cast %142 : vector<8xf32> to vector<8x1xf32>
    %144 = tpu.reciprocal %143 {approx = true} : vector<8x1xf32> -> vector<8x1xf32>
    %145 = vector.broadcast %144 : vector<8x1xf32> to vector<8x8xf32>
    %146 = arith.mulf %141, %145 : vector<8x8xf32>
    %cst_51 = arith.constant dense<0.000000e+00> : vector<8x8xf32>
    %147 = tpu.matmul %146, %134, %cst_51 {dimension_numbers = #tpu.dot_dimension_numbers<[1], [0], [0], [1], [0, 0, 1, 1], [], []>} : vector<8x8xf32>, vector<8x8xf32>, vector<8x8xf32> -> vector<8x8xf32>
    %c8_52 = arith.constant 8 : index
    %c24_53 = arith.constant 24 : index
    %148 = vector.load %arg18[%c8_52, %c24_53] : memref<16x32xf32, #tpu.memory_space<vmem>>, vector<8x8xf32>
    tpu.vector_store %arg18[%c8_52, %c24_53], %147 {strides = array<i32>} : memref<16x32xf32, #tpu.memory_space<vmem>>, vector<8x8xf32>,
    %c0_54 = arith.constant 0 : index
    %c0_55 = arith.constant 0 : index
    %149 = vector.load %arg18[%c0_54, %c0_55] : memref<16x32xf32, #tpu.memory_space<vmem>>, vector<16x32xf32>
    %c0_56 = arith.constant 0 : index
    %c0_57 = arith.constant 0 : index
    %c0_58 = arith.constant 0 : index
    %150 = vector.load %arg5[%c0_56, %c0_57, %c0_58] : memref<2x32x32xf32, #tpu.memory_space<vmem>>, vector<1x32x32xf32>
    %151 = vector.shape_cast %150 : vector<1x32x32xf32> to vector<32x32xf32>
    %cst_59 = arith.constant dense<0.000000e+00> : vector<16x32xf32>
    %152 = tpu.matmul %149, %151, %cst_59 {dimension_numbers = #tpu.dot_dimension_numbers<[1], [0], [0], [1], [0, 0, 1, 1], [], []>} : vector<16x32xf32>, vector<32x32xf32>, vector<16x32xf32> -> vector<16x32xf32>
    %c0_60 = arith.constant 0 : index
    %c0_61 = arith.constant 0 : index
    %c0_62 = arith.constant 0 : index
    %153 = vector.load %arg6[%c0_60, %c0_61, %c0_62] : memref<2x1x32xf32, #tpu.memory_space<vmem>>, vector<1x1x32xf32>
    %154 = vector.shape_cast %153 : vector<1x1x32xf32> to vector<1x32xf32>
    %155 = vector.broadcast %154 : vector<1x32xf32> to vector<16x32xf32>
    %156 = arith.addf %152, %155 : vector<16x32xf32>
    %157 = arith.addf %2, %156 : vector<16x32xf32>
    %c0_63 = arith.constant 0 : index
    %c0_64 = arith.constant 0 : index
    %c0_65 = arith.constant 0 : index
    %158 = vector.load %arg7[%c0_63, %c0_64, %c0_65] : memref<2x1x32xf32, #tpu.memory_space<vmem>>, vector<1x1x32xf32>
    %159 = vector.shape_cast %158 : vector<1x1x32xf32> to vector<1x32xf32>
    %c0_66 = arith.constant 0 : index
    %c0_67 = arith.constant 0 : index
    %c0_68 = arith.constant 0 : index
    %160 = vector.load %arg8[%c0_66, %c0_67, %c0_68] : memref<2x1x32xf32, #tpu.memory_space<vmem>>, vector<1x1x32xf32>
    %161 = vector.shape_cast %160 : vector<1x1x32xf32> to vector<1x32xf32>
    %cst_69 = arith.constant dense<0.000000e+00> : vector<16xf32>
    %162 = vector.multi_reduction <add>, %157, %cst_69 [1] : vector<16x32xf32> to vector<16xf32>
    %163 = vector.shape_cast %162 : vector<16xf32> to vector<16x1xf32>
    %cst_70 = arith.constant 3.200000e+01 : f32
    %164 = vector.broadcast %cst_70 : f32 to vector<16x1xf32>
    %165 = arith.divf %163, %164 : vector<16x1xf32>
    %166 = vector.broadcast %165 : vector<16x1xf32> to vector<16x32xf32>
    %167 = arith.subf %157, %166 : vector<16x32xf32>
    %168 = arith.mulf %167, %167 : vector<16x32xf32>
    %cst_71 = arith.constant dense<0.000000e+00> : vector<16xf32>
    %169 = vector.multi_reduction <add>, %168, %cst_71 [1] : vector<16x32xf32> to vector<16xf32>
    %170 = vector.shape_cast %169 : vector<16xf32> to vector<16x1xf32>
    %cst_72 = arith.constant 3.200000e+01 : f32
    %171 = vector.broadcast %cst_72 : f32 to vector<16x1xf32>
    %172 = arith.divf %170, %171 : vector<16x1xf32>
    %cst_73 = arith.constant 9.99999974E-6 : f32
    %173 = vector.broadcast %cst_73 : f32 to vector<16x1xf32>
    %174 = arith.addf %172, %173 : vector<16x1xf32>
    %175 = math.rsqrt %174 : vector<16x1xf32>
    %176 = vector.broadcast %175 : vector<16x1xf32> to vector<16x32xf32>
    %177 = arith.mulf %167, %176 : vector<16x32xf32>
    %178 = vector.broadcast %159 : vector<1x32xf32> to vector<16x32xf32>
    %179 = arith.mulf %177, %178 : vector<16x32xf32>
    %180 = vector.broadcast %161 : vector<1x32xf32> to vector<16x32xf32>
    %181 = arith.addf %179, %180 : vector<16x32xf32>
    %c0_74 = arith.constant 0 : index
    %c0_75 = arith.constant 0 : index
    %c0_76 = arith.constant 0 : index
    %182 = vector.load %arg9[%c0_74, %c0_75, %c0_76] : memref<2x32x64xf32, #tpu.memory_space<vmem>>, vector<1x32x64xf32>
    %183 = vector.shape_cast %182 : vector<1x32x64xf32> to vector<32x64xf32>
    %cst_77 = arith.constant dense<0.000000e+00> : vector<16x64xf32>
    %184 = tpu.matmul %181, %183, %cst_77 {dimension_numbers = #tpu.dot_dimension_numbers<[1], [0], [0], [1], [0, 0, 1, 1], [], []>} : vector<16x32xf32>, vector<32x64xf32>, vector<16x64xf32> -> vector<16x64xf32>
    %c0_78 = arith.constant 0 : index
    %c0_79 = arith.constant 0 : index
    %c0_80 = arith.constant 0 : index
    %185 = vector.load %arg10[%c0_78, %c0_79, %c0_80] : memref<2x1x64xf32, #tpu.memory_space<vmem>>, vector<1x1x64xf32>
    %186 = vector.shape_cast %185 : vector<1x1x64xf32> to vector<1x64xf32>
    %187 = vector.broadcast %186 : vector<1x64xf32> to vector<16x64xf32>
    %188 = arith.addf %184, %187 : vector<16x64xf32>
    %cst_81 = arith.constant 0.000000e+00 : f32
    %189 = vector.broadcast %cst_81 : f32 to vector<16x64xf32>
    %190 = arith.maximumf %188, %189 : vector<16x64xf32>
    %c0_82 = arith.constant 0 : index
    %c0_83 = arith.constant 0 : index
    %c0_84 = arith.constant 0 : index
    %191 = vector.load %arg11[%c0_82, %c0_83, %c0_84] : memref<2x64x32xf32, #tpu.memory_space<vmem>>, vector<1x64x32xf32>
    %192 = vector.shape_cast %191 : vector<1x64x32xf32> to vector<64x32xf32>
    %cst_85 = arith.constant dense<0.000000e+00> : vector<16x32xf32>
    %193 = tpu.matmul %190, %192, %cst_85 {dimension_numbers = #tpu.dot_dimension_numbers<[1], [0], [0], [1], [0, 0, 1, 1], [], []>} : vector<16x64xf32>, vector<64x32xf32>, vector<16x32xf32> -> vector<16x32xf32>
    %c0_86 = arith.constant 0 : index
    %c0_87 = arith.constant 0 : index
    %c0_88 = arith.constant 0 : index
    %194 = vector.load %arg12[%c0_86, %c0_87, %c0_88] : memref<2x1x32xf32, #tpu.memory_space<vmem>>, vector<1x1x32xf32>
    %195 = vector.shape_cast %194 : vector<1x1x32xf32> to vector<1x32xf32>
    %196 = vector.broadcast %195 : vector<1x32xf32> to vector<16x32xf32>
    %197 = arith.addf %193, %196 : vector<16x32xf32>
    %198 = arith.addf %181, %197 : vector<16x32xf32>
    %c0_89 = arith.constant 0 : index
    %c0_90 = arith.constant 0 : index
    %c0_91 = arith.constant 0 : index
    %199 = vector.load %arg13[%c0_89, %c0_90, %c0_91] : memref<2x1x32xf32, #tpu.memory_space<vmem>>, vector<1x1x32xf32>
    %200 = vector.shape_cast %199 : vector<1x1x32xf32> to vector<1x32xf32>
    %c0_92 = arith.constant 0 : index
    %c0_93 = arith.constant 0 : index
    %c0_94 = arith.constant 0 : index
    %201 = vector.load %arg14[%c0_92, %c0_93, %c0_94] : memref<2x1x32xf32, #tpu.memory_space<vmem>>, vector<1x1x32xf32>
    %202 = vector.shape_cast %201 : vector<1x1x32xf32> to vector<1x32xf32>
    %cst_95 = arith.constant dense<0.000000e+00> : vector<16xf32>
    %203 = vector.multi_reduction <add>, %198, %cst_95 [1] : vector<16x32xf32> to vector<16xf32>
    %204 = vector.shape_cast %203 : vector<16xf32> to vector<16x1xf32>
    %cst_96 = arith.constant 3.200000e+01 : f32
    %205 = vector.broadcast %cst_96 : f32 to vector<16x1xf32>
    %206 = arith.divf %204, %205 : vector<16x1xf32>
    %207 = vector.broadcast %206 : vector<16x1xf32> to vector<16x32xf32>
    %208 = arith.subf %198, %207 : vector<16x32xf32>
    %209 = arith.mulf %208, %208 : vector<16x32xf32>
    %cst_97 = arith.constant dense<0.000000e+00> : vector<16xf32>
    %210 = vector.multi_reduction <add>, %209, %cst_97 [1] : vector<16x32xf32> to vector<16xf32>
    %211 = vector.shape_cast %210 : vector<16xf32> to vector<16x1xf32>
    %cst_98 = arith.constant 3.200000e+01 : f32
    %212 = vector.broadcast %cst_98 : f32 to vector<16x1xf32>
    %213 = arith.divf %211, %212 : vector<16x1xf32>
    %cst_99 = arith.constant 9.99999974E-6 : f32
    %214 = vector.broadcast %cst_99 : f32 to vector<16x1xf32>
    %215 = arith.addf %213, %214 : vector<16x1xf32>
    %216 = math.rsqrt %215 : vector<16x1xf32>
    %217 = vector.broadcast %216 : vector<16x1xf32> to vector<16x32xf32>
    %218 = arith.mulf %208, %217 : vector<16x32xf32>
    %219 = vector.broadcast %200 : vector<1x32xf32> to vector<16x32xf32>
    %220 = arith.mulf %218, %219 : vector<16x32xf32>
    %221 = vector.broadcast %202 : vector<1x32xf32> to vector<16x32xf32>
    %222 = arith.addf %220, %221 : vector<16x32xf32>
    %c1 = arith.constant 1 : index
    %c0_100 = arith.constant 0 : index
    %c0_101 = arith.constant 0 : index
    %223 = vector.load %arg3[%c1, %c0_100, %c0_101] : memref<2x32x96xf32, #tpu.memory_space<vmem>>, vector<1x32x96xf32>
    %224 = vector.shape_cast %223 : vector<1x32x96xf32> to vector<32x96xf32>
    %cst_102 = arith.constant dense<0.000000e+00> : vector<16x96xf32>
    %225 = tpu.matmul %222, %224, %cst_102 {dimension_numbers = #tpu.dot_dimension_numbers<[1], [0], [0], [1], [0, 0, 1, 1], [], []>} : vector<16x32xf32>, vector<32x96xf32>, vector<16x96xf32> -> vector<16x96xf32>
    %c1_103 = arith.constant 1 : index
    %c0_104 = arith.constant 0 : index
    %c0_105 = arith.constant 0 : index
    %226 = vector.load %arg4[%c1_103, %c0_104, %c0_105] : memref<2x1x96xf32, #tpu.memory_space<vmem>>, vector<1x1x96xf32>
    %227 = vector.shape_cast %226 : vector<1x1x96xf32> to vector<1x96xf32>
    %228 = vector.broadcast %227 : vector<1x96xf32> to vector<16x96xf32>
    %229 = arith.addf %225, %228 : vector<16x96xf32>
    %230 = vector.extract_strided_slice %229 {offsets = [0, 0], sizes = [16, 32], strides = [1, 1]} : vector<16x96xf32> to vector<16x32xf32>
    %231 = vector.extract_strided_slice %229 {offsets = [0, 32], sizes = [16, 32], strides = [1, 1]} : vector<16x96xf32> to vector<16x32xf32>
    %232 = vector.extract_strided_slice %229 {offsets = [0, 64], sizes = [16, 32], strides = [1, 1]} : vector<16x96xf32> to vector<16x32xf32>
    %233 = vector.extract_strided_slice %230 {offsets = [0, 0], sizes = [8, 8], strides = [1, 1]} : vector<16x32xf32> to vector<8x8xf32>
    %234 = vector.extract_strided_slice %231 {offsets = [0, 0], sizes = [8, 8], strides = [1, 1]} : vector<16x32xf32> to vector<8x8xf32>
    %235 = vector.extract_strided_slice %232 {offsets = [0, 0], sizes = [8, 8], strides = [1, 1]} : vector<16x32xf32> to vector<8x8xf32>
    %236 = tpu.transpose %234, [1, 0] : vector<8x8xf32> -> vector<8x8xf32>
    %cst_106 = arith.constant dense<0.000000e+00> : vector<8x8xf32>
    %237 = tpu.matmul %233, %236, %cst_106 {dimension_numbers = #tpu.dot_dimension_numbers<[1], [0], [0], [1], [0, 0, 1, 1], [], []>} : vector<8x8xf32>, vector<8x8xf32>, vector<8x8xf32> -> vector<8x8xf32>
    %cst_107 = arith.constant dense<0xFF800000> : vector<8xf32>
    %238 = vector.multi_reduction <maximumf>, %237, %cst_107 [1] : vector<8x8xf32> to vector<8xf32>
    %239 = vector.shape_cast %238 : vector<8xf32> to vector<8x1xf32>
    %240 = vector.broadcast %239 : vector<8x1xf32> to vector<8x8xf32>
    %241 = arith.subf %237, %240 : vector<8x8xf32>
    %242 = math.exp %241 : vector<8x8xf32>
    %cst_108 = arith.constant dense<0.000000e+00> : vector<8xf32>
    %243 = vector.multi_reduction <add>, %242, %cst_108 [1] : vector<8x8xf32> to vector<8xf32>
    %244 = vector.shape_cast %243 : vector<8xf32> to vector<8x1xf32>
    %245 = tpu.reciprocal %244 {approx = true} : vector<8x1xf32> -> vector<8x1xf32>
    %246 = vector.broadcast %245 : vector<8x1xf32> to vector<8x8xf32>
    %247 = arith.mulf %242, %246 : vector<8x8xf32>
    %cst_109 = arith.constant dense<0.000000e+00> : vector<8x8xf32>
    %248 = tpu.matmul %247, %235, %cst_109 {dimension_numbers = #tpu.dot_dimension_numbers<[1], [0], [0], [1], [0, 0, 1, 1], [], []>} : vector<8x8xf32>, vector<8x8xf32>, vector<8x8xf32> -> vector<8x8xf32>
    %c0_110 = arith.constant 0 : index
    %c0_111 = arith.constant 0 : index
    %249 = vector.load %arg18[%c0_110, %c0_111] : memref<16x32xf32, #tpu.memory_space<vmem>>, vector<8x8xf32>
    tpu.vector_store %arg18[%c0_110, %c0_111], %248 {strides = array<i32>} : memref<16x32xf32, #tpu.memory_space<vmem>>, vector<8x8xf32>,
    %250 = vector.extract_strided_slice %230 {offsets = [0, 8], sizes = [8, 8], strides = [1, 1]} : vector<16x32xf32> to vector<8x8xf32>
    %251 = vector.extract_strided_slice %231 {offsets = [0, 8], sizes = [8, 8], strides = [1, 1]} : vector<16x32xf32> to vector<8x8xf32>
    %252 = vector.extract_strided_slice %232 {offsets = [0, 8], sizes = [8, 8], strides = [1, 1]} : vector<16x32xf32> to vector<8x8xf32>
    %253 = tpu.transpose %251, [1, 0] : vector<8x8xf32> -> vector<8x8xf32>
    %cst_112 = arith.constant dense<0.000000e+00> : vector<8x8xf32>
    %254 = tpu.matmul %250, %253, %cst_112 {dimension_numbers = #tpu.dot_dimension_numbers<[1], [0], [0], [1], [0, 0, 1, 1], [], []>} : vector<8x8xf32>, vector<8x8xf32>, vector<8x8xf32> -> vector<8x8xf32>
    %cst_113 = arith.constant dense<0xFF800000> : vector<8xf32>
    %255 = vector.multi_reduction <maximumf>, %254, %cst_113 [1] : vector<8x8xf32> to vector<8xf32>
    %256 = vector.shape_cast %255 : vector<8xf32> to vector<8x1xf32>
    %257 = vector.broadcast %256 : vector<8x1xf32> to vector<8x8xf32>
    %258 = arith.subf %254, %257 : vector<8x8xf32>
    %259 = math.exp %258 : vector<8x8xf32>
    %cst_114 = arith.constant dense<0.000000e+00> : vector<8xf32>
    %260 = vector.multi_reduction <add>, %259, %cst_114 [1] : vector<8x8xf32> to vector<8xf32>
    %261 = vector.shape_cast %260 : vector<8xf32> to vector<8x1xf32>
    %262 = tpu.reciprocal %261 {approx = true} : vector<8x1xf32> -> vector<8x1xf32>
    %263 = vector.broadcast %262 : vector<8x1xf32> to vector<8x8xf32>
    %264 = arith.mulf %259, %263 : vector<8x8xf32>
    %cst_115 = arith.constant dense<0.000000e+00> : vector<8x8xf32>
    %265 = tpu.matmul %264, %252, %cst_115 {dimension_numbers = #tpu.dot_dimension_numbers<[1], [0], [0], [1], [0, 0, 1, 1], [], []>} : vector<8x8xf32>, vector<8x8xf32>, vector<8x8xf32> -> vector<8x8xf32>
    %c0_116 = arith.constant 0 : index
    %c8_117 = arith.constant 8 : index
    %266 = vector.load %arg18[%c0_116, %c8_117] : memref<16x32xf32, #tpu.memory_space<vmem>>, vector<8x8xf32>
    tpu.vector_store %arg18[%c0_116, %c8_117], %265 {strides = array<i32>} : memref<16x32xf32, #tpu.memory_space<vmem>>, vector<8x8xf32>,
    %267 = vector.extract_strided_slice %230 {offsets = [0, 16], sizes = [8, 8], strides = [1, 1]} : vector<16x32xf32> to vector<8x8xf32>
    %268 = vector.extract_strided_slice %231 {offsets = [0, 16], sizes = [8, 8], strides = [1, 1]} : vector<16x32xf32> to vector<8x8xf32>
    %269 = vector.extract_strided_slice %232 {offsets = [0, 16], sizes = [8, 8], strides = [1, 1]} : vector<16x32xf32> to vector<8x8xf32>
    %270 = tpu.transpose %268, [1, 0] : vector<8x8xf32> -> vector<8x8xf32>
    %cst_118 = arith.constant dense<0.000000e+00> : vector<8x8xf32>
    %271 = tpu.matmul %267, %270, %cst_118 {dimension_numbers = #tpu.dot_dimension_numbers<[1], [0], [0], [1], [0, 0, 1, 1], [], []>} : vector<8x8xf32>, vector<8x8xf32>, vector<8x8xf32> -> vector<8x8xf32>
    %cst_119 = arith.constant dense<0xFF800000> : vector<8xf32>
    %272 = vector.multi_reduction <maximumf>, %271, %cst_119 [1] : vector<8x8xf32> to vector<8xf32>
    %273 = vector.shape_cast %272 : vector<8xf32> to vector<8x1xf32>
    %274 = vector.broadcast %273 : vector<8x1xf32> to vector<8x8xf32>
    %275 = arith.subf %271, %274 : vector<8x8xf32>
    %276 = math.exp %275 : vector<8x8xf32>
    %cst_120 = arith.constant dense<0.000000e+00> : vector<8xf32>
    %277 = vector.multi_reduction <add>, %276, %cst_120 [1] : vector<8x8xf32> to vector<8xf32>
    %278 = vector.shape_cast %277 : vector<8xf32> to vector<8x1xf32>
    %279 = tpu.reciprocal %278 {approx = true} : vector<8x1xf32> -> vector<8x1xf32>
    %280 = vector.broadcast %279 : vector<8x1xf32> to vector<8x8xf32>
    %281 = arith.mulf %276, %280 : vector<8x8xf32>
    %cst_121 = arith.constant dense<0.000000e+00> : vector<8x8xf32>
    %282 = tpu.matmul %281, %269, %cst_121 {dimension_numbers = #tpu.dot_dimension_numbers<[1], [0], [0], [1], [0, 0, 1, 1], [], []>} : vector<8x8xf32>, vector<8x8xf32>, vector<8x8xf32> -> vector<8x8xf32>
    %c0_122 = arith.constant 0 : index
    %c16_123 = arith.constant 16 : index
    %283 = vector.load %arg18[%c0_122, %c16_123] : memref<16x32xf32, #tpu.memory_space<vmem>>, vector<8x8xf32>
    tpu.vector_store %arg18[%c0_122, %c16_123], %282 {strides = array<i32>} : memref<16x32xf32, #tpu.memory_space<vmem>>, vector<8x8xf32>,
    %284 = vector.extract_strided_slice %230 {offsets = [0, 24], sizes = [8, 8], strides = [1, 1]} : vector<16x32xf32> to vector<8x8xf32>
    %285 = vector.extract_strided_slice %231 {offsets = [0, 24], sizes = [8, 8], strides = [1, 1]} : vector<16x32xf32> to vector<8x8xf32>
    %286 = vector.extract_strided_slice %232 {offsets = [0, 24], sizes = [8, 8], strides = [1, 1]} : vector<16x32xf32> to vector<8x8xf32>
    %287 = tpu.transpose %285, [1, 0] : vector<8x8xf32> -> vector<8x8xf32>
    %cst_124 = arith.constant dense<0.000000e+00> : vector<8x8xf32>
    %288 = tpu.matmul %284, %287, %cst_124 {dimension_numbers = #tpu.dot_dimension_numbers<[1], [0], [0], [1], [0, 0, 1, 1], [], []>} : vector<8x8xf32>, vector<8x8xf32>, vector<8x8xf32> -> vector<8x8xf32>
    %cst_125 = arith.constant dense<0xFF800000> : vector<8xf32>
    %289 = vector.multi_reduction <maximumf>, %288, %cst_125 [1] : vector<8x8xf32> to vector<8xf32>
    %290 = vector.shape_cast %289 : vector<8xf32> to vector<8x1xf32>
    %291 = vector.broadcast %290 : vector<8x1xf32> to vector<8x8xf32>
    %292 = arith.subf %288, %291 : vector<8x8xf32>
    %293 = math.exp %292 : vector<8x8xf32>
    %cst_126 = arith.constant dense<0.000000e+00> : vector<8xf32>
    %294 = vector.multi_reduction <add>, %293, %cst_126 [1] : vector<8x8xf32> to vector<8xf32>
    %295 = vector.shape_cast %294 : vector<8xf32> to vector<8x1xf32>
    %296 = tpu.reciprocal %295 {approx = true} : vector<8x1xf32> -> vector<8x1xf32>
    %297 = vector.broadcast %296 : vector<8x1xf32> to vector<8x8xf32>
    %298 = arith.mulf %293, %297 : vector<8x8xf32>
    %cst_127 = arith.constant dense<0.000000e+00> : vector<8x8xf32>
    %299 = tpu.matmul %298, %286, %cst_127 {dimension_numbers = #tpu.dot_dimension_numbers<[1], [0], [0], [1], [0, 0, 1, 1], [], []>} : vector<8x8xf32>, vector<8x8xf32>, vector<8x8xf32> -> vector<8x8xf32>
    %c0_128 = arith.constant 0 : index
    %c24_129 = arith.constant 24 : index
    %300 = vector.load %arg18[%c0_128, %c24_129] : memref<16x32xf32, #tpu.memory_space<vmem>>, vector<8x8xf32>
    tpu.vector_store %arg18[%c0_128, %c24_129], %299 {strides = array<i32>} : memref<16x32xf32, #tpu.memory_space<vmem>>, vector<8x8xf32>,
    %301 = vector.extract_strided_slice %230 {offsets = [8, 0], sizes = [8, 8], strides = [1, 1]} : vector<16x32xf32> to vector<8x8xf32>
    %302 = vector.extract_strided_slice %231 {offsets = [8, 0], sizes = [8, 8], strides = [1, 1]} : vector<16x32xf32> to vector<8x8xf32>
    %303 = vector.extract_strided_slice %232 {offsets = [8, 0], sizes = [8, 8], strides = [1, 1]} : vector<16x32xf32> to vector<8x8xf32>
    %304 = tpu.transpose %302, [1, 0] : vector<8x8xf32> -> vector<8x8xf32>
    %cst_130 = arith.constant dense<0.000000e+00> : vector<8x8xf32>
    %305 = tpu.matmul %301, %304, %cst_130 {dimension_numbers = #tpu.dot_dimension_numbers<[1], [0], [0], [1], [0, 0, 1, 1], [], []>} : vector<8x8xf32>, vector<8x8xf32>, vector<8x8xf32> -> vector<8x8xf32>
    %cst_131 = arith.constant dense<0xFF800000> : vector<8xf32>
    %306 = vector.multi_reduction <maximumf>, %305, %cst_131 [1] : vector<8x8xf32> to vector<8xf32>
    %307 = vector.shape_cast %306 : vector<8xf32> to vector<8x1xf32>
    %308 = vector.broadcast %307 : vector<8x1xf32> to vector<8x8xf32>
    %309 = arith.subf %305, %308 : vector<8x8xf32>
    %310 = math.exp %309 : vector<8x8xf32>
    %cst_132 = arith.constant dense<0.000000e+00> : vector<8xf32>
    %311 = vector.multi_reduction <add>, %310, %cst_132 [1] : vector<8x8xf32> to vector<8xf32>
    %312 = vector.shape_cast %311 : vector<8xf32> to vector<8x1xf32>
    %313 = tpu.reciprocal %312 {approx = true} : vector<8x1xf32> -> vector<8x1xf32>
    %314 = vector.broadcast %313 : vector<8x1xf32> to vector<8x8xf32>
    %315 = arith.mulf %310, %314 : vector<8x8xf32>
    %cst_133 = arith.constant dense<0.000000e+00> : vector<8x8xf32>
    %316 = tpu.matmul %315, %303, %cst_133 {dimension_numbers = #tpu.dot_dimension_numbers<[1], [0], [0], [1], [0, 0, 1, 1], [], []>} : vector<8x8xf32>, vector<8x8xf32>, vector<8x8xf32> -> vector<8x8xf32>
    %c8_134 = arith.constant 8 : index
    %c0_135 = arith.constant 0 : index
    %317 = vector.load %arg18[%c8_134, %c0_135] : memref<16x32xf32, #tpu.memory_space<vmem>>, vector<8x8xf32>
    tpu.vector_store %arg18[%c8_134, %c0_135], %316 {strides = array<i32>} : memref<16x32xf32, #tpu.memory_space<vmem>>, vector<8x8xf32>,
    %318 = vector.extract_strided_slice %230 {offsets = [8, 8], sizes = [8, 8], strides = [1, 1]} : vector<16x32xf32> to vector<8x8xf32>
    %319 = vector.extract_strided_slice %231 {offsets = [8, 8], sizes = [8, 8], strides = [1, 1]} : vector<16x32xf32> to vector<8x8xf32>
    %320 = vector.extract_strided_slice %232 {offsets = [8, 8], sizes = [8, 8], strides = [1, 1]} : vector<16x32xf32> to vector<8x8xf32>
    %321 = tpu.transpose %319, [1, 0] : vector<8x8xf32> -> vector<8x8xf32>
    %cst_136 = arith.constant dense<0.000000e+00> : vector<8x8xf32>
    %322 = tpu.matmul %318, %321, %cst_136 {dimension_numbers = #tpu.dot_dimension_numbers<[1], [0], [0], [1], [0, 0, 1, 1], [], []>} : vector<8x8xf32>, vector<8x8xf32>, vector<8x8xf32> -> vector<8x8xf32>
    %cst_137 = arith.constant dense<0xFF800000> : vector<8xf32>
    %323 = vector.multi_reduction <maximumf>, %322, %cst_137 [1] : vector<8x8xf32> to vector<8xf32>
    %324 = vector.shape_cast %323 : vector<8xf32> to vector<8x1xf32>
    %325 = vector.broadcast %324 : vector<8x1xf32> to vector<8x8xf32>
    %326 = arith.subf %322, %325 : vector<8x8xf32>
    %327 = math.exp %326 : vector<8x8xf32>
    %cst_138 = arith.constant dense<0.000000e+00> : vector<8xf32>
    %328 = vector.multi_reduction <add>, %327, %cst_138 [1] : vector<8x8xf32> to vector<8xf32>
    %329 = vector.shape_cast %328 : vector<8xf32> to vector<8x1xf32>
    %330 = tpu.reciprocal %329 {approx = true} : vector<8x1xf32> -> vector<8x1xf32>
    %331 = vector.broadcast %330 : vector<8x1xf32> to vector<8x8xf32>
    %332 = arith.mulf %327, %331 : vector<8x8xf32>
    %cst_139 = arith.constant dense<0.000000e+00> : vector<8x8xf32>
    %333 = tpu.matmul %332, %320, %cst_139 {dimension_numbers = #tpu.dot_dimension_numbers<[1], [0], [0], [1], [0, 0, 1, 1], [], []>} : vector<8x8xf32>, vector<8x8xf32>, vector<8x8xf32> -> vector<8x8xf32>
    %c8_140 = arith.constant 8 : index
    %c8_141 = arith.constant 8 : index
    %334 = vector.load %arg18[%c8_140, %c8_141] : memref<16x32xf32, #tpu.memory_space<vmem>>, vector<8x8xf32>
    tpu.vector_store %arg18[%c8_140, %c8_141], %333 {strides = array<i32>} : memref<16x32xf32, #tpu.memory_space<vmem>>, vector<8x8xf32>,
    %335 = vector.extract_strided_slice %230 {offsets = [8, 16], sizes = [8, 8], strides = [1, 1]} : vector<16x32xf32> to vector<8x8xf32>
    %336 = vector.extract_strided_slice %231 {offsets = [8, 16], sizes = [8, 8], strides = [1, 1]} : vector<16x32xf32> to vector<8x8xf32>
    %337 = vector.extract_strided_slice %232 {offsets = [8, 16], sizes = [8, 8], strides = [1, 1]} : vector<16x32xf32> to vector<8x8xf32>
    %338 = tpu.transpose %336, [1, 0] : vector<8x8xf32> -> vector<8x8xf32>
    %cst_142 = arith.constant dense<0.000000e+00> : vector<8x8xf32>
    %339 = tpu.matmul %335, %338, %cst_142 {dimension_numbers = #tpu.dot_dimension_numbers<[1], [0], [0], [1], [0, 0, 1, 1], [], []>} : vector<8x8xf32>, vector<8x8xf32>, vector<8x8xf32> -> vector<8x8xf32>
    %cst_143 = arith.constant dense<0xFF800000> : vector<8xf32>
    %340 = vector.multi_reduction <maximumf>, %339, %cst_143 [1] : vector<8x8xf32> to vector<8xf32>
    %341 = vector.shape_cast %340 : vector<8xf32> to vector<8x1xf32>
    %342 = vector.broadcast %341 : vector<8x1xf32> to vector<8x8xf32>
    %343 = arith.subf %339, %342 : vector<8x8xf32>
    %344 = math.exp %343 : vector<8x8xf32>
    %cst_144 = arith.constant dense<0.000000e+00> : vector<8xf32>
    %345 = vector.multi_reduction <add>, %344, %cst_144 [1] : vector<8x8xf32> to vector<8xf32>
    %346 = vector.shape_cast %345 : vector<8xf32> to vector<8x1xf32>
    %347 = tpu.reciprocal %346 {approx = true} : vector<8x1xf32> -> vector<8x1xf32>
    %348 = vector.broadcast %347 : vector<8x1xf32> to vector<8x8xf32>
    %349 = arith.mulf %344, %348 : vector<8x8xf32>
    %cst_145 = arith.constant dense<0.000000e+00> : vector<8x8xf32>
    %350 = tpu.matmul %349, %337, %cst_145 {dimension_numbers = #tpu.dot_dimension_numbers<[1], [0], [0], [1], [0, 0, 1, 1], [], []>} : vector<8x8xf32>, vector<8x8xf32>, vector<8x8xf32> -> vector<8x8xf32>
    %c8_146 = arith.constant 8 : index
    %c16_147 = arith.constant 16 : index
    %351 = vector.load %arg18[%c8_146, %c16_147] : memref<16x32xf32, #tpu.memory_space<vmem>>, vector<8x8xf32>
    tpu.vector_store %arg18[%c8_146, %c16_147], %350 {strides = array<i32>} : memref<16x32xf32, #tpu.memory_space<vmem>>, vector<8x8xf32>,
    %352 = vector.extract_strided_slice %230 {offsets = [8, 24], sizes = [8, 8], strides = [1, 1]} : vector<16x32xf32> to vector<8x8xf32>
    %353 = vector.extract_strided_slice %231 {offsets = [8, 24], sizes = [8, 8], strides = [1, 1]} : vector<16x32xf32> to vector<8x8xf32>
    %354 = vector.extract_strided_slice %232 {offsets = [8, 24], sizes = [8, 8], strides = [1, 1]} : vector<16x32xf32> to vector<8x8xf32>
    %355 = tpu.transpose %353, [1, 0] : vector<8x8xf32> -> vector<8x8xf32>
    %cst_148 = arith.constant dense<0.000000e+00> : vector<8x8xf32>
    %356 = tpu.matmul %352, %355, %cst_148 {dimension_numbers = #tpu.dot_dimension_numbers<[1], [0], [0], [1], [0, 0, 1, 1], [], []>} : vector<8x8xf32>, vector<8x8xf32>, vector<8x8xf32> -> vector<8x8xf32>
    %cst_149 = arith.constant dense<0xFF800000> : vector<8xf32>
    %357 = vector.multi_reduction <maximumf>, %356, %cst_149 [1] : vector<8x8xf32> to vector<8xf32>
    %358 = vector.shape_cast %357 : vector<8xf32> to vector<8x1xf32>
    %359 = vector.broadcast %358 : vector<8x1xf32> to vector<8x8xf32>
    %360 = arith.subf %356, %359 : vector<8x8xf32>
    %361 = math.exp %360 : vector<8x8xf32>
    %cst_150 = arith.constant dense<0.000000e+00> : vector<8xf32>
    %362 = vector.multi_reduction <add>, %361, %cst_150 [1] : vector<8x8xf32> to vector<8xf32>
    %363 = vector.shape_cast %362 : vector<8xf32> to vector<8x1xf32>
    %364 = tpu.reciprocal %363 {approx = true} : vector<8x1xf32> -> vector<8x1xf32>
    %365 = vector.broadcast %364 : vector<8x1xf32> to vector<8x8xf32>
    %366 = arith.mulf %361, %365 : vector<8x8xf32>
    %cst_151 = arith.constant dense<0.000000e+00> : vector<8x8xf32>
    %367 = tpu.matmul %366, %354, %cst_151 {dimension_numbers = #tpu.dot_dimension_numbers<[1], [0], [0], [1], [0, 0, 1, 1], [], []>} : vector<8x8xf32>, vector<8x8xf32>, vector<8x8xf32> -> vector<8x8xf32>
    %c8_152 = arith.constant 8 : index
    %c24_153 = arith.constant 24 : index
    %368 = vector.load %arg18[%c8_152, %c24_153] : memref<16x32xf32, #tpu.memory_space<vmem>>, vector<8x8xf32>
    tpu.vector_store %arg18[%c8_152, %c24_153], %367 {strides = array<i32>} : memref<16x32xf32, #tpu.memory_space<vmem>>, vector<8x8xf32>,
    %c0_154 = arith.constant 0 : index
    %c0_155 = arith.constant 0 : index
    %369 = vector.load %arg18[%c0_154, %c0_155] : memref<16x32xf32, #tpu.memory_space<vmem>>, vector<16x32xf32>
    %c1_156 = arith.constant 1 : index
    %c0_157 = arith.constant 0 : index
    %c0_158 = arith.constant 0 : index
    %370 = vector.load %arg5[%c1_156, %c0_157, %c0_158] : memref<2x32x32xf32, #tpu.memory_space<vmem>>, vector<1x32x32xf32>
    %371 = vector.shape_cast %370 : vector<1x32x32xf32> to vector<32x32xf32>
    %cst_159 = arith.constant dense<0.000000e+00> : vector<16x32xf32>
    %372 = tpu.matmul %369, %371, %cst_159 {dimension_numbers = #tpu.dot_dimension_numbers<[1], [0], [0], [1], [0, 0, 1, 1], [], []>} : vector<16x32xf32>, vector<32x32xf32>, vector<16x32xf32> -> vector<16x32xf32>
    %c1_160 = arith.constant 1 : index
    %c0_161 = arith.constant 0 : index
    %c0_162 = arith.constant 0 : index
    %373 = vector.load %arg6[%c1_160, %c0_161, %c0_162] : memref<2x1x32xf32, #tpu.memory_space<vmem>>, vector<1x1x32xf32>
    %374 = vector.shape_cast %373 : vector<1x1x32xf32> to vector<1x32xf32>
    %375 = vector.broadcast %374 : vector<1x32xf32> to vector<16x32xf32>
    %376 = arith.addf %372, %375 : vector<16x32xf32>
    %377 = arith.addf %222, %376 : vector<16x32xf32>
    %c1_163 = arith.constant 1 : index
    %c0_164 = arith.constant 0 : index
    %c0_165 = arith.constant 0 : index
    %378 = vector.load %arg7[%c1_163, %c0_164, %c0_165] : memref<2x1x32xf32, #tpu.memory_space<vmem>>, vector<1x1x32xf32>
    %379 = vector.shape_cast %378 : vector<1x1x32xf32> to vector<1x32xf32>
    %c1_166 = arith.constant 1 : index
    %c0_167 = arith.constant 0 : index
    %c0_168 = arith.constant 0 : index
    %380 = vector.load %arg8[%c1_166, %c0_167, %c0_168] : memref<2x1x32xf32, #tpu.memory_space<vmem>>, vector<1x1x32xf32>
    %381 = vector.shape_cast %380 : vector<1x1x32xf32> to vector<1x32xf32>
    %cst_169 = arith.constant dense<0.000000e+00> : vector<16xf32>
    %382 = vector.multi_reduction <add>, %377, %cst_169 [1] : vector<16x32xf32> to vector<16xf32>
    %383 = vector.shape_cast %382 : vector<16xf32> to vector<16x1xf32>
    %cst_170 = arith.constant 3.200000e+01 : f32
    %384 = vector.broadcast %cst_170 : f32 to vector<16x1xf32>
    %385 = arith.divf %383, %384 : vector<16x1xf32>
    %386 = vector.broadcast %385 : vector<16x1xf32> to vector<16x32xf32>
    %387 = arith.subf %377, %386 : vector<16x32xf32>
    %388 = arith.mulf %387, %387 : vector<16x32xf32>
    %cst_171 = arith.constant dense<0.000000e+00> : vector<16xf32>
    %389 = vector.multi_reduction <add>, %388, %cst_171 [1] : vector<16x32xf32> to vector<16xf32>
    %390 = vector.shape_cast %389 : vector<16xf32> to vector<16x1xf32>
    %cst_172 = arith.constant 3.200000e+01 : f32
    %391 = vector.broadcast %cst_172 : f32 to vector<16x1xf32>
    %392 = arith.divf %390, %391 : vector<16x1xf32>
    %cst_173 = arith.constant 9.99999974E-6 : f32
    %393 = vector.broadcast %cst_173 : f32 to vector<16x1xf32>
    %394 = arith.addf %392, %393 : vector<16x1xf32>
    %395 = math.rsqrt %394 : vector<16x1xf32>
    %396 = vector.broadcast %395 : vector<16x1xf32> to vector<16x32xf32>
    %397 = arith.mulf %387, %396 : vector<16x32xf32>
    %398 = vector.broadcast %379 : vector<1x32xf32> to vector<16x32xf32>
    %399 = arith.mulf %397, %398 : vector<16x32xf32>
    %400 = vector.broadcast %381 : vector<1x32xf32> to vector<16x32xf32>
    %401 = arith.addf %399, %400 : vector<16x32xf32>
    %c1_174 = arith.constant 1 : index
    %c0_175 = arith.constant 0 : index
    %c0_176 = arith.constant 0 : index
    %402 = vector.load %arg9[%c1_174, %c0_175, %c0_176] : memref<2x32x64xf32, #tpu.memory_space<vmem>>, vector<1x32x64xf32>
    %403 = vector.shape_cast %402 : vector<1x32x64xf32> to vector<32x64xf32>
    %cst_177 = arith.constant dense<0.000000e+00> : vector<16x64xf32>
    %404 = tpu.matmul %401, %403, %cst_177 {dimension_numbers = #tpu.dot_dimension_numbers<[1], [0], [0], [1], [0, 0, 1, 1], [], []>} : vector<16x32xf32>, vector<32x64xf32>, vector<16x64xf32> -> vector<16x64xf32>
    %c1_178 = arith.constant 1 : index
    %c0_179 = arith.constant 0 : index
    %c0_180 = arith.constant 0 : index
    %405 = vector.load %arg10[%c1_178, %c0_179, %c0_180] : memref<2x1x64xf32, #tpu.memory_space<vmem>>, vector<1x1x64xf32>
    %406 = vector.shape_cast %405 : vector<1x1x64xf32> to vector<1x64xf32>
    %407 = vector.broadcast %406 : vector<1x64xf32> to vector<16x64xf32>
    %408 = arith.addf %404, %407 : vector<16x64xf32>
    %cst_181 = arith.constant 0.000000e+00 : f32
    %409 = vector.broadcast %cst_181 : f32 to vector<16x64xf32>
    %410 = arith.maximumf %408, %409 : vector<16x64xf32>
    %c1_182 = arith.constant 1 : index
    %c0_183 = arith.constant 0 : index
    %c0_184 = arith.constant 0 : index
    %411 = vector.load %arg11[%c1_182, %c0_183, %c0_184] : memref<2x64x32xf32, #tpu.memory_space<vmem>>, vector<1x64x32xf32>
    %412 = vector.shape_cast %411 : vector<1x64x32xf32> to vector<64x32xf32>
    %cst_185 = arith.constant dense<0.000000e+00> : vector<16x32xf32>
    %413 = tpu.matmul %410, %412, %cst_185 {dimension_numbers = #tpu.dot_dimension_numbers<[1], [0], [0], [1], [0, 0, 1, 1], [], []>} : vector<16x64xf32>, vector<64x32xf32>, vector<16x32xf32> -> vector<16x32xf32>
    %c1_186 = arith.constant 1 : index
    %c0_187 = arith.constant 0 : index
    %c0_188 = arith.constant 0 : index
    %414 = vector.load %arg12[%c1_186, %c0_187, %c0_188] : memref<2x1x32xf32, #tpu.memory_space<vmem>>, vector<1x1x32xf32>
    %415 = vector.shape_cast %414 : vector<1x1x32xf32> to vector<1x32xf32>
    %416 = vector.broadcast %415 : vector<1x32xf32> to vector<16x32xf32>
    %417 = arith.addf %413, %416 : vector<16x32xf32>
    %418 = arith.addf %401, %417 : vector<16x32xf32>
    %c1_189 = arith.constant 1 : index
    %c0_190 = arith.constant 0 : index
    %c0_191 = arith.constant 0 : index
    %419 = vector.load %arg13[%c1_189, %c0_190, %c0_191] : memref<2x1x32xf32, #tpu.memory_space<vmem>>, vector<1x1x32xf32>
    %420 = vector.shape_cast %419 : vector<1x1x32xf32> to vector<1x32xf32>
    %c1_192 = arith.constant 1 : index
    %c0_193 = arith.constant 0 : index
    %c0_194 = arith.constant 0 : index
    %421 = vector.load %arg14[%c1_192, %c0_193, %c0_194] : memref<2x1x32xf32, #tpu.memory_space<vmem>>, vector<1x1x32xf32>
    %422 = vector.shape_cast %421 : vector<1x1x32xf32> to vector<1x32xf32>
    %cst_195 = arith.constant dense<0.000000e+00> : vector<16xf32>
    %423 = vector.multi_reduction <add>, %418, %cst_195 [1] : vector<16x32xf32> to vector<16xf32>
    %424 = vector.shape_cast %423 : vector<16xf32> to vector<16x1xf32>
    %cst_196 = arith.constant 3.200000e+01 : f32
    %425 = vector.broadcast %cst_196 : f32 to vector<16x1xf32>
    %426 = arith.divf %424, %425 : vector<16x1xf32>
    %427 = vector.broadcast %426 : vector<16x1xf32> to vector<16x32xf32>
    %428 = arith.subf %418, %427 : vector<16x32xf32>
    %429 = arith.mulf %428, %428 : vector<16x32xf32>
    %cst_197 = arith.constant dense<0.000000e+00> : vector<16xf32>
    %430 = vector.multi_reduction <add>, %429, %cst_197 [1] : vector<16x32xf32> to vector<16xf32>
    %431 = vector.shape_cast %430 : vector<16xf32> to vector<16x1xf32>
    %cst_198 = arith.constant 3.200000e+01 : f32
    %432 = vector.broadcast %cst_198 : f32 to vector<16x1xf32>
    %433 = arith.divf %431, %432 : vector<16x1xf32>
    %cst_199 = arith.constant 9.99999974E-6 : f32
    %434 = vector.broadcast %cst_199 : f32 to vector<16x1xf32>
    %435 = arith.addf %433, %434 : vector<16x1xf32>
    %436 = math.rsqrt %435 : vector<16x1xf32>
    %437 = vector.broadcast %436 : vector<16x1xf32> to vector<16x32xf32>
    %438 = arith.mulf %428, %437 : vector<16x32xf32>
    %439 = vector.broadcast %420 : vector<1x32xf32> to vector<16x32xf32>
    %440 = arith.mulf %438, %439 : vector<16x32xf32>
    %441 = vector.broadcast %422 : vector<1x32xf32> to vector<16x32xf32>
    %442 = arith.addf %440, %441 : vector<16x32xf32>
    %443 = vector.extract_strided_slice %442 {offsets = [0, 0], sizes = [1, 32], strides = [1, 1]} : vector<16x32xf32> to vector<1x32xf32>
    %c0_200 = arith.constant 0 : index
    %c0_201 = arith.constant 0 : index
    %444 = vector.load %arg19[%c0_200, %c0_201] : memref<2x32xf32, #tpu.memory_space<vmem>>, vector<1x32xf32>
    tpu.vector_store %arg19[%c0_200, %c0_201], %443 {strides = array<i32>} : memref<2x32xf32, #tpu.memory_space<vmem>>, vector<1x32xf32>,
    %445 = vector.extract_strided_slice %442 {offsets = [8, 0], sizes = [1, 32], strides = [1, 1]} : vector<16x32xf32> to vector<1x32xf32>
    %c1_202 = arith.constant 1 : index
    %c0_203 = arith.constant 0 : index
    %446 = vector.load %arg19[%c1_202, %c0_203] : memref<2x32xf32, #tpu.memory_space<vmem>>, vector<1x32xf32>
    tpu.vector_store %arg19[%c1_202, %c0_203], %445 {strides = array<i32>} : memref<2x32xf32, #tpu.memory_space<vmem>>, vector<1x32xf32>,
    %c0_204 = arith.constant 0 : index
    %c0_205 = arith.constant 0 : index
    %447 = vector.load %arg19[%c0_204, %c0_205] : memref<2x32xf32, #tpu.memory_space<vmem>>, vector<2x32xf32>
    %c0_206 = arith.constant 0 : index
    %c0_207 = arith.constant 0 : index
    %448 = vector.load %arg15[%c0_206, %c0_207] : memref<32x128xf32, #tpu.memory_space<vmem>>, vector<32x128xf32>
    %cst_208 = arith.constant dense<0.000000e+00> : vector<2x128xf32>
    %449 = tpu.matmul %447, %448, %cst_208 {dimension_numbers = #tpu.dot_dimension_numbers<[1], [0], [0], [1], [0, 0, 1, 1], [], []>} : vector<2x32xf32>, vector<32x128xf32>, vector<2x128xf32> -> vector<2x128xf32>
    %c0_209 = arith.constant 0 : index
    %c0_210 = arith.constant 0 : index
    %450 = vector.load %arg16[%c0_209, %c0_210] : memref<1x128xf32, #tpu.memory_space<vmem>>, vector<1x128xf32>
    %451 = vector.broadcast %450 : vector<1x128xf32> to vector<2x128xf32>
    %452 = arith.addf %449, %451 : vector<2x128xf32>
    %c0_211 = arith.constant 0 : index
    %c0_212 = arith.constant 0 : index
    %453 = vector.load %arg17[%c0_211, %c0_212] : memref<2x128xf32, #tpu.memory_space<vmem>>, vector<2x128xf32>
    tpu.vector_store %arg17[%c0_211, %c0_212], %452 {strides = array<i32>} : memref<2x128xf32, #tpu.memory_space<vmem>>, vector<2x128xf32>,
    return
  }
  func.func @transform_0(%arg0: i32) -> (i32, i32) {
    %c0_i32 = arith.constant 0 : i32
    %c0_i32_0 = arith.constant 0 : i32
    %c0_i32_1 = arith.constant 0 : i32
    return %c0_i32, %c0_i32_0 : i32, i32
  }
  func.func @transform_1(%arg0: i32) -> (i32, i32) {
    %c0_i32 = arith.constant 0 : i32
    %c0_i32_0 = arith.constant 0 : i32
    %c0_i32_1 = arith.constant 0 : i32
    return %c0_i32, %c0_i32_0 : i32, i32
  }
  func.func @transform_2(%arg0: i32) -> (i32, i32, i32) {
    %c0_i32 = arith.constant 0 : i32
    %c0_i32_0 = arith.constant 0 : i32
    %c0_i32_1 = arith.constant 0 : i32
    %c0_i32_2 = arith.constant 0 : i32
    return %c0_i32, %c0_i32_0, %c0_i32_1 : i32, i32, i32
  }
  func.func @transform_3(%arg0: i32) -> (i32, i32, i32) {
    %c0_i32 = arith.constant 0 : i32
    %c0_i32_0 = arith.constant 0 : i32
    %c0_i32_1 = arith.constant 0 : i32
    %c0_i32_2 = arith.constant 0 : i32
    return %c0_i32, %c0_i32_0, %c0_i32_1 : i32, i32, i32
  }
  func.func @transform_4(%arg0: i32) -> (i32, i32, i32) {
    %c0_i32 = arith.constant 0 : i32
    %c0_i32_0 = arith.constant 0 : i32
    %c0_i32_1 = arith.constant 0 : i32
    %c0_i32_2 = arith.constant 0 : i32
    return %c0_i32, %c0_i32_0, %c0_i32_1 : i32, i32, i32
  }
  func.func @transform_5(%arg0: i32) -> (i32, i32, i32) {
    %c0_i32 = arith.constant 0 : i32
    %c0_i32_0 = arith.constant 0 : i32
    %c0_i32_1 = arith.constant 0 : i32
    %c0_i32_2 = arith.constant 0 : i32
    return %c0_i32, %c0_i32_0, %c0_i32_1 : i32, i32, i32
  }
  func.func @transform_6(%arg0: i32) -> (i32, i32, i32) {
    %c0_i32 = arith.constant 0 : i32
    %c0_i32_0 = arith.constant 0 : i32
    %c0_i32_1 = arith.constant 0 : i32
    %c0_i32_2 = arith.constant 0 : i32
    return %c0_i32, %c0_i32_0, %c0_i32_1 : i32, i32, i32
  }
  func.func @transform_7(%arg0: i32) -> (i32, i32, i32) {
    %c0_i32 = arith.constant 0 : i32
    %c0_i32_0 = arith.constant 0 : i32
    %c0_i32_1 = arith.constant 0 : i32
    %c0_i32_2 = arith.constant 0 : i32
    return %c0_i32, %c0_i32_0, %c0_i32_1 : i32, i32, i32
  }
  func.func @transform_8(%arg0: i32) -> (i32, i32, i32) {
    %c0_i32 = arith.constant 0 : i32
    %c0_i32_0 = arith.constant 0 : i32
    %c0_i32_1 = arith.constant 0 : i32
    %c0_i32_2 = arith.constant 0 : i32
    return %c0_i32, %c0_i32_0, %c0_i32_1 : i32, i32, i32
  }
  func.func @transform_9(%arg0: i32) -> (i32, i32, i32) {
    %c0_i32 = arith.constant 0 : i32
    %c0_i32_0 = arith.constant 0 : i32
    %c0_i32_1 = arith.constant 0 : i32
    %c0_i32_2 = arith.constant 0 : i32
    return %c0_i32, %c0_i32_0, %c0_i32_1 : i32, i32, i32
  }
  func.func @transform_10(%arg0: i32) -> (i32, i32, i32) {
    %c0_i32 = arith.constant 0 : i32
    %c0_i32_0 = arith.constant 0 : i32
    %c0_i32_1 = arith.constant 0 : i32
    %c0_i32_2 = arith.constant 0 : i32
    return %c0_i32, %c0_i32_0, %c0_i32_1 : i32, i32, i32
  }
  func.func @transform_11(%arg0: i32) -> (i32, i32, i32) {
    %c0_i32 = arith.constant 0 : i32
    %c0_i32_0 = arith.constant 0 : i32
    %c0_i32_1 = arith.constant 0 : i32
    %c0_i32_2 = arith.constant 0 : i32
    return %c0_i32, %c0_i32_0, %c0_i32_1 : i32, i32, i32
  }
  func.func @transform_12(%arg0: i32) -> (i32, i32, i32) {
    %c0_i32 = arith.constant 0 : i32
    %c0_i32_0 = arith.constant 0 : i32
    %c0_i32_1 = arith.constant 0 : i32
    %c0_i32_2 = arith.constant 0 : i32
    return %c0_i32, %c0_i32_0, %c0_i32_1 : i32, i32, i32
  }
  func.func @transform_13(%arg0: i32) -> (i32, i32, i32) {
    %c0_i32 = arith.constant 0 : i32
    %c0_i32_0 = arith.constant 0 : i32
    %c0_i32_1 = arith.constant 0 : i32
    %c0_i32_2 = arith.constant 0 : i32
    return %c0_i32, %c0_i32_0, %c0_i32_1 : i32, i32, i32
  }
  func.func @transform_14(%arg0: i32) -> (i32, i32) {
    %c0_i32 = arith.constant 0 : i32
    %c0_i32_0 = arith.constant 0 : i32
    %c0_i32_1 = arith.constant 0 : i32
    return %c0_i32, %c0_i32_0 : i32, i32
  }
  func.func @transform_15(%arg0: i32) -> (i32, i32) {
    %c0_i32 = arith.constant 0 : i32
    %c0_i32_0 = arith.constant 0 : i32
    %c0_i32_1 = arith.constant 0 : i32
    return %c0_i32, %c0_i32_0 : i32, i32
  }
  func.func @transform_16(%arg0: i32) -> (i32, i32) {
    %c0_i32 = arith.constant 0 : i32
    %c0_i32_0 = arith.constant 0 : i32
    %c0_i32_1 = arith.constant 0 : i32
    return %c0_i32, %c0_i32_0 : i32, i32
  }
}

</mosaic_0001>

<llo_original>
// kernel: tpu_custom_call.1
$region0: #{tpu_custom_call.1}
  #allocation0 [shape = 'u32[]', space=smem, size = 0x4, offset = 0x4, fixed_abs, tag = 'smem constant byte address 0x4 - core index']
  #allocation1 [shape = 'u32[144,128]{1,0:T(1,128)}', space=vmem, size = 0x12000, scoped, tag = 'internal scratch']
  #allocation2 [shape = 'f32[16,32]{1,0:T(8,128)}', space=vmem, size = 0x2000, scoped, tag = 'scratch operand']
  #allocation3 [shape = 'f32[2,32]{1,0:T(2,128)}', space=vmem, size = 0x400, scoped, tag = 'scratch operand']
  %s0 = inlined_call_operand.hbm [shape: f32[16,32], index: 0, kind: input, shape index: {}]
  %s1 = inlined_call_operand.hbm [shape: f32[16,32], index: 1, kind: input, shape index: {}]
  %s2 = inlined_call_operand.vmem [shape: f32[2,32,96], index: 2, kind: input, shape index: {}]
  %s3 = inlined_call_operand.vmem [shape: f32[2,1,96], index: 3, kind: input, shape index: {}]
  %s4 = inlined_call_operand.vmem [shape: f32[2,32,32], index: 4, kind: input, shape index: {}]
  %s5 = inlined_call_operand.hbm [shape: f32[2,1,32], index: 5, kind: input, shape index: {}]
  %s6 = inlined_call_operand.hbm [shape: f32[2,1,32], index: 6, kind: input, shape index: {}]
  %s7 = inlined_call_operand.hbm [shape: f32[2,1,32], index: 7, kind: input, shape index: {}]
  %s8 = inlined_call_operand.vmem [shape: f32[2,32,64], index: 8, kind: input, shape index: {}]
  %s9 = inlined_call_operand.hbm [shape: f32[2,1,64], index: 9, kind: input, shape index: {}]
  %s10 = inlined_call_operand.vmem [shape: f32[2,64,32], index: 10, kind: input, shape index: {}]
  %s11 = inlined_call_operand.vmem [shape: f32[2,1,32], index: 11, kind: input, shape index: {}]
  %s12 = inlined_call_operand.vmem [shape: f32[2,1,32], index: 12, kind: input, shape index: {}]
  %s13 = inlined_call_operand.vmem [shape: f32[2,1,32], index: 13, kind: input, shape index: {}]
  %s14 = inlined_call_operand.vmem [shape: f32[32,128], index: 14, kind: input, shape index: {}]
  %s15 = inlined_call_operand.vmem [shape: f32[1,128], index: 15, kind: input, shape index: {}]
  %s16 = inlined_call_operand.hbm [shape: f32[2,128], index: 16, kind: output, shape index: {}]
  %s17 = sld [smem:[#allocation0]]
  $region98: #{tpu_custom_call.1} parent=0
    _
  %s19 = ssub.s32 1, %s17
  %s20 = scalar_select 0, %s19, %s17
  $region1: #{tpu_custom_call.1} parent=0
    #allocation4 [shape = 'u8[8192]{0}', space=vmem, size = 0x2000, scoped, tag = 'input window, operand 0, single buffered']
    #allocation5 [shape = 's32[1]{0}', space=sflag, size = 0x4, scoped, tag = 'scoped memory for tpu_custom_call.1']
    #allocation6 [shape = 's32[1]{0}', space=sflag, size = 0x4, scoped, tag = 'scoped memory for tpu_custom_call.1']
    #allocation7 [shape = 'u8[8192]{0}', space=vmem, size = 0x2000, scoped, tag = 'input window, operand 1, single buffered']
    #allocation8 [shape = 's32[1]{0}', space=sflag, size = 0x4, scoped, tag = 'scoped memory for tpu_custom_call.1']
    #allocation9 [shape = 'u8[1024]{0}', space=vmem, size = 0x400, scoped, tag = 'input window, operand 5, single buffered']
    #allocation10 [shape = 'u8[1024]{0}', space=vmem, size = 0x400, scoped, tag = 'input window, operand 6, single buffered']
    #allocation11 [shape = 's32[1]{0}', space=sflag, size = 0x4, scoped, tag = 'scoped memory for tpu_custom_call.1']
    #allocation12 [shape = 'u8[1024]{0}', space=vmem, size = 0x400, scoped, tag = 'input window, operand 7, single buffered']
    #allocation13 [shape = 'u8[1024]{0}', space=vmem, size = 0x400, scoped, tag = 'input window, operand 9, single buffered']
    #allocation14 [shape = 's32[1]{0}', space=sflag, size = 0x4, scoped, tag = 'scoped memory for tpu_custom_call.1']
    #allocation15 [shape = 'u8[1024]{0}', space=vmem, size = 0x400, scoped, tag = 'output window, operand 0, single buffered']
    %21 = vsyncpa [#allocation5], 0
    %22 = vsyncpa [#allocation8], 0
    %23 = vsyncpa [#allocation11], 0
    %24 = vsyncpa [#allocation14], 0
    %25 = vsyncpa [#allocation6], 0
    // Predicated region
    $region2: #{tpu_custom_call.1} parent=1 // pred_check
      _
    $region3: #{tpu_custom_call.1} parent=1 // pred_check_branch
      %27 = sbr.rel (0) target = $region5
    $region4: #{tpu_custom_call.1} parent=1 // pred_region
      %s29 = ssub.s32 256, 256
      %30 = vsyncadd [#allocation5], %s29
      %s31 = sshll.u32 [#allocation4], 4
      %s32 = int_to_ptr.vmem [resolvable:$true] %s31
      %37 = dma.hbm_to_vmem [thread:$0]  %s0, 256, %s32, [#allocation5], 128, 128, 8
    $region5: #{tpu_custom_call.1} parent=1 // pred_fallthru
      _
    // Predicated region
    $region6: #{tpu_custom_call.1} parent=1 // pred_check
      _
    $region7: #{tpu_custom_call.1} parent=1 // pred_check_branch
      %39 = sbr.rel (0) target = $region9
    $region8: #{tpu_custom_call.1} parent=1 // pred_region
      %s41 = ssub.s32 256, 256
      %42 = vsyncadd [#allocation8], %s41
      %s43 = sshll.u32 [#allocation7], 4
      %s44 = int_to_ptr.vmem [resolvable:$true] %s43
      %49 = dma.hbm_to_vmem [thread:$0]  %s1, 256, %s44, [#allocation8], 128, 128, 8
    $region9: #{tpu_custom_call.1} parent=1 // pred_fallthru
      _
    // Predicated region
    $region10: #{tpu_custom_call.1} parent=1 // pred_check
      _
    $region11: #{tpu_custom_call.1} parent=1 // pred_check_branch
      %51 = sbr.rel (0) target = $region13
    $region12: #{tpu_custom_call.1} parent=1 // pred_region
      _
    $region13: #{tpu_custom_call.1} parent=1 // pred_fallthru
      _
    // Predicated region
    $region14: #{tpu_custom_call.1} parent=1 // pred_check
      _
    $region15: #{tpu_custom_call.1} parent=1 // pred_check_branch
      %53 = sbr.rel (0) target = $region17
    $region16: #{tpu_custom_call.1} parent=1 // pred_region
      _
    $region17: #{tpu_custom_call.1} parent=1 // pred_fallthru
      _
    // Predicated region
    $region18: #{tpu_custom_call.1} parent=1 // pred_check
      _
    $region19: #{tpu_custom_call.1} parent=1 // pred_check_branch
      %55 = sbr.rel (0) target = $region21
    $region20: #{tpu_custom_call.1} parent=1 // pred_region
      _
    $region21: #{tpu_custom_call.1} parent=1 // pred_fallthru
      _
    // Predicated region
    $region22: #{tpu_custom_call.1} parent=1 // pred_check
      _
    $region23: #{tpu_custom_call.1} parent=1 // pred_check_branch
      %57 = sbr.rel (0) target = $region25
    $region24: #{tpu_custom_call.1} parent=1 // pred_region
      %s59 = ssub.s32 32, 32
      %60 = vsyncadd [#allocation8], %s59
      %s61 = sshll.u32 [#allocation9], 4
      %s62 = int_to_ptr.vmem [resolvable:$true] %s61
      %67 = dma.hbm_to_vmem [thread:$0]  %s5, 32, %s62, [#allocation8], 16, 16, 1
    $region25: #{tpu_custom_call.1} parent=1 // pred_fallthru
      _
    // Predicated region
    $region26: #{tpu_custom_call.1} parent=1 // pred_check
      _
    $region27: #{tpu_custom_call.1} parent=1 // pred_check_branch
      %69 = sbr.rel (0) target = $region29
    $region28: #{tpu_custom_call.1} parent=1 // pred_region
      %s71 = ssub.s32 32, 32
      %72 = vsyncadd [#allocation11], %s71
      %s73 = sshll.u32 [#allocation10], 4
      %s74 = int_to_ptr.vmem [resolvable:$true] %s73
      %79 = dma.hbm_to_vmem [thread:$0]  %s6, 32, %s74, [#allocation11], 16, 16, 1
    $region29: #{tpu_custom_call.1} parent=1 // pred_fallthru
      _
    // Predicated region
    $region30: #{tpu_custom_call.1} parent=1 // pred_check
      _
    $region31: #{tpu_custom_call.1} parent=1 // pred_check_branch
      %81 = sbr.rel (0) target = $region33
    $region32: #{tpu_custom_call.1} parent=1 // pred_region
      %s83 = ssub.s32 32, 32
      %84 = vsyncadd [#allocation11], %s83
      %s85 = sshll.u32 [#allocation12], 4
      %s86 = int_to_ptr.vmem [resolvable:$true] %s85
      %91 = dma.hbm_to_vmem [thread:$0]  %s7, 32, %s86, [#allocation11], 16, 16, 1
    $region33: #{tpu_custom_call.1} parent=1 // pred_fallthru
      _
    // Predicated region
    $region34: #{tpu_custom_call.1} parent=1 // pred_check
      _
    $region35: #{tpu_custom_call.1} parent=1 // pred_check_branch
      %93 = sbr.rel (0) target = $region37
    $region36: #{tpu_custom_call.1} parent=1 // pred_region
      _
    $region37: #{tpu_custom_call.1} parent=1 // pred_fallthru
      _
    // Predicated region
    $region38: #{tpu_custom_call.1} parent=1 // pred_check
      _
    $region39: #{tpu_custom_call.1} parent=1 // pred_check_branch
      %95 = sbr.rel (0) target = $region41
    $region40: #{tpu_custom_call.1} parent=1 // pred_region
      %s97 = ssub.s32 32, 32
      %98 = vsyncadd [#allocation14], %s97
      %s99 = sshll.u32 [#allocation13], 4
      %s100 = int_to_ptr.vmem [resolvable:$true] %s99
      %105 = dma.hbm_to_vmem [thread:$0]  %s9, 32, %s100, [#allocation14], 16, 16, 1
    $region41: #{tpu_custom_call.1} parent=1 // pred_fallthru
      _
    // Predicated region
    $region42: #{tpu_custom_call.1} parent=1 // pred_check
      _
    $region43: #{tpu_custom_call.1} parent=1 // pred_check_branch
      %107 = sbr.rel (0) target = $region45
    $region44: #{tpu_custom_call.1} parent=1 // pred_region
      _
    $region45: #{tpu_custom_call.1} parent=1 // pred_fallthru
      _
    // Predicated region
    $region46: #{tpu_custom_call.1} parent=1 // pred_check
      _
    $region47: #{tpu_custom_call.1} parent=1 // pred_check_branch
      %109 = sbr.rel (0) target = $region49
    $region48: #{tpu_custom_call.1} parent=1 // pred_region
      _
    $region49: #{tpu_custom_call.1} parent=1 // pred_fallthru
      _
    // Predicated region
    $region50: #{tpu_custom_call.1} parent=1 // pred_check
      _
    $region51: #{tpu_custom_call.1} parent=1 // pred_check_branch
      %111 = sbr.rel (0) target = $region53
    $region52: #{tpu_custom_call.1} parent=1 // pred_region
      _
    $region53: #{tpu_custom_call.1} parent=1 // pred_fallthru
      _
    // Predicated region
    $region54: #{tpu_custom_call.1} parent=1 // pred_check
      _
    $region55: #{tpu_custom_call.1} parent=1 // pred_check_branch
      %113 = sbr.rel (0) target = $region57
    $region56: #{tpu_custom_call.1} parent=1 // pred_region
      _
    $region57: #{tpu_custom_call.1} parent=1 // pred_fallthru
      _
    // Predicated region
    $region58: #{tpu_custom_call.1} parent=1 // pred_check
      _
    $region59: #{tpu_custom_call.1} parent=1 // pred_check_branch
      %115 = sbr.rel (0) target = $region61
    $region60: #{tpu_custom_call.1} parent=1 // pred_region
      _
    $region61: #{tpu_custom_call.1} parent=1 // pred_fallthru
      _
    // Predicated region
    $region62: #{tpu_custom_call.1} parent=1 // pred_check
      _
    $region63: #{tpu_custom_call.1} parent=1 // pred_check_branch
      %117 = sbr.rel (0) target = $region65
    $region64: #{tpu_custom_call.1} parent=1 // pred_region
      _
    $region65: #{tpu_custom_call.1} parent=1 // pred_fallthru
      _
    // Predicated region
    $region66: #{tpu_custom_call.1} parent=1 // pred_check
      _
    $region67: #{tpu_custom_call.1} parent=1 // pred_check_branch
      %119 = sbr.rel (0) target = $region69
    $region68: #{tpu_custom_call.1} parent=1 // pred_region
      %120 = dma.done [#allocation5], 256
    $region69: #{tpu_custom_call.1} parent=1 // pred_fallthru
      _
    // Predicated region
    $region70: #{tpu_custom_call.1} parent=1 // pred_check
      _
    $region71: #{tpu_custom_call.1} parent=1 // pred_check_branch
      %122 = sbr.rel (0) target = $region73
    $region72: #{tpu_custom_call.1} parent=1 // pred_region
      %123 = dma.done [#allocation8], 256
    $region73: #{tpu_custom_call.1} parent=1 // pred_fallthru
      _
    // Predicated region
    $region74: #{tpu_custom_call.1} parent=1 // pred_check
      _
    $region75: #{tpu_custom_call.1} parent=1 // pred_check_branch
      %125 = sbr.rel (0) target = $region77
    $region76: #{tpu_custom_call.1} parent=1 // pred_region
      %126 = dma.done [#allocation8], 32
    $region77: #{tpu_custom_call.1} parent=1 // pred_fallthru
      _
    // Predicated region
    $region78: #{tpu_custom_call.1} parent=1 // pred_check
      _
    $region79: #{tpu_custom_call.1} parent=1 // pred_check_branch
      %128 = sbr.rel (0) target = $region81
    $region80: #{tpu_custom_call.1} parent=1 // pred_region
      %129 = dma.done [#allocation11], 32
    $region81: #{tpu_custom_call.1} parent=1 // pred_fallthru
      _
    // Predicated region
    $region82: #{tpu_custom_call.1} parent=1 // pred_check
      _
    $region83: #{tpu_custom_call.1} parent=1 // pred_check_branch
      %131 = sbr.rel (0) target = $region85
    $region84: #{tpu_custom_call.1} parent=1 // pred_region
      %132 = dma.done [#allocation11], 32
    $region85: #{tpu_custom_call.1} parent=1 // pred_fallthru
      _
    // Predicated region
    $region86: #{tpu_custom_call.1} parent=1 // pred_check
      _
    $region87: #{tpu_custom_call.1} parent=1 // pred_check_branch
      %134 = sbr.rel (0) target = $region89
    $region88: #{tpu_custom_call.1} parent=1 // pred_region
      %135 = dma.done [#allocation14], 32
    $region89: #{tpu_custom_call.1} parent=1 // pred_fallthru
      _
    %v136 = vld [vmem:[#allocation4] sm:$0xff]
    %v137 = vld [vmem:[#allocation4 + $0x8] sm:$0xff]
    %v138 = vld [vmem:[#allocation7] sm:$0xff]
    %v139 = vld [vmem:[#allocation7 + $0x8] sm:$0xff]
    %v140 = vadd.f32 %v136, %v138
    %v141 = vadd.f32 %v137, %v139
    %v142 = vld [vmem:[%s2] sm:$0xff]
    %v143 = vld [vmem:[%s2 + $0x8] sm:$0xff]
    %v144 = vld [vmem:[%s2 + $0x10] sm:$0xff]
    %v145 = vld [vmem:[%s2 + $0x18] sm:$0xff]
    %v146 = vld [vmem:[%s3] sm:$0x1]
    %v148 = vlaneseq
    %v149 = vshrl.u32 %v148, 7
    %v150 = vsub.s32 0, %v149
    %v151 = vrot.slane %v146, %v150
    %vm153 = vcmask 261120
    %v155 = vsel %vm153, %v140, 0
    %v158 = vsel %vm153, %v141, 0
    %160 = vmatprep.subr.mxu0 0.0
    %161 = vmatpush1.msra.mxu0 %v142
    %162 = vmatprep.subr.mxu0 0.0
    %163 = vmatpush1.msra.mxu0 %v143
    %164 = vmatprep.subr.mxu0 0.0
    %165 = vmatpush1.msra.mxu0 %v144
    %166 = vmatprep.subr.mxu0 0.0
    %167 = vmatpush1.msra.mxu0 %v145
    %168 = vmatprep.subr.mxu0 0.0
    %169 = vmatpush1.msra.mxu0 0.0
    %170 = vmatprep.subr.mxu0 0.0
    %171 = vmatpush1.msra.mxu0 0.0
    %172 = vmatprep.subr.mxu0 0.0
    %173 = vmatpush1.msra.mxu0 0.0
    %174 = vmatprep.subr.mxu0 0.0
    %175 = vmatpush1.msra.mxu0 0.0
    %176 = vmatprep.subr.mxu0 0.0
    %177 = vmatpush1.msra.mxu0 0.0
    %178 = vmatprep.subr.mxu0 0.0
    %179 = vmatpush1.msra.mxu0 0.0
    %180 = vmatprep.subr.mxu0 0.0
    %181 = vmatpush1.msra.mxu0 0.0
    %182 = vmatprep.subr.mxu0 0.0
    %183 = vmatpush1.msra.mxu0 0.0
    %184 = vmatprep.subr.mxu0 0.0
    %185 = vmatpush1.msra.mxu0 0.0
    %186 = vmatprep.subr.mxu0 0.0
    %187 = vmatpush1.msra.mxu0 0.0
    %188 = vmatprep.subr.mxu0 0.0
    %189 = vmatpush1.msra.mxu0 0.0
    %190 = vmatprep.subr.mxu0 0.0
    %191 = vmatpush1.msra.mxu0 0.0
    %192 = vmatprep.subr.mxu0 0.0
    %193 = vmatpush1.msra.mxu0 0.0
    %194 = vmatprep.subr.mxu0 0.0
    %195 = vmatpush1.msra.mxu0 0.0
    %196 = vmatprep.subr.mxu0 0.0
    %197 = vmatpush1.msra.mxu0 0.0
    %198 = vmatprep.subr.mxu0 0.0
    %199 = vmatpush1.msra.mxu0 0.0
    %200 = vmatprep.subr.mxu0 0.0
    %201 = vmatpush1.msra.mxu0 0.0
    %202 = vmatprep.subr.mxu0 0.0
    %203 = vmatpush1.msra.mxu0 0.0
    %204 = vmatprep.subr.mxu0 0.0
    %205 = vmatpush1.msra.mxu0 0.0
    %206 = vmatprep.subr.mxu0 0.0
    %207 = vmatpush1.msra.mxu0 0.0
    %208 = vmatprep.subr.mxu0 0.0
    %209 = vmatpush1.msra.mxu0 0.0
    %210 = vmatprep.subr.mxu0 0.0
    %211 = vmatpush1.msra.mxu0 0.0
    %212 = vmatprep.subr.mxu0 0.0
    %213 = vmatpush1.msra.mxu0 0.0
    %214 = vmatprep.subr.mxu0 0.0
    %215 = vmatpush1.msra.mxu0 0.0
    %216 = vmatprep.subr.mxu0 0.0
    %217 = vmatpush1.msra.mxu0 0.0
    %218 = vmatprep.subr.mxu0 0.0
    %219 = vmatpush1.msra.mxu0 0.0
    %220 = vmatprep.subr.mxu0 0.0
    %221 = vmatpush1.msra.mxu0 0.0
    %222 = vmatprep.subr.mxu0 0.0
    %223 = vmatpush1.msra.mxu0 0.0
    %224 = vmatprep.mubr.f32.mxu0 0.0
    %225 = vmatmul.mubr.f32.gmra.mrb[0].mxu0 %v155
    %v226 = vpop.f32.mrb[0].mxu0
    %v227 = vadd.f32 %v151, %v226
    %v228 = vpop.f32.mrb[0].mxu0
    %229 = vmatprep.mubr.f32.mxu0 0.0
    %230 = vmatmul.mubr.f32.gmra.mrb[0].mxu0 %v158
    %v231 = vpop.f32.mrb[0].mxu0
    %v232 = vadd.f32 %v151, %v231
    %v233 = vpop.f32.mrb[0].mxu0
    %234 = vdwg.mxu0
    %236 = vrot.lane.b32.xlu0 %v227, 96
    %v237 = vpop.permute.xlu0 %236
    %vm238 = vcmask 64512
    %v239 = vsel %vm238, %v227, 0
    %v241 = vsel %vm238, %v237, 0
    %243 = vmatprep.subr.mxu0 0.0
    %244 = vmatpush1.xpose.msra.mxu0 %v241
    %245 = vmatprep.subr.mxu0 0.0
    %246 = vmatpush1.xpose.msra.mxu0 0.0
    %247 = vmatprep.subr.mxu0 0.0
    %248 = vmatpush1.xpose.msra.mxu0 0.0
    %249 = vmatprep.subr.mxu0 0.0
    %250 = vmatpush1.xpose.msra.mxu0 0.0
    %251 = vmatprep.subr.mxu0 0.0
    %252 = vmatpush1.xpose.msra.mxu0 0.0
    %253 = vmatprep.subr.mxu0 0.0
    %254 = vmatpush1.xpose.msra.mxu0 0.0
    %255 = vmatprep.subr.mxu0 0.0
    %256 = vmatpush1.xpose.msra.mxu0 0.0
    %257 = vmatprep.subr.mxu0 0.0
    %258 = vmatpush1.xpose.msra.mxu0 0.0
    %259 = vmatprep.subr.mxu0 0.0
    %260 = vmatpush1.xpose.msra.mxu0 0.0
    %261 = vmatprep.subr.mxu0 0.0
    %262 = vmatpush1.xpose.msra.mxu0 0.0
    %263 = vmatprep.subr.mxu0 0.0
    %264 = vmatpush1.xpose.msra.mxu0 0.0
    %265 = vmatprep.subr.mxu0 0.0
    %266 = vmatpush1.xpose.msra.mxu0 0.0
    %267 = vmatprep.subr.mxu0 0.0
    %268 = vmatpush1.xpose.msra.mxu0 0.0
    %269 = vmatprep.subr.mxu0 0.0
    %270 = vmatpush1.xpose.msra.mxu0 0.0
    %271 = vmatprep.subr.mxu0 0.0
    %272 = vmatpush1.xpose.msra.mxu0 0.0
    %273 = vmatprep.subr.mxu0 0.0
    %274 = vmatpush1.xpose.msra.mxu0 0.0
    %275 = vmatprep.subr.mxu0 0.0
    %276 = vmatpush1.xpose.msra.mxu0 0.0
    %277 = vmatprep.subr.mxu0 0.0
    %278 = vmatpush1.xpose.msra.mxu0 0.0
    %279 = vmatprep.subr.mxu0 0.0
    %280 = vmatpush1.xpose.msra.mxu0 0.0
    %281 = vmatprep.subr.mxu0 0.0
    %282 = vmatpush1.xpose.msra.mxu0 0.0
    %283 = vmatprep.subr.mxu0 0.0
    %284 = vmatpush1.xpose.msra.mxu0 0.0
    %285 = vmatprep.subr.mxu0 0.0
    %286 = vmatpush1.xpose.msra.mxu0 0.0
    %287 = vmatprep.subr.mxu0 0.0
    %288 = vmatpush1.xpose.msra.mxu0 0.0
    %289 = vmatprep.subr.mxu0 0.0
    %290 = vmatpush1.xpose.msra.mxu0 0.0
    %291 = vmatprep.subr.mxu0 0.0
    %292 = vmatpush1.xpose.msra.mxu0 0.0
    %293 = vmatprep.subr.mxu0 0.0
    %294 = vmatpush1.xpose.msra.mxu0 0.0
    %295 = vmatprep.subr.mxu0 0.0
    %296 = vmatpush1.xpose.msra.mxu0 0.0
    %297 = vmatprep.subr.mxu0 0.0
    %298 = vmatpush1.xpose.msra.mxu0 0.0
    %299 = vmatprep.subr.mxu0 0.0
    %300 = vmatpush1.xpose.msra.mxu0 0.0
    %301 = vmatprep.subr.mxu0 0.0
    %302 = vmatpush1.xpose.msra.mxu0 0.0
    %303 = vmatprep.subr.mxu0 0.0
    %304 = vmatpush1.xpose.msra.mxu0 0.0
    %305 = vmatprep.subr.mxu0 0.0
    %306 = vmatpush1.xpose.msra.mxu0 0.0
    %307 = vmatprep.mubr.f32.mxu0 0.0
    %308 = vmatmul.mubr.f32.gmra.mrb[0].mxu0 %v239
    %v309 = vpop.f32.mrb[0].mxu0
    %v310 = vadd.f32 0.0, %v309
    %v311 = vpop.f32.mrb[0].mxu0
    %312 = vdwg.mxu0
    %v313 = vsel %vm238, %v310, -inf
    %314 = vmax.xlane.f32.xlu0 %v313
    %v315 = vpop.xlane.xlu0 %314
    %v316 = vsub.f32 %v310, %v315
    %v317 = vmul.f32 %v316, 1.442695
    %v318 = vpow.pop %v317
    %v319 = vsel %vm238, %v318, 0.0
    %320 = vadd.xlane.f32.xlu0 %v319
    %v321 = vpop.xlane.xlu0 %320
    %v322 = vrcp.pop %v321
    %v323 = vmul.f32 %v318, %v322
    %324 = vrot.lane.b32.xlu0 %v227, 64
    %v325 = vpop.permute.xlu0 %324
    %v328 = vsel %vm238, %v323, 0
    %330 = vmatprep.subr.mxu0 0.0
    %331 = vmatpush1.msra.mxu0 %v325
    %332 = vmatprep.subr.mxu0 0.0
    %333 = vmatpush1.msra.mxu0 0.0
    %334 = vmatprep.subr.mxu0 0.0
    %335 = vmatpush1.msra.mxu0 0.0
    %336 = vmatprep.subr.mxu0 0.0
    %337 = vmatpush1.msra.mxu0 0.0
    %338 = vmatprep.subr.mxu0 0.0
    %339 = vmatpush1.msra.mxu0 0.0
    %340 = vmatprep.subr.mxu0 0.0
    %341 = vmatpush1.msra.mxu0 0.0
    %342 = vmatprep.subr.mxu0 0.0
    %343 = vmatpush1.msra.mxu0 0.0
    %344 = vmatprep.subr.mxu0 0.0
    %345 = vmatpush1.msra.mxu0 0.0
    %346 = vmatprep.subr.mxu0 0.0
    %347 = vmatpush1.msra.mxu0 0.0
    %348 = vmatprep.subr.mxu0 0.0
    %349 = vmatpush1.msra.mxu0 0.0
    %350 = vmatprep.subr.mxu0 0.0
    %351 = vmatpush1.msra.mxu0 0.0
    %352 = vmatprep.subr.mxu0 0.0
    %353 = vmatpush1.msra.mxu0 0.0
    %354 = vmatprep.subr.mxu0 0.0
    %355 = vmatpush1.msra.mxu0 0.0
    %356 = vmatprep.subr.mxu0 0.0
    %357 = vmatpush1.msra.mxu0 0.0
    %358 = vmatprep.subr.mxu0 0.0
    %359 = vmatpush1.msra.mxu0 0.0
    %360 = vmatprep.subr.mxu0 0.0
    %361 = vmatpush1.msra.mxu0 0.0
    %362 = vmatprep.subr.mxu0 0.0
    %363 = vmatpush1.msra.mxu0 0.0
    %364 = vmatprep.subr.mxu0 0.0
    %365 = vmatpush1.msra.mxu0 0.0
    %366 = vmatprep.subr.mxu0 0.0
    %367 = vmatpush1.msra.mxu0 0.0
    %368 = vmatprep.subr.mxu0 0.0
    %369 = vmatpush1.msra.mxu0 0.0
    %370 = vmatprep.subr.mxu0 0.0
    %371 = vmatpush1.msra.mxu0 0.0
    %372 = vmatprep.subr.mxu0 0.0
    %373 = vmatpush1.msra.mxu0 0.0
    %374 = vmatprep.subr.mxu0 0.0
    %375 = vmatpush1.msra.mxu0 0.0
    %376 = vmatprep.subr.mxu0 0.0
    %377 = vmatpush1.msra.mxu0 0.0
    %378 = vmatprep.subr.mxu0 0.0
    %379 = vmatpush1.msra.mxu0 0.0
    %380 = vmatprep.subr.mxu0 0.0
    %381 = vmatpush1.msra.mxu0 0.0
    %382 = vmatprep.subr.mxu0 0.0
    %383 = vmatpush1.msra.mxu0 0.0
    %384 = vmatprep.subr.mxu0 0.0
    %385 = vmatpush1.msra.mxu0 0.0
    %386 = vmatprep.subr.mxu0 0.0
    %387 = vmatpush1.msra.mxu0 0.0
    %388 = vmatprep.subr.mxu0 0.0
    %389 = vmatpush1.msra.mxu0 0.0
    %390 = vmatprep.subr.mxu0 0.0
    %391 = vmatpush1.msra.mxu0 0.0
    %392 = vmatprep.subr.mxu0 0.0
    %393 = vmatpush1.msra.mxu0 0.0
    %394 = vmatprep.mubr.f32.mxu0 0.0
    %395 = vmatmul.mubr.f32.gmra.mrb[0].mxu0 %v328
    %v396 = vpop.f32.mrb[0].mxu0
    %v397 = vadd.f32 0.0, %v396
    %v398 = vpop.f32.mrb[0].mxu0
    %399 = vdwg.mxu0
    %400 = vst.msk [vmem:[#allocation2] sm:$0xff] %vm238, %v397
    %401 = vrot.lane.b32.xlu0 %v227, 120
    %v402 = vpop.permute.xlu0 %401
    %403 = vrot.lane.b32.xlu0 %v227, 88
    %v404 = vpop.permute.xlu0 %403
    %v405 = vsel %vm238, %v402, 0
    %v407 = vsel %vm238, %v404, 0
    %409 = vmatprep.subr.mxu0 0.0
    %410 = vmatpush1.xpose.msra.mxu0 %v407
    %411 = vmatprep.subr.mxu0 0.0
    %412 = vmatpush1.xpose.msra.mxu0 0.0
    %413 = vmatprep.subr.mxu0 0.0
    %414 = vmatpush1.xpose.msra.mxu0 0.0
    %415 = vmatprep.subr.mxu0 0.0
    %416 = vmatpush1.xpose.msra.mxu0 0.0
    %417 = vmatprep.subr.mxu0 0.0
    %418 = vmatpush1.xpose.msra.mxu0 0.0
    %419 = vmatprep.subr.mxu0 0.0
    %420 = vmatpush1.xpose.msra.mxu0 0.0
    %421 = vmatprep.subr.mxu0 0.0
    %422 = vmatpush1.xpose.msra.mxu0 0.0
    %423 = vmatprep.subr.mxu0 0.0
    %424 = vmatpush1.xpose.msra.mxu0 0.0
    %425 = vmatprep.subr.mxu0 0.0
    %426 = vmatpush1.xpose.msra.mxu0 0.0
    %427 = vmatprep.subr.mxu0 0.0
    %428 = vmatpush1.xpose.msra.mxu0 0.0
    %429 = vmatprep.subr.mxu0 0.0
    %430 = vmatpush1.xpose.msra.mxu0 0.0
    %431 = vmatprep.subr.mxu0 0.0
    %432 = vmatpush1.xpose.msra.mxu0 0.0
    %433 = vmatprep.subr.mxu0 0.0
    %434 = vmatpush1.xpose.msra.mxu0 0.0
    %435 = vmatprep.subr.mxu0 0.0
    %436 = vmatpush1.xpose.msra.mxu0 0.0
    %437 = vmatprep.subr.mxu0 0.0
    %438 = vmatpush1.xpose.msra.mxu0 0.0
    %439 = vmatprep.subr.mxu0 0.0
    %440 = vmatpush1.xpose.msra.mxu0 0.0
    %441 = vmatprep.subr.mxu0 0.0
    %442 = vmatpush1.xpose.msra.mxu0 0.0
    %443 = vmatprep.subr.mxu0 0.0
    %444 = vmatpush1.xpose.msra.mxu0 0.0
    %445 = vmatprep.subr.mxu0 0.0
    %446 = vmatpush1.xpose.msra.mxu0 0.0
    %447 = vmatprep.subr.mxu0 0.0
    %448 = vmatpush1.xpose.msra.mxu0 0.0
    %449 = vmatprep.subr.mxu0 0.0
    %450 = vmatpush1.xpose.msra.mxu0 0.0
    %451 = vmatprep.subr.mxu0 0.0
    %452 = vmatpush1.xpose.msra.mxu0 0.0
    %453 = vmatprep.subr.mxu0 0.0
    %454 = vmatpush1.xpose.msra.mxu0 0.0
    %455 = vmatprep.subr.mxu0 0.0
    %456 = vmatpush1.xpose.msra.mxu0 0.0
    %457 = vmatprep.subr.mxu0 0.0
    %458 = vmatpush1.xpose.msra.mxu0 0.0
    %459 = vmatprep.subr.mxu0 0.0
    %460 = vmatpush1.xpose.msra.mxu0 0.0
    %461 = vmatprep.subr.mxu0 0.0
    %462 = vmatpush1.xpose.msra.mxu0 0.0
    %463 = vmatprep.subr.mxu0 0.0
    %464 = vmatpush1.xpose.msra.mxu0 0.0
    %465 = vmatprep.subr.mxu0 0.0
    %466 = vmatpush1.xpose.msra.mxu0 0.0
    %467 = vmatprep.subr.mxu0 0.0
    %468 = vmatpush1.xpose.msra.mxu0 0.0
    %469 = vmatprep.subr.mxu0 0.0
    %470 = vmatpush1.xpose.msra.mxu0 0.0
    %471 = vmatprep.subr.mxu0 0.0
    %472 = vmatpush1.xpose.msra.mxu0 0.0
    %473 = vmatprep.mubr.f32.mxu0 0.0
    %474 = vmatmul.mubr.f32.gmra.mrb[0].mxu0 %v405
    %v475 = vpop.f32.mrb[0].mxu0
    %v476 = vadd.f32 0.0, %v475
    %v477 = vpop.f32.mrb[0].mxu0
    %478 = vdwg.mxu0
    %v479 = vsel %vm238, %v476, -inf
    %480 = vmax.xlane.f32.xlu0 %v479
    %v481 = vpop.xlane.xlu0 %480
    %v482 = vsub.f32 %v476, %v481
    %v483 = vmul.f32 %v482, 1.442695
    %v484 = vpow.pop %v483
    %v485 = vsel %vm238, %v484, 0.0
    %486 = vadd.xlane.f32.xlu0 %v485
    %v487 = vpop.xlane.xlu0 %486
    %v488 = vrcp.pop %v487
    %v489 = vmul.f32 %v484, %v488
    %490 = vrot.lane.b32.xlu0 %v227, 56
    %v491 = vpop.permute.xlu0 %490
    %v494 = vsel %vm238, %v489, 0
    %496 = vmatprep.subr.mxu0 0.0
    %497 = vmatpush1.msra.mxu0 %v491
    %498 = vmatprep.subr.mxu0 0.0
    %499 = vmatpush1.msra.mxu0 0.0
    %500 = vmatprep.subr.mxu0 0.0
    %501 = vmatpush1.msra.mxu0 0.0
    %502 = vmatprep.subr.mxu0 0.0
    %503 = vmatpush1.msra.mxu0 0.0
    %504 = vmatprep.subr.mxu0 0.0
    %505 = vmatpush1.msra.mxu0 0.0
    %506 = vmatprep.subr.mxu0 0.0
    %507 = vmatpush1.msra.mxu0 0.0
    %508 = vmatprep.subr.mxu0 0.0
    %509 = vmatpush1.msra.mxu0 0.0
    %510 = vmatprep.subr.mxu0 0.0
    %511 = vmatpush1.msra.mxu0 0.0
    %512 = vmatprep.subr.mxu0 0.0
    %513 = vmatpush1.msra.mxu0 0.0
    %514 = vmatprep.subr.mxu0 0.0
    %515 = vmatpush1.msra.mxu0 0.0
    %516 = vmatprep.subr.mxu0 0.0
    %517 = vmatpush1.msra.mxu0 0.0
    %518 = vmatprep.subr.mxu0 0.0
    %519 = vmatpush1.msra.mxu0 0.0
    %520 = vmatprep.subr.mxu0 0.0
    %521 = vmatpush1.msra.mxu0 0.0
    %522 = vmatprep.subr.mxu0 0.0
    %523 = vmatpush1.msra.mxu0 0.0
    %524 = vmatprep.subr.mxu0 0.0
    %525 = vmatpush1.msra.mxu0 0.0
    %526 = vmatprep.subr.mxu0 0.0
    %527 = vmatpush1.msra.mxu0 0.0
    %528 = vmatprep.subr.mxu0 0.0
    %529 = vmatpush1.msra.mxu0 0.0
    %530 = vmatprep.subr.mxu0 0.0
    %531 = vmatpush1.msra.mxu0 0.0
    %532 = vmatprep.subr.mxu0 0.0
    %533 = vmatpush1.msra.mxu0 0.0
    %534 = vmatprep.subr.mxu0 0.0
    %535 = vmatpush1.msra.mxu0 0.0
    %536 = vmatprep.subr.mxu0 0.0
    %537 = vmatpush1.msra.mxu0 0.0
    %538 = vmatprep.subr.mxu0 0.0
    %539 = vmatpush1.msra.mxu0 0.0
    %540 = vmatprep.subr.mxu0 0.0
    %541 = vmatpush1.msra.mxu0 0.0
    %542 = vmatprep.subr.mxu0 0.0
    %543 = vmatpush1.msra.mxu0 0.0
    %544 = vmatprep.subr.mxu0 0.0
    %545 = vmatpush1.msra.mxu0 0.0
    %546 = vmatprep.subr.mxu0 0.0
    %547 = vmatpush1.msra.mxu0 0.0
    %548 = vmatprep.subr.mxu0 0.0
    %549 = vmatpush1.msra.mxu0 0.0
    %550 = vmatprep.subr.mxu0 0.0
    %551 = vmatpush1.msra.mxu0 0.0
    %552 = vmatprep.subr.mxu0 0.0
    %553 = vmatpush1.msra.mxu0 0.0
    %554 = vmatprep.subr.mxu0 0.0
    %555 = vmatpush1.msra.mxu0 0.0
    %556 = vmatprep.subr.mxu0 0.0
    %557 = vmatpush1.msra.mxu0 0.0
    %558 = vmatprep.subr.mxu0 0.0
    %559 = vmatpush1.msra.mxu0 0.0
    %560 = vmatprep.mubr.f32.mxu0 0.0
    %561 = vmatmul.mubr.f32.gmra.mrb[0].mxu0 %v494
    %v562 = vpop.f32.mrb[0].mxu0
    %v563 = vadd.f32 0.0, %v562
    %v564 = vpop.f32.mrb[0].mxu0
    %565 = vdwg.mxu0
    %567 = vrot.lane.b32.xlu0 %v563, 8
    %v568 = vpop.permute.xlu0 %567
    %vm570 = vcmask 130112
    %571 = vst.msk [vmem:[#allocation2] sm:$0xff] %vm570, %v568
    %572 = vrot.lane.b32.xlu0 %v227, 112
    %v573 = vpop.permute.xlu0 %572
    %574 = vrot.lane.b32.xlu0 %v227, 80
    %v575 = vpop.permute.xlu0 %574
    %v576 = vsel %vm238, %v573, 0
    %v578 = vsel %vm238, %v575, 0
    %580 = vmatprep.subr.mxu0 0.0
    %581 = vmatpush1.xpose.msra.mxu0 %v578
    %582 = vmatprep.subr.mxu0 0.0
    %583 = vmatpush1.xpose.msra.mxu0 0.0
    %584 = vmatprep.subr.mxu0 0.0
    %585 = vmatpush1.xpose.msra.mxu0 0.0
    %586 = vmatprep.subr.mxu0 0.0
    %587 = vmatpush1.xpose.msra.mxu0 0.0
    %588 = vmatprep.subr.mxu0 0.0
    %589 = vmatpush1.xpose.msra.mxu0 0.0
    %590 = vmatprep.subr.mxu0 0.0
    %591 = vmatpush1.xpose.msra.mxu0 0.0
    %592 = vmatprep.subr.mxu0 0.0
    %593 = vmatpush1.xpose.msra.mxu0 0.0
    %594 = vmatprep.subr.mxu0 0.0
    %595 = vmatpush1.xpose.msra.mxu0 0.0
    %596 = vmatprep.subr.mxu0 0.0
    %597 = vmatpush1.xpose.msra.mxu0 0.0
    %598 = vmatprep.subr.mxu0 0.0
    %599 = vmatpush1.xpose.msra.mxu0 0.0
    %600 = vmatprep.subr.mxu0 0.0
    %601 = vmatpush1.xpose.msra.mxu0 0.0
    %602 = vmatprep.subr.mxu0 0.0
    %603 = vmatpush1.xpose.msra.mxu0 0.0
    %604 = vmatprep.subr.mxu0 0.0
    %605 = vmatpush1.xpose.msra.mxu0 0.0
    %606 = vmatprep.subr.mxu0 0.0
    %607 = vmatpush1.xpose.msra.mxu0 0.0
    %608 = vmatprep.subr.mxu0 0.0
    %609 = vmatpush1.xpose.msra.mxu0 0.0
    %610 = vmatprep.subr.mxu0 0.0
    %611 = vmatpush1.xpose.msra.mxu0 0.0
    %612 = vmatprep.subr.mxu0 0.0
    %613 = vmatpush1.xpose.msra.mxu0 0.0
    %614 = vmatprep.subr.mxu0 0.0
    %615 = vmatpush1.xpose.msra.mxu0 0.0
    %616 = vmatprep.subr.mxu0 0.0
    %617 = vmatpush1.xpose.msra.mxu0 0.0
    %618 = vmatprep.subr.mxu0 0.0
    %619 = vmatpush1.xpose.msra.mxu0 0.0
    %620 = vmatprep.subr.mxu0 0.0
    %621 = vmatpush1.xpose.msra.mxu0 0.0
    %622 = vmatprep.subr.mxu0 0.0
    %623 = vmatpush1.xpose.msra.mxu0 0.0
    %624 = vmatprep.subr.mxu0 0.0
    %625 = vmatpush1.xpose.msra.mxu0 0.0
    %626 = vmatprep.subr.mxu0 0.0
    %627 = vmatpush1.xpose.msra.mxu0 0.0
    %628 = vmatprep.subr.mxu0 0.0
    %629 = vmatpush1.xpose.msra.mxu0 0.0
    %630 = vmatprep.subr.mxu0 0.0
    %631 = vmatpush1.xpose.msra.mxu0 0.0
    %632 = vmatprep.subr.mxu0 0.0
    %633 = vmatpush1.xpose.msra.mxu0 0.0
    %634 = vmatprep.subr.mxu0 0.0
    %635 = vmatpush1.xpose.msra.mxu0 0.0
    %636 = vmatprep.subr.mxu0 0.0
    %637 = vmatpush1.xpose.msra.mxu0 0.0
    %638 = vmatprep.subr.mxu0 0.0
    %639 = vmatpush1.xpose.msra.mxu0 0.0
    %640 = vmatprep.subr.mxu0 0.0
    %641 = vmatpush1.xpose.msra.mxu0 0.0
    %642 = vmatprep.subr.mxu0 0.0
    %643 = vmatpush1.xpose.msra.mxu0 0.0
    %644 = vmatprep.mubr.f32.mxu0 0.0
    %645 = vmatmul.mubr.f32.gmra.mrb[0].mxu0 %v576
    %v646 = vpop.f32.mrb[0].mxu0
    %v647 = vadd.f32 0.0, %v646
    %v648 = vpop.f32.mrb[0].mxu0
    %649 = vdwg.mxu0
    %v650 = vsel %vm238, %v647, -inf
    %651 = vmax.xlane.f32.xlu0 %v650
    %v652 = vpop.xlane.xlu0 %651
    %v653 = vsub.f32 %v647, %v652
    %v654 = vmul.f32 %v653, 1.442695
    %v655 = vpow.pop %v654
    %v656 = vsel %vm238, %v655, 0.0
    %657 = vadd.xlane.f32.xlu0 %v656
    %v658 = vpop.xlane.xlu0 %657
    %v659 = vrcp.pop %v658
    %v660 = vmul.f32 %v655, %v659
    %661 = vrot.lane.b32.xlu0 %v227, 48
    %v662 = vpop.permute.xlu0 %661
    %v665 = vsel %vm238, %v660, 0
    %667 = vmatprep.subr.mxu0 0.0
    %668 = vmatpush1.msra.mxu0 %v662
    %669 = vmatprep.subr.mxu0 0.0
    %670 = vmatpush1.msra.mxu0 0.0
    %671 = vmatprep.subr.mxu0 0.0
    %672 = vmatpush1.msra.mxu0 0.0
    %673 = vmatprep.subr.mxu0 0.0
    %674 = vmatpush1.msra.mxu0 0.0
    %675 = vmatprep.subr.mxu0 0.0
    %676 = vmatpush1.msra.mxu0 0.0
    %677 = vmatprep.subr.mxu0 0.0
    %678 = vmatpush1.msra.mxu0 0.0
    %679 = vmatprep.subr.mxu0 0.0
    %680 = vmatpush1.msra.mxu0 0.0
    %681 = vmatprep.subr.mxu0 0.0
    %682 = vmatpush1.msra.mxu0 0.0
    %683 = vmatprep.subr.mxu0 0.0
    %684 = vmatpush1.msra.mxu0 0.0
    %685 = vmatprep.subr.mxu0 0.0
    %686 = vmatpush1.msra.mxu0 0.0
    %687 = vmatprep.subr.mxu0 0.0
    %688 = vmatpush1.msra.mxu0 0.0
    %689 = vmatprep.subr.mxu0 0.0
    %690 = vmatpush1.msra.mxu0 0.0
    %691 = vmatprep.subr.mxu0 0.0
    %692 = vmatpush1.msra.mxu0 0.0
    %693 = vmatprep.subr.mxu0 0.0
    %694 = vmatpush1.msra.mxu0 0.0
    %695 = vmatprep.subr.mxu0 0.0
    %696 = vmatpush1.msra.mxu0 0.0
    %697 = vmatprep.subr.mxu0 0.0
    %698 = vmatpush1.msra.mxu0 0.0
    %699 = vmatprep.subr.mxu0 0.0
    %700 = vmatpush1.msra.mxu0 0.0
    %701 = vmatprep.subr.mxu0 0.0
    %702 = vmatpush1.msra.mxu0 0.0
    %703 = vmatprep.subr.mxu0 0.0
    %704 = vmatpush1.msra.mxu0 0.0
    %705 = vmatprep.subr.mxu0 0.0
    %706 = vmatpush1.msra.mxu0 0.0
    %707 = vmatprep.subr.mxu0 0.0
    %708 = vmatpush1.msra.mxu0 0.0
    %709 = vmatprep.subr.mxu0 0.0
    %710 = vmatpush1.msra.mxu0 0.0
    %711 = vmatprep.subr.mxu0 0.0
    %712 = vmatpush1.msra.mxu0 0.0
    %713 = vmatprep.subr.mxu0 0.0
    %714 = vmatpush1.msra.mxu0 0.0
    %715 = vmatprep.subr.mxu0 0.0
    %716 = vmatpush1.msra.mxu0 0.0
    %717 = vmatprep.subr.mxu0 0.0
    %718 = vmatpush1.msra.mxu0 0.0
    %719 = vmatprep.subr.mxu0 0.0
    %720 = vmatpush1.msra.mxu0 0.0
    %721 = vmatprep.subr.mxu0 0.0
    %722 = vmatpush1.msra.mxu0 0.0
    %723 = vmatprep.subr.mxu0 0.0
    %724 = vmatpush1.msra.mxu0 0.0
    %725 = vmatprep.subr.mxu0 0.0
    %726 = vmatpush1.msra.mxu0 0.0
    %727 = vmatprep.subr.mxu0 0.0
    %728 = vmatpush1.msra.mxu0 0.0
    %729 = vmatprep.subr.mxu0 0.0
    %730 = vmatpush1.msra.mxu0 0.0
    %731 = vmatprep.mubr.f32.mxu0 0.0
    %732 = vmatmul.mubr.f32.gmra.mrb[0].mxu0 %v665
    %v733 = vpop.f32.mrb[0].mxu0
    %v734 = vadd.f32 0.0, %v733
    %v735 = vpop.f32.mrb[0].mxu0
    %736 = vdwg.mxu0
    %738 = vrot.lane.b32.xlu0 %v734, 16
    %v739 = vpop.permute.xlu0 %738
    %vm741 = vcmask 195712
    %742 = vst.msk [vmem:[#allocation2] sm:$0xff] %vm741, %v739
    %743 = vrot.lane.b32.xlu0 %v227, 104
    %v744 = vpop.permute.xlu0 %743
    %745 = vrot.lane.b32.xlu0 %v227, 72
    %v746 = vpop.permute.xlu0 %745
    %v747 = vsel %vm238, %v744, 0
    %v749 = vsel %vm238, %v746, 0
    %751 = vmatprep.subr.mxu0 0.0
    %752 = vmatpush1.xpose.msra.mxu0 %v749
    %753 = vmatprep.subr.mxu0 0.0
    %754 = vmatpush1.xpose.msra.mxu0 0.0
    %755 = vmatprep.subr.mxu0 0.0
    %756 = vmatpush1.xpose.msra.mxu0 0.0
    %757 = vmatprep.subr.mxu0 0.0
    %758 = vmatpush1.xpose.msra.mxu0 0.0
    %759 = vmatprep.subr.mxu0 0.0
    %760 = vmatpush1.xpose.msra.mxu0 0.0
    %761 = vmatprep.subr.mxu0 0.0
    %762 = vmatpush1.xpose.msra.mxu0 0.0
    %763 = vmatprep.subr.mxu0 0.0
    %764 = vmatpush1.xpose.msra.mxu0 0.0
    %765 = vmatprep.subr.mxu0 0.0
    %766 = vmatpush1.xpose.msra.mxu0 0.0
    %767 = vmatprep.subr.mxu0 0.0
    %768 = vmatpush1.xpose.msra.mxu0 0.0
    %769 = vmatprep.subr.mxu0 0.0
    %770 = vmatpush1.xpose.msra.mxu0 0.0
    %771 = vmatprep.subr.mxu0 0.0
    %772 = vmatpush1.xpose.msra.mxu0 0.0
    %773 = vmatprep.subr.mxu0 0.0
    %774 = vmatpush1.xpose.msra.mxu0 0.0
    %775 = vmatprep.subr.mxu0 0.0
    %776 = vmatpush1.xpose.msra.mxu0 0.0
    %777 = vmatprep.subr.mxu0 0.0
    %778 = vmatpush1.xpose.msra.mxu0 0.0
    %779 = vmatprep.subr.mxu0 0.0
    %780 = vmatpush1.xpose.msra.mxu0 0.0
    %781 = vmatprep.subr.mxu0 0.0
    %782 = vmatpush1.xpose.msra.mxu0 0.0
    %783 = vmatprep.subr.mxu0 0.0
    %784 = vmatpush1.xpose.msra.mxu0 0.0
    %785 = vmatprep.subr.mxu0 0.0
    %786 = vmatpush1.xpose.msra.mxu0 0.0
    %787 = vmatprep.subr.mxu0 0.0
    %788 = vmatpush1.xpose.msra.mxu0 0.0
    %789 = vmatprep.subr.mxu0 0.0
    %790 = vmatpush1.xpose.msra.mxu0 0.0
    %791 = vmatprep.subr.mxu0 0.0
    %792 = vmatpush1.xpose.msra.mxu0 0.0
    %793 = vmatprep.subr.mxu0 0.0
    %794 = vmatpush1.xpose.msra.mxu0 0.0
    %795 = vmatprep.subr.mxu0 0.0
    %796 = vmatpush1.xpose.msra.mxu0 0.0
    %797 = vmatprep.subr.mxu0 0.0
    %798 = vmatpush1.xpose.msra.mxu0 0.0
    %799 = vmatprep.subr.mxu0 0.0
    %800 = vmatpush1.xpose.msra.mxu0 0.0
    %801 = vmatprep.subr.mxu0 0.0
    %802 = vmatpush1.xpose.msra.mxu0 0.0
    %803 = vmatprep.subr.mxu0 0.0
    %804 = vmatpush1.xpose.msra.mxu0 0.0
    %805 = vmatprep.subr.mxu0 0.0
    %806 = vmatpush1.xpose.msra.mxu0 0.0
    %807 = vmatprep.subr.mxu0 0.0
    %808 = vmatpush1.xpose.msra.mxu0 0.0
    %809 = vmatprep.subr.mxu0 0.0
    %810 = vmatpush1.xpose.msra.mxu0 0.0
    %811 = vmatprep.subr.mxu0 0.0
    %812 = vmatpush1.xpose.msra.mxu0 0.0
    %813 = vmatprep.subr.mxu0 0.0
    %814 = vmatpush1.xpose.msra.mxu0 0.0
    %815 = vmatprep.mubr.f32.mxu0 0.0
    %816 = vmatmul.mubr.f32.gmra.mrb[0].mxu0 %v747
    %v817 = vpop.f32.mrb[0].mxu0
    %v818 = vadd.f32 0.0, %v817
    %v819 = vpop.f32.mrb[0].mxu0
    %820 = vdwg.mxu0
    %v821 = vsel %vm238, %v818, -inf
    %822 = vmax.xlane.f32.xlu0 %v821
    %v823 = vpop.xlane.xlu0 %822
    %v824 = vsub.f32 %v818, %v823
    %v825 = vmul.f32 %v824, 1.442695
    %v826 = vpow.pop %v825
    %v827 = vsel %vm238, %v826, 0.0
    %828 = vadd.xlane.f32.xlu0 %v827
    %v829 = vpop.xlane.xlu0 %828
    %v830 = vrcp.pop %v829
    %v831 = vmul.f32 %v826, %v830
    %832 = vrot.lane.b32.xlu0 %v227, 40
    %v833 = vpop.permute.xlu0 %832
    %v836 = vsel %vm238, %v831, 0
    %838 = vmatprep.subr.mxu0 0.0
    %839 = vmatpush1.msra.mxu0 %v833
    %840 = vmatprep.subr.mxu0 0.0
    %841 = vmatpush1.msra.mxu0 0.0
    %842 = vmatprep.subr.mxu0 0.0
    %843 = vmatpush1.msra.mxu0 0.0
    %844 = vmatprep.subr.mxu0 0.0
    %845 = vmatpush1.msra.mxu0 0.0
    %846 = vmatprep.subr.mxu0 0.0
    %847 = vmatpush1.msra.mxu0 0.0
    %848 = vmatprep.subr.mxu0 0.0
    %849 = vmatpush1.msra.mxu0 0.0
    %850 = vmatprep.subr.mxu0 0.0
    %851 = vmatpush1.msra.mxu0 0.0
    %852 = vmatprep.subr.mxu0 0.0
    %853 = vmatpush1.msra.mxu0 0.0
    %854 = vmatprep.subr.mxu0 0.0
    %855 = vmatpush1.msra.mxu0 0.0
    %856 = vmatprep.subr.mxu0 0.0
    %857 = vmatpush1.msra.mxu0 0.0
    %858 = vmatprep.subr.mxu0 0.0
    %859 = vmatpush1.msra.mxu0 0.0
    %860 = vmatprep.subr.mxu0 0.0
    %861 = vmatpush1.msra.mxu0 0.0
    %862 = vmatprep.subr.mxu0 0.0
    %863 = vmatpush1.msra.mxu0 0.0
    %864 = vmatprep.subr.mxu0 0.0
    %865 = vmatpush1.msra.mxu0 0.0
    %866 = vmatprep.subr.mxu0 0.0
    %867 = vmatpush1.msra.mxu0 0.0
    %868 = vmatprep.subr.mxu0 0.0
    %869 = vmatpush1.msra.mxu0 0.0
    %870 = vmatprep.subr.mxu0 0.0
    %871 = vmatpush1.msra.mxu0 0.0
    %872 = vmatprep.subr.mxu0 0.0
    %873 = vmatpush1.msra.mxu0 0.0
    %874 = vmatprep.subr.mxu0 0.0
    %875 = vmatpush1.msra.mxu0 0.0
    %876 = vmatprep.subr.mxu0 0.0
    %877 = vmatpush1.msra.mxu0 0.0
    %878 = vmatprep.subr.mxu0 0.0
    %879 = vmatpush1.msra.mxu0 0.0
    %880 = vmatprep.subr.mxu0 0.0
    %881 = vmatpush1.msra.mxu0 0.0
    %882 = vmatprep.subr.mxu0 0.0
    %883 = vmatpush1.msra.mxu0 0.0
    %884 = vmatprep.subr.mxu0 0.0
    %885 = vmatpush1.msra.mxu0 0.0
    %886 = vmatprep.subr.mxu0 0.0
    %887 = vmatpush1.msra.mxu0 0.0
    %888 = vmatprep.subr.mxu0 0.0
    %889 = vmatpush1.msra.mxu0 0.0
    %890 = vmatprep.subr.mxu0 0.0
    %891 = vmatpush1.msra.mxu0 0.0
    %892 = vmatprep.subr.mxu0 0.0
    %893 = vmatpush1.msra.mxu0 0.0
    %894 = vmatprep.subr.mxu0 0.0
    %895 = vmatpush1.msra.mxu0 0.0
    %896 = vmatprep.subr.mxu0 0.0
    %897 = vmatpush1.msra.mxu0 0.0
    %898 = vmatprep.subr.mxu0 0.0
    %899 = vmatpush1.msra.mxu0 0.0
    %900 = vmatprep.subr.mxu0 0.0
    %901 = vmatpush1.msra.mxu0 0.0
    %902 = vmatprep.mubr.f32.mxu0 0.0
    %903 = vmatmul.mubr.f32.gmra.mrb[0].mxu0 %v836
    %v904 = vpop.f32.mrb[0].mxu0
    %v905 = vadd.f32 0.0, %v904
    %v906 = vpop.f32.mrb[0].mxu0
    %907 = vdwg.mxu0
    %909 = vrot.lane.b32.xlu0 %v905, 24
    %v910 = vpop.permute.xlu0 %909
    %vm912 = vcmask 261312
    %913 = vst.msk [vmem:[#allocation2] sm:$0xff] %vm912, %v910
    %915 = vrot.lane.b32.xlu0 %v232, 96
    %v916 = vpop.permute.xlu0 %915
    %v917 = vsel %vm238, %v232, 0
    %v919 = vsel %vm238, %v916, 0
    %921 = vmatprep.subr.mxu0 0.0
    %922 = vmatpush1.xpose.msra.mxu0 %v919
    %923 = vmatprep.subr.mxu0 0.0
    %924 = vmatpush1.xpose.msra.mxu0 0.0
    %925 = vmatprep.subr.mxu0 0.0
    %926 = vmatpush1.xpose.msra.mxu0 0.0
    %927 = vmatprep.subr.mxu0 0.0
    %928 = vmatpush1.xpose.msra.mxu0 0.0
    %929 = vmatprep.subr.mxu0 0.0
    %930 = vmatpush1.xpose.msra.mxu0 0.0
    %931 = vmatprep.subr.mxu0 0.0
    %932 = vmatpush1.xpose.msra.mxu0 0.0
    %933 = vmatprep.subr.mxu0 0.0
    %934 = vmatpush1.xpose.msra.mxu0 0.0
    %935 = vmatprep.subr.mxu0 0.0
    %936 = vmatpush1.xpose.msra.mxu0 0.0
    %937 = vmatprep.subr.mxu0 0.0
    %938 = vmatpush1.xpose.msra.mxu0 0.0
    %939 = vmatprep.subr.mxu0 0.0
    %940 = vmatpush1.xpose.msra.mxu0 0.0
    %941 = vmatprep.subr.mxu0 0.0
    %942 = vmatpush1.xpose.msra.mxu0 0.0
    %943 = vmatprep.subr.mxu0 0.0
    %944 = vmatpush1.xpose.msra.mxu0 0.0
    %945 = vmatprep.subr.mxu0 0.0
    %946 = vmatpush1.xpose.msra.mxu0 0.0
    %947 = vmatprep.subr.mxu0 0.0
    %948 = vmatpush1.xpose.msra.mxu0 0.0
    %949 = vmatprep.subr.mxu0 0.0
    %950 = vmatpush1.xpose.msra.mxu0 0.0
    %951 = vmatprep.subr.mxu0 0.0
    %952 = vmatpush1.xpose.msra.mxu0 0.0
    %953 = vmatprep.subr.mxu0 0.0
    %954 = vmatpush1.xpose.msra.mxu0 0.0
    %955 = vmatprep.subr.mxu0 0.0
    %956 = vmatpush1.xpose.msra.mxu0 0.0
    %957 = vmatprep.subr.mxu0 0.0
    %958 = vmatpush1.xpose.msra.mxu0 0.0
    %959 = vmatprep.subr.mxu0 0.0
    %960 = vmatpush1.xpose.msra.mxu0 0.0
    %961 = vmatprep.subr.mxu0 0.0
    %962 = vmatpush1.xpose.msra.mxu0 0.0
    %963 = vmatprep.subr.mxu0 0.0
    %964 = vmatpush1.xpose.msra.mxu0 0.0
    %965 = vmatprep.subr.mxu0 0.0
    %966 = vmatpush1.xpose.msra.mxu0 0.0
    %967 = vmatprep.subr.mxu0 0.0
    %968 = vmatpush1.xpose.msra.mxu0 0.0
    %969 = vmatprep.subr.mxu0 0.0
    %970 = vmatpush1.xpose.msra.mxu0 0.0
    %971 = vmatprep.subr.mxu0 0.0
    %972 = vmatpush1.xpose.msra.mxu0 0.0
    %973 = vmatprep.subr.mxu0 0.0
    %974 = vmatpush1.xpose.msra.mxu0 0.0
    %975 = vmatprep.subr.mxu0 0.0
    %976 = vmatpush1.xpose.msra.mxu0 0.0
    %977 = vmatprep.subr.mxu0 0.0
    %978 = vmatpush1.xpose.msra.mxu0 0.0
    %979 = vmatprep.subr.mxu0 0.0
    %980 = vmatpush1.xpose.msra.mxu0 0.0
    %981 = vmatprep.subr.mxu0 0.0
    %982 = vmatpush1.xpose.msra.mxu0 0.0
    %983 = vmatprep.subr.mxu0 0.0
    %984 = vmatpush1.xpose.msra.mxu0 0.0
    %985 = vmatprep.mubr.f32.mxu0 0.0
    %986 = vmatmul.mubr.f32.gmra.mrb[0].mxu0 %v917
    %v987 = vpop.f32.mrb[0].mxu0
    %v988 = vadd.f32 0.0, %v987
    %v989 = vpop.f32.mrb[0].mxu0
    %990 = vdwg.mxu0
    %v991 = vsel %vm238, %v988, -inf
    %992 = vmax.xlane.f32.xlu0 %v991
    %v993 = vpop.xlane.xlu0 %992
    %v994 = vsub.f32 %v988, %v993
    %v995 = vmul.f32 %v994, 1.442695
    %v996 = vpow.pop %v995
    %v997 = vsel %vm238, %v996, 0.0
    %998 = vadd.xlane.f32.xlu0 %v997
    %v999 = vpop.xlane.xlu0 %998
    %v1000 = vrcp.pop %v999
    %v1001 = vmul.f32 %v996, %v1000
    %1002 = vrot.lane.b32.xlu0 %v232, 64
    %v1003 = vpop.permute.xlu0 %1002
    %v1006 = vsel %vm238, %v1001, 0
    %1008 = vmatprep.subr.mxu0 0.0
    %1009 = vmatpush1.msra.mxu0 %v1003
    %1010 = vmatprep.subr.mxu0 0.0
    %1011 = vmatpush1.msra.mxu0 0.0
    %1012 = vmatprep.subr.mxu0 0.0
    %1013 = vmatpush1.msra.mxu0 0.0
    %1014 = vmatprep.subr.mxu0 0.0
    %1015 = vmatpush1.msra.mxu0 0.0
    %1016 = vmatprep.subr.mxu0 0.0
    %1017 = vmatpush1.msra.mxu0 0.0
    %1018 = vmatprep.subr.mxu0 0.0
    %1019 = vmatpush1.msra.mxu0 0.0
    %1020 = vmatprep.subr.mxu0 0.0
    %1021 = vmatpush1.msra.mxu0 0.0
    %1022 = vmatprep.subr.mxu0 0.0
    %1023 = vmatpush1.msra.mxu0 0.0
    %1024 = vmatprep.subr.mxu0 0.0
    %1025 = vmatpush1.msra.mxu0 0.0
    %1026 = vmatprep.subr.mxu0 0.0
    %1027 = vmatpush1.msra.mxu0 0.0
    %1028 = vmatprep.subr.mxu0 0.0
    %1029 = vmatpush1.msra.mxu0 0.0
    %1030 = vmatprep.subr.mxu0 0.0
    %1031 = vmatpush1.msra.mxu0 0.0
    %1032 = vmatprep.subr.mxu0 0.0
    %1033 = vmatpush1.msra.mxu0 0.0
    %1034 = vmatprep.subr.mxu0 0.0
    %1035 = vmatpush1.msra.mxu0 0.0
    %1036 = vmatprep.subr.mxu0 0.0
    %1037 = vmatpush1.msra.mxu0 0.0
    %1038 = vmatprep.subr.mxu0 0.0
    %1039 = vmatpush1.msra.mxu0 0.0
    %1040 = vmatprep.subr.mxu0 0.0
    %1041 = vmatpush1.msra.mxu0 0.0
    %1042 = vmatprep.subr.mxu0 0.0
    %1043 = vmatpush1.msra.mxu0 0.0
    %1044 = vmatprep.subr.mxu0 0.0
    %1045 = vmatpush1.msra.mxu0 0.0
    %1046 = vmatprep.subr.mxu0 0.0
    %1047 = vmatpush1.msra.mxu0 0.0
    %1048 = vmatprep.subr.mxu0 0.0
    %1049 = vmatpush1.msra.mxu0 0.0
    %1050 = vmatprep.subr.mxu0 0.0
    %1051 = vmatpush1.msra.mxu0 0.0
    %1052 = vmatprep.subr.mxu0 0.0
    %1053 = vmatpush1.msra.mxu0 0.0
    %1054 = vmatprep.subr.mxu0 0.0
    %1055 = vmatpush1.msra.mxu0 0.0
    %1056 = vmatprep.subr.mxu0 0.0
    %1057 = vmatpush1.msra.mxu0 0.0
    %1058 = vmatprep.subr.mxu0 0.0
    %1059 = vmatpush1.msra.mxu0 0.0
    %1060 = vmatprep.subr.mxu0 0.0
    %1061 = vmatpush1.msra.mxu0 0.0
    %1062 = vmatprep.subr.mxu0 0.0
    %1063 = vmatpush1.msra.mxu0 0.0
    %1064 = vmatprep.subr.mxu0 0.0
    %1065 = vmatpush1.msra.mxu0 0.0
    %1066 = vmatprep.subr.mxu0 0.0
    %1067 = vmatpush1.msra.mxu0 0.0
    %1068 = vmatprep.subr.mxu0 0.0
    %1069 = vmatpush1.msra.mxu0 0.0
    %1070 = vmatprep.subr.mxu0 0.0
    %1071 = vmatpush1.msra.mxu0 0.0
    %1072 = vmatprep.mubr.f32.mxu0 0.0
    %1073 = vmatmul.mubr.f32.gmra.mrb[0].mxu0 %v1006
    %v1074 = vpop.f32.mrb[0].mxu0
    %v1075 = vadd.f32 0.0, %v1074
    %v1076 = vpop.f32.mrb[0].mxu0
    %1077 = vdwg.mxu0
    %1078 = vst.msk [vmem:[#allocation2 + $0x8] sm:$0xff] %vm238, %v1075
    %1079 = vrot.lane.b32.xlu0 %v232, 120
    %v1080 = vpop.permute.xlu0 %1079
    %1081 = vrot.lane.b32.xlu0 %v232, 88
    %v1082 = vpop.permute.xlu0 %1081
    %v1083 = vsel %vm238, %v1080, 0
    %v1085 = vsel %vm238, %v1082, 0
    %1087 = vmatprep.subr.mxu0 0.0
    %1088 = vmatpush1.xpose.msra.mxu0 %v1085
    %1089 = vmatprep.subr.mxu0 0.0
    %1090 = vmatpush1.xpose.msra.mxu0 0.0
    %1091 = vmatprep.subr.mxu0 0.0
    %1092 = vmatpush1.xpose.msra.mxu0 0.0
    %1093 = vmatprep.subr.mxu0 0.0
    %1094 = vmatpush1.xpose.msra.mxu0 0.0
    %1095 = vmatprep.subr.mxu0 0.0
    %1096 = vmatpush1.xpose.msra.mxu0 0.0
    %1097 = vmatprep.subr.mxu0 0.0
    %1098 = vmatpush1.xpose.msra.mxu0 0.0
    %1099 = vmatprep.subr.mxu0 0.0
    %1100 = vmatpush1.xpose.msra.mxu0 0.0
    %1101 = vmatprep.subr.mxu0 0.0
    %1102 = vmatpush1.xpose.msra.mxu0 0.0
    %1103 = vmatprep.subr.mxu0 0.0
    %1104 = vmatpush1.xpose.msra.mxu0 0.0
    %1105 = vmatprep.subr.mxu0 0.0
    %1106 = vmatpush1.xpose.msra.mxu0 0.0
    %1107 = vmatprep.subr.mxu0 0.0
    %1108 = vmatpush1.xpose.msra.mxu0 0.0
    %1109 = vmatprep.subr.mxu0 0.0
    %1110 = vmatpush1.xpose.msra.mxu0 0.0
    %1111 = vmatprep.subr.mxu0 0.0
    %1112 = vmatpush1.xpose.msra.mxu0 0.0
    %1113 = vmatprep.subr.mxu0 0.0
    %1114 = vmatpush1.xpose.msra.mxu0 0.0
    %1115 = vmatprep.subr.mxu0 0.0
    %1116 = vmatpush1.xpose.msra.mxu0 0.0
    %1117 = vmatprep.subr.mxu0 0.0
    %1118 = vmatpush1.xpose.msra.mxu0 0.0
    %1119 = vmatprep.subr.mxu0 0.0
    %1120 = vmatpush1.xpose.msra.mxu0 0.0
    %1121 = vmatprep.subr.mxu0 0.0
    %1122 = vmatpush1.xpose.msra.mxu0 0.0
    %1123 = vmatprep.subr.mxu0 0.0
    %1124 = vmatpush1.xpose.msra.mxu0 0.0
    %1125 = vmatprep.subr.mxu0 0.0
    %1126 = vmatpush1.xpose.msra.mxu0 0.0
    %1127 = vmatprep.subr.mxu0 0.0
    %1128 = vmatpush1.xpose.msra.mxu0 0.0
    %1129 = vmatprep.subr.mxu0 0.0
    %1130 = vmatpush1.xpose.msra.mxu0 0.0
    %1131 = vmatprep.subr.mxu0 0.0
    %1132 = vmatpush1.xpose.msra.mxu0 0.0
    %1133 = vmatprep.subr.mxu0 0.0
    %1134 = vmatpush1.xpose.msra.mxu0 0.0
    %1135 = vmatprep.subr.mxu0 0.0
    %1136 = vmatpush1.xpose.msra.mxu0 0.0
    %1137 = vmatprep.subr.mxu0 0.0
    %1138 = vmatpush1.xpose.msra.mxu0 0.0
    %1139 = vmatprep.subr.mxu0 0.0
    %1140 = vmatpush1.xpose.msra.mxu0 0.0
    %1141 = vmatprep.subr.mxu0 0.0
    %1142 = vmatpush1.xpose.msra.mxu0 0.0
    %1143 = vmatprep.subr.mxu0 0.0
    %1144 = vmatpush1.xpose.msra.mxu0 0.0
    %1145 = vmatprep.subr.mxu0 0.0
    %1146 = vmatpush1.xpose.msra.mxu0 0.0
    %1147 = vmatprep.subr.mxu0 0.0
    %1148 = vmatpush1.xpose.msra.mxu0 0.0
    %1149 = vmatprep.subr.mxu0 0.0
    %1150 = vmatpush1.xpose.msra.mxu0 0.0
    %1151 = vmatprep.mubr.f32.mxu0 0.0
    %1152 = vmatmul.mubr.f32.gmra.mrb[0].mxu0 %v1083
    %v1153 = vpop.f32.mrb[0].mxu0
    %v1154 = vadd.f32 0.0, %v1153
    %v1155 = vpop.f32.mrb[0].mxu0
    %1156 = vdwg.mxu0
    %v1157 = vsel %vm238, %v1154, -inf
    %1158 = vmax.xlane.f32.xlu0 %v1157
    %v1159 = vpop.xlane.xlu0 %1158
    %v1160 = vsub.f32 %v1154, %v1159
    %v1161 = vmul.f32 %v1160, 1.442695
    %v1162 = vpow.pop %v1161
    %v1163 = vsel %vm238, %v1162, 0.0
    %1164 = vadd.xlane.f32.xlu0 %v1163
    %v1165 = vpop.xlane.xlu0 %1164
    %v1166 = vrcp.pop %v1165
    %v1167 = vmul.f32 %v1162, %v1166
    %1168 = vrot.lane.b32.xlu0 %v232, 56
    %v1169 = vpop.permute.xlu0 %1168
    %v1172 = vsel %vm238, %v1167, 0
    %1174 = vmatprep.subr.mxu0 0.0
    %1175 = vmatpush1.msra.mxu0 %v1169
    %1176 = vmatprep.subr.mxu0 0.0
    %1177 = vmatpush1.msra.mxu0 0.0
    %1178 = vmatprep.subr.mxu0 0.0
    %1179 = vmatpush1.msra.mxu0 0.0
    %1180 = vmatprep.subr.mxu0 0.0
    %1181 = vmatpush1.msra.mxu0 0.0
    %1182 = vmatprep.subr.mxu0 0.0
    %1183 = vmatpush1.msra.mxu0 0.0
    %1184 = vmatprep.subr.mxu0 0.0
    %1185 = vmatpush1.msra.mxu0 0.0
    %1186 = vmatprep.subr.mxu0 0.0
    %1187 = vmatpush1.msra.mxu0 0.0
    %1188 = vmatprep.subr.mxu0 0.0
    %1189 = vmatpush1.msra.mxu0 0.0
    %1190 = vmatprep.subr.mxu0 0.0
    %1191 = vmatpush1.msra.mxu0 0.0
    %1192 = vmatprep.subr.mxu0 0.0
    %1193 = vmatpush1.msra.mxu0 0.0
    %1194 = vmatprep.subr.mxu0 0.0
    %1195 = vmatpush1.msra.mxu0 0.0
    %1196 = vmatprep.subr.mxu0 0.0
    %1197 = vmatpush1.msra.mxu0 0.0
    %1198 = vmatprep.subr.mxu0 0.0
    %1199 = vmatpush1.msra.mxu0 0.0
    %1200 = vmatprep.subr.mxu0 0.0
    %1201 = vmatpush1.msra.mxu0 0.0
    %1202 = vmatprep.subr.mxu0 0.0
    %1203 = vmatpush1.msra.mxu0 0.0
    %1204 = vmatprep.subr.mxu0 0.0
    %1205 = vmatpush1.msra.mxu0 0.0
    %1206 = vmatprep.subr.mxu0 0.0
    %1207 = vmatpush1.msra.mxu0 0.0
    %1208 = vmatprep.subr.mxu0 0.0
    %1209 = vmatpush1.msra.mxu0 0.0
    %1210 = vmatprep.subr.mxu0 0.0
    %1211 = vmatpush1.msra.mxu0 0.0
    %1212 = vmatprep.subr.mxu0 0.0
    %1213 = vmatpush1.msra.mxu0 0.0
    %1214 = vmatprep.subr.mxu0 0.0
    %1215 = vmatpush1.msra.mxu0 0.0
    %1216 = vmatprep.subr.mxu0 0.0
    %1217 = vmatpush1.msra.mxu0 0.0
    %1218 = vmatprep.subr.mxu0 0.0
    %1219 = vmatpush1.msra.mxu0 0.0
    %1220 = vmatprep.subr.mxu0 0.0
    %1221 = vmatpush1.msra.mxu0 0.0
    %1222 = vmatprep.subr.mxu0 0.0
    %1223 = vmatpush1.msra.mxu0 0.0
    %1224 = vmatprep.subr.mxu0 0.0
    %1225 = vmatpush1.msra.mxu0 0.0
    %1226 = vmatprep.subr.mxu0 0.0
    %1227 = vmatpush1.msra.mxu0 0.0
    %1228 = vmatprep.subr.mxu0 0.0
    %1229 = vmatpush1.msra.mxu0 0.0
    %1230 = vmatprep.subr.mxu0 0.0
    %1231 = vmatpush1.msra.mxu0 0.0
    %1232 = vmatprep.subr.mxu0 0.0
    %1233 = vmatpush1.msra.mxu0 0.0
    %1234 = vmatprep.subr.mxu0 0.0
    %1235 = vmatpush1.msra.mxu0 0.0
    %1236 = vmatprep.subr.mxu0 0.0
    %1237 = vmatpush1.msra.mxu0 0.0
    %1238 = vmatprep.mubr.f32.mxu0 0.0
    %1239 = vmatmul.mubr.f32.gmra.mrb[0].mxu0 %v1172
    %v1240 = vpop.f32.mrb[0].mxu0
    %v1241 = vadd.f32 0.0, %v1240
    %v1242 = vpop.f32.mrb[0].mxu0
    %1243 = vdwg.mxu0
    %1245 = vrot.lane.b32.xlu0 %v1241, 8
    %v1246 = vpop.permute.xlu0 %1245
    %1248 = vst.msk [vmem:[#allocation2 + $0x8] sm:$0xff] %vm570, %v1246
    %1249 = vrot.lane.b32.xlu0 %v232, 112
    %v1250 = vpop.permute.xlu0 %1249
    %1251 = vrot.lane.b32.xlu0 %v232, 80
    %v1252 = vpop.permute.xlu0 %1251
    %v1253 = vsel %vm238, %v1250, 0
    %v1255 = vsel %vm238, %v1252, 0
    %1257 = vmatprep.subr.mxu0 0.0
    %1258 = vmatpush1.xpose.msra.mxu0 %v1255
    %1259 = vmatprep.subr.mxu0 0.0
    %1260 = vmatpush1.xpose.msra.mxu0 0.0
    %1261 = vmatprep.subr.mxu0 0.0
    %1262 = vmatpush1.xpose.msra.mxu0 0.0
    %1263 = vmatprep.subr.mxu0 0.0
    %1264 = vmatpush1.xpose.msra.mxu0 0.0
    %1265 = vmatprep.subr.mxu0 0.0
    %1266 = vmatpush1.xpose.msra.mxu0 0.0
    %1267 = vmatprep.subr.mxu0 0.0
    %1268 = vmatpush1.xpose.msra.mxu0 0.0
    %1269 = vmatprep.subr.mxu0 0.0
    %1270 = vmatpush1.xpose.msra.mxu0 0.0
    %1271 = vmatprep.subr.mxu0 0.0
    %1272 = vmatpush1.xpose.msra.mxu0 0.0
    %1273 = vmatprep.subr.mxu0 0.0
    %1274 = vmatpush1.xpose.msra.mxu0 0.0
    %1275 = vmatprep.subr.mxu0 0.0
    %1276 = vmatpush1.xpose.msra.mxu0 0.0
    %1277 = vmatprep.subr.mxu0 0.0
    %1278 = vmatpush1.xpose.msra.mxu0 0.0
    %1279 = vmatprep.subr.mxu0 0.0
    %1280 = vmatpush1.xpose.msra.mxu0 0.0
    %1281 = vmatprep.subr.mxu0 0.0
    %1282 = vmatpush1.xpose.msra.mxu0 0.0
    %1283 = vmatprep.subr.mxu0 0.0
    %1284 = vmatpush1.xpose.msra.mxu0 0.0
    %1285 = vmatprep.subr.mxu0 0.0
    %1286 = vmatpush1.xpose.msra.mxu0 0.0
    %1287 = vmatprep.subr.mxu0 0.0
    %1288 = vmatpush1.xpose.msra.mxu0 0.0
    %1289 = vmatprep.subr.mxu0 0.0
    %1290 = vmatpush1.xpose.msra.mxu0 0.0
    %1291 = vmatprep.subr.mxu0 0.0
    %1292 = vmatpush1.xpose.msra.mxu0 0.0
    %1293 = vmatprep.subr.mxu0 0.0
    %1294 = vmatpush1.xpose.msra.mxu0 0.0
    %1295 = vmatprep.subr.mxu0 0.0
    %1296 = vmatpush1.xpose.msra.mxu0 0.0
    %1297 = vmatprep.subr.mxu0 0.0
    %1298 = vmatpush1.xpose.msra.mxu0 0.0
    %1299 = vmatprep.subr.mxu0 0.0
    %1300 = vmatpush1.xpose.msra.mxu0 0.0
    %1301 = vmatprep.subr.mxu0 0.0
    %1302 = vmatpush1.xpose.msra.mxu0 0.0
    %1303 = vmatprep.subr.mxu0 0.0
    %1304 = vmatpush1.xpose.msra.mxu0 0.0
    %1305 = vmatprep.subr.mxu0 0.0
    %1306 = vmatpush1.xpose.msra.mxu0 0.0
    %1307 = vmatprep.subr.mxu0 0.0
    %1308 = vmatpush1.xpose.msra.mxu0 0.0
    %1309 = vmatprep.subr.mxu0 0.0
    %1310 = vmatpush1.xpose.msra.mxu0 0.0
    %1311 = vmatprep.subr.mxu0 0.0
    %1312 = vmatpush1.xpose.msra.mxu0 0.0
    %1313 = vmatprep.subr.mxu0 0.0
    %1314 = vmatpush1.xpose.msra.mxu0 0.0
    %1315 = vmatprep.subr.mxu0 0.0
    %1316 = vmatpush1.xpose.msra.mxu0 0.0
    %1317 = vmatprep.subr.mxu0 0.0
    %1318 = vmatpush1.xpose.msra.mxu0 0.0
    %1319 = vmatprep.subr.mxu0 0.0
    %1320 = vmatpush1.xpose.msra.mxu0 0.0
    %1321 = vmatprep.mubr.f32.mxu0 0.0
    %1322 = vmatmul.mubr.f32.gmra.mrb[0].mxu0 %v1253
    %v1323 = vpop.f32.mrb[0].mxu0
    %v1324 = vadd.f32 0.0, %v1323
    %v1325 = vpop.f32.mrb[0].mxu0
    %1326 = vdwg.mxu0
    %v1327 = vsel %vm238, %v1324, -inf
    %1328 = vmax.xlane.f32.xlu0 %v1327
    %v1329 = vpop.xlane.xlu0 %1328
    %v1330 = vsub.f32 %v1324, %v1329
    %v1331 = vmul.f32 %v1330, 1.442695
    %v1332 = vpow.pop %v1331
    %v1333 = vsel %vm238, %v1332, 0.0
    %1334 = vadd.xlane.f32.xlu0 %v1333
    %v1335 = vpop.xlane.xlu0 %1334
    %v1336 = vrcp.pop %v1335
    %v1337 = vmul.f32 %v1332, %v1336
    %1338 = vrot.lane.b32.xlu0 %v232, 48
    %v1339 = vpop.permute.xlu0 %1338
    %v1342 = vsel %vm238, %v1337, 0
    %1344 = vmatprep.subr.mxu0 0.0
    %1345 = vmatpush1.msra.mxu0 %v1339
    %1346 = vmatprep.subr.mxu0 0.0
    %1347 = vmatpush1.msra.mxu0 0.0
    %1348 = vmatprep.subr.mxu0 0.0
    %1349 = vmatpush1.msra.mxu0 0.0
    %1350 = vmatprep.subr.mxu0 0.0
    %1351 = vmatpush1.msra.mxu0 0.0
    %1352 = vmatprep.subr.mxu0 0.0
    %1353 = vmatpush1.msra.mxu0 0.0
    %1354 = vmatprep.subr.mxu0 0.0
    %1355 = vmatpush1.msra.mxu0 0.0
    %1356 = vmatprep.subr.mxu0 0.0
    %1357 = vmatpush1.msra.mxu0 0.0
    %1358 = vmatprep.subr.mxu0 0.0
    %1359 = vmatpush1.msra.mxu0 0.0
    %1360 = vmatprep.subr.mxu0 0.0
    %1361 = vmatpush1.msra.mxu0 0.0
    %1362 = vmatprep.subr.mxu0 0.0
    %1363 = vmatpush1.msra.mxu0 0.0
    %1364 = vmatprep.subr.mxu0 0.0
    %1365 = vmatpush1.msra.mxu0 0.0
    %1366 = vmatprep.subr.mxu0 0.0
    %1367 = vmatpush1.msra.mxu0 0.0
    %1368 = vmatprep.subr.mxu0 0.0
    %1369 = vmatpush1.msra.mxu0 0.0
    %1370 = vmatprep.subr.mxu0 0.0
    %1371 = vmatpush1.msra.mxu0 0.0
    %1372 = vmatprep.subr.mxu0 0.0
    %1373 = vmatpush1.msra.mxu0 0.0
    %1374 = vmatprep.subr.mxu0 0.0
    %1375 = vmatpush1.msra.mxu0 0.0
    %1376 = vmatprep.subr.mxu0 0.0
    %1377 = vmatpush1.msra.mxu0 0.0
    %1378 = vmatprep.subr.mxu0 0.0
    %1379 = vmatpush1.msra.mxu0 0.0
    %1380 = vmatprep.subr.mxu0 0.0
    %1381 = vmatpush1.msra.mxu0 0.0
    %1382 = vmatprep.subr.mxu0 0.0
    %1383 = vmatpush1.msra.mxu0 0.0
    %1384 = vmatprep.subr.mxu0 0.0
    %1385 = vmatpush1.msra.mxu0 0.0
    %1386 = vmatprep.subr.mxu0 0.0
    %1387 = vmatpush1.msra.mxu0 0.0
    %1388 = vmatprep.subr.mxu0 0.0
    %1389 = vmatpush1.msra.mxu0 0.0
    %1390 = vmatprep.subr.mxu0 0.0
    %1391 = vmatpush1.msra.mxu0 0.0
    %1392 = vmatprep.subr.mxu0 0.0
    %1393 = vmatpush1.msra.mxu0 0.0
    %1394 = vmatprep.subr.mxu0 0.0
    %1395 = vmatpush1.msra.mxu0 0.0
    %1396 = vmatprep.subr.mxu0 0.0
    %1397 = vmatpush1.msra.mxu0 0.0
    %1398 = vmatprep.subr.mxu0 0.0
    %1399 = vmatpush1.msra.mxu0 0.0
    %1400 = vmatprep.subr.mxu0 0.0
    %1401 = vmatpush1.msra.mxu0 0.0
    %1402 = vmatprep.subr.mxu0 0.0
    %1403 = vmatpush1.msra.mxu0 0.0
    %1404 = vmatprep.subr.mxu0 0.0
    %1405 = vmatpush1.msra.mxu0 0.0
    %1406 = vmatprep.subr.mxu0 0.0
    %1407 = vmatpush1.msra.mxu0 0.0
    %1408 = vmatprep.mubr.f32.mxu0 0.0
    %1409 = vmatmul.mubr.f32.gmra.mrb[0].mxu0 %v1342
    %v1410 = vpop.f32.mrb[0].mxu0
    %v1411 = vadd.f32 0.0, %v1410
    %v1412 = vpop.f32.mrb[0].mxu0
    %1413 = vdwg.mxu0
    %1415 = vrot.lane.b32.xlu0 %v1411, 16
    %v1416 = vpop.permute.xlu0 %1415
    %1418 = vst.msk [vmem:[#allocation2 + $0x8] sm:$0xff] %vm741, %v1416
    %1419 = vrot.lane.b32.xlu0 %v232, 104
    %v1420 = vpop.permute.xlu0 %1419
    %1421 = vrot.lane.b32.xlu0 %v232, 72
    %v1422 = vpop.permute.xlu0 %1421
    %v1423 = vsel %vm238, %v1420, 0
    %v1425 = vsel %vm238, %v1422, 0
    %1427 = vmatprep.subr.mxu0 0.0
    %1428 = vmatpush1.xpose.msra.mxu0 %v1425
    %1429 = vmatprep.subr.mxu0 0.0
    %1430 = vmatpush1.xpose.msra.mxu0 0.0
    %1431 = vmatprep.subr.mxu0 0.0
    %1432 = vmatpush1.xpose.msra.mxu0 0.0
    %1433 = vmatprep.subr.mxu0 0.0
    %1434 = vmatpush1.xpose.msra.mxu0 0.0
    %1435 = vmatprep.subr.mxu0 0.0
    %1436 = vmatpush1.xpose.msra.mxu0 0.0
    %1437 = vmatprep.subr.mxu0 0.0
    %1438 = vmatpush1.xpose.msra.mxu0 0.0
    %1439 = vmatprep.subr.mxu0 0.0
    %1440 = vmatpush1.xpose.msra.mxu0 0.0
    %1441 = vmatprep.subr.mxu0 0.0
    %1442 = vmatpush1.xpose.msra.mxu0 0.0
    %1443 = vmatprep.subr.mxu0 0.0
    %1444 = vmatpush1.xpose.msra.mxu0 0.0
    %1445 = vmatprep.subr.mxu0 0.0
    %1446 = vmatpush1.xpose.msra.mxu0 0.0
    %1447 = vmatprep.subr.mxu0 0.0
    %1448 = vmatpush1.xpose.msra.mxu0 0.0
    %1449 = vmatprep.subr.mxu0 0.0
    %1450 = vmatpush1.xpose.msra.mxu0 0.0
    %1451 = vmatprep.subr.mxu0 0.0
    %1452 = vmatpush1.xpose.msra.mxu0 0.0
    %1453 = vmatprep.subr.mxu0 0.0
    %1454 = vmatpush1.xpose.msra.mxu0 0.0
    %1455 = vmatprep.subr.mxu0 0.0
    %1456 = vmatpush1.xpose.msra.mxu0 0.0
    %1457 = vmatprep.subr.mxu0 0.0
    %1458 = vmatpush1.xpose.msra.mxu0 0.0
    %1459 = vmatprep.subr.mxu0 0.0
    %1460 = vmatpush1.xpose.msra.mxu0 0.0
    %1461 = vmatprep.subr.mxu0 0.0
    %1462 = vmatpush1.xpose.msra.mxu0 0.0
    %1463 = vmatprep.subr.mxu0 0.0
    %1464 = vmatpush1.xpose.msra.mxu0 0.0
    %1465 = vmatprep.subr.mxu0 0.0
    %1466 = vmatpush1.xpose.msra.mxu0 0.0
    %1467 = vmatprep.subr.mxu0 0.0
    %1468 = vmatpush1.xpose.msra.mxu0 0.0
    %1469 = vmatprep.subr.mxu0 0.0
    %1470 = vmatpush1.xpose.msra.mxu0 0.0
    %1471 = vmatprep.subr.mxu0 0.0
    %1472 = vmatpush1.xpose.msra.mxu0 0.0
    %1473 = vmatprep.subr.mxu0 0.0
    %1474 = vmatpush1.xpose.msra.mxu0 0.0
    %1475 = vmatprep.subr.mxu0 0.0
    %1476 = vmatpush1.xpose.msra.mxu0 0.0
    %1477 = vmatprep.subr.mxu0 0.0
    %1478 = vmatpush1.xpose.msra.mxu0 0.0
    %1479 = vmatprep.subr.mxu0 0.0
    %1480 = vmatpush1.xpose.msra.mxu0 0.0
    %1481 = vmatprep.subr.mxu0 0.0
    %1482 = vmatpush1.xpose.msra.mxu0 0.0
    %1483 = vmatprep.subr.mxu0 0.0
    %1484 = vmatpush1.xpose.msra.mxu0 0.0
    %1485 = vmatprep.subr.mxu0 0.0
    %1486 = vmatpush1.xpose.msra.mxu0 0.0
    %1487 = vmatprep.subr.mxu0 0.0
    %1488 = vmatpush1.xpose.msra.mxu0 0.0
    %1489 = vmatprep.subr.mxu0 0.0
    %1490 = vmatpush1.xpose.msra.mxu0 0.0
    %1491 = vmatprep.mubr.f32.mxu0 0.0
    %1492 = vmatmul.mubr.f32.gmra.mrb[0].mxu0 %v1423
    %v1493 = vpop.f32.mrb[0].mxu0
    %v1494 = vadd.f32 0.0, %v1493
    %v1495 = vpop.f32.mrb[0].mxu0
    %1496 = vdwg.mxu0
    %v1497 = vsel %vm238, %v1494, -inf
    %1498 = vmax.xlane.f32.xlu0 %v1497
    %v1499 = vpop.xlane.xlu0 %1498
    %v1500 = vsub.f32 %v1494, %v1499
    %v1501 = vmul.f32 %v1500, 1.442695
    %v1502 = vpow.pop %v1501
    %v1503 = vsel %vm238, %v1502, 0.0
    %1504 = vadd.xlane.f32.xlu0 %v1503
    %v1505 = vpop.xlane.xlu0 %1504
    %v1506 = vrcp.pop %v1505
    %v1507 = vmul.f32 %v1502, %v1506
    %1508 = vrot.lane.b32.xlu0 %v232, 40
    %v1509 = vpop.permute.xlu0 %1508
    %v1512 = vsel %vm238, %v1507, 0
    %1514 = vmatprep.subr.mxu0 0.0
    %1515 = vmatpush1.msra.mxu0 %v1509
    %1516 = vmatprep.subr.mxu0 0.0
    %1517 = vmatpush1.msra.mxu0 0.0
    %1518 = vmatprep.subr.mxu0 0.0
    %1519 = vmatpush1.msra.mxu0 0.0
    %1520 = vmatprep.subr.mxu0 0.0
    %1521 = vmatpush1.msra.mxu0 0.0
    %1522 = vmatprep.subr.mxu0 0.0
    %1523 = vmatpush1.msra.mxu0 0.0
    %1524 = vmatprep.subr.mxu0 0.0
    %1525 = vmatpush1.msra.mxu0 0.0
    %1526 = vmatprep.subr.mxu0 0.0
    %1527 = vmatpush1.msra.mxu0 0.0
    %1528 = vmatprep.subr.mxu0 0.0
    %1529 = vmatpush1.msra.mxu0 0.0
    %1530 = vmatprep.subr.mxu0 0.0
    %1531 = vmatpush1.msra.mxu0 0.0
    %1532 = vmatprep.subr.mxu0 0.0
    %1533 = vmatpush1.msra.mxu0 0.0
    %1534 = vmatprep.subr.mxu0 0.0
    %1535 = vmatpush1.msra.mxu0 0.0
    %1536 = vmatprep.subr.mxu0 0.0
    %1537 = vmatpush1.msra.mxu0 0.0
    %1538 = vmatprep.subr.mxu0 0.0
    %1539 = vmatpush1.msra.mxu0 0.0
    %1540 = vmatprep.subr.mxu0 0.0
    %1541 = vmatpush1.msra.mxu0 0.0
    %1542 = vmatprep.subr.mxu0 0.0
    %1543 = vmatpush1.msra.mxu0 0.0
    %1544 = vmatprep.subr.mxu0 0.0
    %1545 = vmatpush1.msra.mxu0 0.0
    %1546 = vmatprep.subr.mxu0 0.0
    %1547 = vmatpush1.msra.mxu0 0.0
    %1548 = vmatprep.subr.mxu0 0.0
    %1549 = vmatpush1.msra.mxu0 0.0
    %1550 = vmatprep.subr.mxu0 0.0
    %1551 = vmatpush1.msra.mxu0 0.0
    %1552 = vmatprep.subr.mxu0 0.0
    %1553 = vmatpush1.msra.mxu0 0.0
    %1554 = vmatprep.subr.mxu0 0.0
    %1555 = vmatpush1.msra.mxu0 0.0
    %1556 = vmatprep.subr.mxu0 0.0
    %1557 = vmatpush1.msra.mxu0 0.0
    %1558 = vmatprep.subr.mxu0 0.0
    %1559 = vmatpush1.msra.mxu0 0.0
    %1560 = vmatprep.subr.mxu0 0.0
    %1561 = vmatpush1.msra.mxu0 0.0
    %1562 = vmatprep.subr.mxu0 0.0
    %1563 = vmatpush1.msra.mxu0 0.0
    %1564 = vmatprep.subr.mxu0 0.0
    %1565 = vmatpush1.msra.mxu0 0.0
    %1566 = vmatprep.subr.mxu0 0.0
    %1567 = vmatpush1.msra.mxu0 0.0
    %1568 = vmatprep.subr.mxu0 0.0
    %1569 = vmatpush1.msra.mxu0 0.0
    %1570 = vmatprep.subr.mxu0 0.0
    %1571 = vmatpush1.msra.mxu0 0.0
    %1572 = vmatprep.subr.mxu0 0.0
    %1573 = vmatpush1.msra.mxu0 0.0
    %1574 = vmatprep.subr.mxu0 0.0
    %1575 = vmatpush1.msra.mxu0 0.0
    %1576 = vmatprep.subr.mxu0 0.0
    %1577 = vmatpush1.msra.mxu0 0.0
    %1578 = vmatprep.mubr.f32.mxu0 0.0
    %1579 = vmatmul.mubr.f32.gmra.mrb[0].mxu0 %v1512
    %v1580 = vpop.f32.mrb[0].mxu0
    %v1581 = vadd.f32 0.0, %v1580
    %v1582 = vpop.f32.mrb[0].mxu0
    %1583 = vdwg.mxu0
    %1585 = vrot.lane.b32.xlu0 %v1581, 24
    %v1586 = vpop.permute.xlu0 %1585
    %1588 = vst.msk [vmem:[#allocation2 + $0x8] sm:$0xff] %vm912, %v1586
    %v1589 = vld [vmem:[#allocation2] sm:$0xff]
    %v1590 = vld [vmem:[#allocation2 + $0x8] sm:$0xff]
    %v1591 = vld [vmem:[%s4] sm:$0xff]
    %v1592 = vld [vmem:[%s4 + $0x8] sm:$0xff]
    %v1593 = vld [vmem:[%s4 + $0x10] sm:$0xff]
    %v1594 = vld [vmem:[%s4 + $0x18] sm:$0xff]
    %v1595 = vld [vmem:[#allocation9] sm:$0x1]
    %v1597 = vlaneseq
    %v1598 = vshrl.u32 %v1597, 7
    %v1599 = vsub.s32 0, %v1598
    %v1600 = vrot.slane %v1595, %v1599
    %v1603 = vsel %vm153, %v1589, 0
    %v1606 = vsel %vm153, %v1590, 0
    %1608 = vmatprep.subr.mxu0 0.0
    %1609 = vmatpush1.msra.mxu0 %v1591
    %1610 = vmatprep.subr.mxu0 0.0
    %1611 = vmatpush1.msra.mxu0 %v1592
    %1612 = vmatprep.subr.mxu0 0.0
    %1613 = vmatpush1.msra.mxu0 %v1593
    %1614 = vmatprep.subr.mxu0 0.0
    %1615 = vmatpush1.msra.mxu0 %v1594
    %1616 = vmatprep.subr.mxu0 0.0
    %1617 = vmatpush1.msra.mxu0 0.0
    %1618 = vmatprep.subr.mxu0 0.0
    %1619 = vmatpush1.msra.mxu0 0.0
    %1620 = vmatprep.subr.mxu0 0.0
    %1621 = vmatpush1.msra.mxu0 0.0
    %1622 = vmatprep.subr.mxu0 0.0
    %1623 = vmatpush1.msra.mxu0 0.0
    %1624 = vmatprep.subr.mxu0 0.0
    %1625 = vmatpush1.msra.mxu0 0.0
    %1626 = vmatprep.subr.mxu0 0.0
    %1627 = vmatpush1.msra.mxu0 0.0
    %1628 = vmatprep.subr.mxu0 0.0
    %1629 = vmatpush1.msra.mxu0 0.0
    %1630 = vmatprep.subr.mxu0 0.0
    %1631 = vmatpush1.msra.mxu0 0.0
    %1632 = vmatprep.subr.mxu0 0.0
    %1633 = vmatpush1.msra.mxu0 0.0
    %1634 = vmatprep.subr.mxu0 0.0
    %1635 = vmatpush1.msra.mxu0 0.0
    %1636 = vmatprep.subr.mxu0 0.0
    %1637 = vmatpush1.msra.mxu0 0.0
    %1638 = vmatprep.subr.mxu0 0.0
    %1639 = vmatpush1.msra.mxu0 0.0
    %1640 = vmatprep.subr.mxu0 0.0
    %1641 = vmatpush1.msra.mxu0 0.0
    %1642 = vmatprep.subr.mxu0 0.0
    %1643 = vmatpush1.msra.mxu0 0.0
    %1644 = vmatprep.subr.mxu0 0.0
    %1645 = vmatpush1.msra.mxu0 0.0
    %1646 = vmatprep.subr.mxu0 0.0
    %1647 = vmatpush1.msra.mxu0 0.0
    %1648 = vmatprep.subr.mxu0 0.0
    %1649 = vmatpush1.msra.mxu0 0.0
    %1650 = vmatprep.subr.mxu0 0.0
    %1651 = vmatpush1.msra.mxu0 0.0
    %1652 = vmatprep.subr.mxu0 0.0
    %1653 = vmatpush1.msra.mxu0 0.0
    %1654 = vmatprep.subr.mxu0 0.0
    %1655 = vmatpush1.msra.mxu0 0.0
    %1656 = vmatprep.subr.mxu0 0.0
    %1657 = vmatpush1.msra.mxu0 0.0
    %1658 = vmatprep.subr.mxu0 0.0
    %1659 = vmatpush1.msra.mxu0 0.0
    %1660 = vmatprep.subr.mxu0 0.0
    %1661 = vmatpush1.msra.mxu0 0.0
    %1662 = vmatprep.subr.mxu0 0.0
    %1663 = vmatpush1.msra.mxu0 0.0
    %1664 = vmatprep.subr.mxu0 0.0
    %1665 = vmatpush1.msra.mxu0 0.0
    %1666 = vmatprep.subr.mxu0 0.0
    %1667 = vmatpush1.msra.mxu0 0.0
    %1668 = vmatprep.subr.mxu0 0.0
    %1669 = vmatpush1.msra.mxu0 0.0
    %1670 = vmatprep.subr.mxu0 0.0
    %1671 = vmatpush1.msra.mxu0 0.0
    %1672 = vmatprep.mubr.f32.mxu0 0.0
    %1673 = vmatmul.mubr.f32.gmra.mrb[0].mxu0 %v1603
    %v1674 = vpop.f32.mrb[0].mxu0
    %v1675 = vadd.f32 %v1600, %v1674
    %v1676 = vpop.f32.mrb[0].mxu0
    %1677 = vmatprep.mubr.f32.mxu0 0.0
    %1678 = vmatmul.mubr.f32.gmra.mrb[0].mxu0 %v1606
    %v1679 = vpop.f32.mrb[0].mxu0
    %v1680 = vadd.f32 %v1600, %v1679
    %v1681 = vpop.f32.mrb[0].mxu0
    %1682 = vdwg.mxu0
    %v1683 = vadd.f32 %v140, %v1675
    %v1684 = vadd.f32 %v141, %v1680
    %v1685 = vld [vmem:[#allocation10] sm:$0x1]
    %v1686 = vld [vmem:[#allocation12] sm:$0x1]
    %v1687 = vsel %vm153, %v1683, 0.0
    %1688 = vadd.xlane.f32.xlu0 %v1687
    %v1689 = vpop.xlane.xlu0 %1688
    %v1690 = vsel %vm153, %v1684, 0.0
    %1691 = vadd.xlane.f32.xlu0 %v1690
    %v1692 = vpop.xlane.xlu0 %1691
    %v1693 = vrcp.pop 32.0
    %v1694 = vmul.f32 %v1689, %v1693
    %v1695 = vmul.f32 %v1692, %v1693
    %v1696 = vsub.f32 %v1683, %v1694
    %v1697 = vsub.f32 %v1684, %v1695
    %v1698 = vmul.f32 %v1696, %v1696
    %v1699 = vmul.f32 %v1697, %v1697
    %v1700 = vsel %vm153, %v1698, 0.0
    %1701 = vadd.xlane.f32.xlu0 %v1700
    %v1702 = vpop.xlane.xlu0 %1701
    %v1703 = vsel %vm153, %v1699, 0.0
    %1704 = vadd.xlane.f32.xlu0 %v1703
    %v1705 = vpop.xlane.xlu0 %1704
    %v1706 = vmul.f32 %v1702, %v1693
    %v1707 = vmul.f32 %v1705, %v1693
    %v1708 = vadd.f32 %v1706, 1e-05
    %v1709 = vadd.f32 %v1707, 1e-05
    %v1710 = vrsqrt.pop %v1708
    %v1711 = vrsqrt.pop %v1709
    %v1712 = vmul.f32 %v1696, %v1710
    %v1713 = vmul.f32 %v1697, %v1711
    %v1715 = vlaneseq
    %v1716 = vshrl.u32 %v1715, 7
    %v1717 = vsub.s32 0, %v1716
    %v1718 = vrot.slane %v1685, %v1717
    %v1720 = vmul.f32 %v1712, %v1718
    %v1721 = vmul.f32 %v1713, %v1718
    %v1723 = vlaneseq
    %v1724 = vshrl.u32 %v1723, 7
    %v1725 = vsub.s32 0, %v1724
    %v1726 = vrot.slane %v1686, %v1725
    %v1728 = vadd.f32 %v1720, %v1726
    %v1729 = vadd.f32 %v1721, %v1726
    %v1730 = vld [vmem:[%s8] sm:$0xff]
    %v1731 = vld [vmem:[%s8 + $0x8] sm:$0xff]
    %v1732 = vld [vmem:[%s8 + $0x10] sm:$0xff]
    %v1733 = vld [vmem:[%s8 + $0x18] sm:$0xff]
    %v1734 = vld [vmem:[#allocation13] sm:$0x1]
    %v1736 = vlaneseq
    %v1737 = vshrl.u32 %v1736, 7
    %v1738 = vsub.s32 0, %v1737
    %v1739 = vrot.slane %v1734, %v1738
    %v1742 = vsel %vm153, %v1728, 0
    %v1745 = vsel %vm153, %v1729, 0
    %1747 = vmatprep.subr.mxu0 0.0
    %1748 = vmatpush1.msra.mxu0 %v1730
    %1749 = vmatprep.subr.mxu0 0.0
    %1750 = vmatpush1.msra.mxu0 %v1731
    %1751 = vmatprep.subr.mxu0 0.0
    %1752 = vmatpush1.msra.mxu0 %v1732
    %1753 = vmatprep.subr.mxu0 0.0
    %1754 = vmatpush1.msra.mxu0 %v1733
    %1755 = vmatprep.subr.mxu0 0.0
    %1756 = vmatpush1.msra.mxu0 0.0
    %1757 = vmatprep.subr.mxu0 0.0
    %1758 = vmatpush1.msra.mxu0 0.0
    %1759 = vmatprep.subr.mxu0 0.0
    %1760 = vmatpush1.msra.mxu0 0.0
    %1761 = vmatprep.subr.mxu0 0.0
    %1762 = vmatpush1.msra.mxu0 0.0
    %1763 = vmatprep.subr.mxu0 0.0
    %1764 = vmatpush1.msra.mxu0 0.0
    %1765 = vmatprep.subr.mxu0 0.0
    %1766 = vmatpush1.msra.mxu0 0.0
    %1767 = vmatprep.subr.mxu0 0.0
    %1768 = vmatpush1.msra.mxu0 0.0
    %1769 = vmatprep.subr.mxu0 0.0
    %1770 = vmatpush1.msra.mxu0 0.0
    %1771 = vmatprep.subr.mxu0 0.0
    %1772 = vmatpush1.msra.mxu0 0.0
    %1773 = vmatprep.subr.mxu0 0.0
    %1774 = vmatpush1.msra.mxu0 0.0
    %1775 = vmatprep.subr.mxu0 0.0
    %1776 = vmatpush1.msra.mxu0 0.0
    %1777 = vmatprep.subr.mxu0 0.0
    %1778 = vmatpush1.msra.mxu0 0.0
    %1779 = vmatprep.subr.mxu0 0.0
    %1780 = vmatpush1.msra.mxu0 0.0
    %1781 = vmatprep.subr.mxu0 0.0
    %1782 = vmatpush1.msra.mxu0 0.0
    %1783 = vmatprep.subr.mxu0 0.0
    %1784 = vmatpush1.msra.mxu0 0.0
    %1785 = vmatprep.subr.mxu0 0.0
    %1786 = vmatpush1.msra.mxu0 0.0
    %1787 = vmatprep.subr.mxu0 0.0
    %1788 = vmatpush1.msra.mxu0 0.0
    %1789 = vmatprep.subr.mxu0 0.0
    %1790 = vmatpush1.msra.mxu0 0.0
    %1791 = vmatprep.subr.mxu0 0.0
    %1792 = vmatpush1.msra.mxu0 0.0
    %1793 = vmatprep.subr.mxu0 0.0
    %1794 = vmatpush1.msra.mxu0 0.0
    %1795 = vmatprep.subr.mxu0 0.0
    %1796 = vmatpush1.msra.mxu0 0.0
    %1797 = vmatprep.subr.mxu0 0.0
    %1798 = vmatpush1.msra.mxu0 0.0
    %1799 = vmatprep.subr.mxu0 0.0
    %1800 = vmatpush1.msra.mxu0 0.0
    %1801 = vmatprep.subr.mxu0 0.0
    %1802 = vmatpush1.msra.mxu0 0.0
    %1803 = vmatprep.subr.mxu0 0.0
    %1804 = vmatpush1.msra.mxu0 0.0
    %1805 = vmatprep.subr.mxu0 0.0
    %1806 = vmatpush1.msra.mxu0 0.0
    %1807 = vmatprep.subr.mxu0 0.0
    %1808 = vmatpush1.msra.mxu0 0.0
    %1809 = vmatprep.subr.mxu0 0.0
    %1810 = vmatpush1.msra.mxu0 0.0
    %1811 = vmatprep.mubr.f32.mxu0 0.0
    %1812 = vmatmul.mubr.f32.gmra.mrb[0].mxu0 %v1742
    %v1813 = vpop.f32.mrb[0].mxu0
    %v1814 = vadd.f32 %v1739, %v1813
    %v1815 = vpop.f32.mrb[0].mxu0
    %1816 = vmatprep.mubr.f32.mxu0 0.0
    %1817 = vmatmul.mubr.f32.gmra.mrb[0].mxu0 %v1745
    %v1818 = vpop.f32.mrb[0].mxu0
    %v1819 = vadd.f32 %v1739, %v1818
    %v1820 = vpop.f32.mrb[0].mxu0
    %1821 = vdwg.mxu0
    %v1822 = vmax.f32 %v1814, 0.0
    %v1823 = vmax.f32 %v1819, 0.0
    %v1824 = vld [vmem:[%s10] sm:$0xff]
    %v1825 = vld [vmem:[%s10 + $0x8] sm:$0xff]
    %v1826 = vld [vmem:[%s10 + $0x10] sm:$0xff]
    %v1827 = vld [vmem:[%s10 + $0x18] sm:$0xff]
    %v1828 = vld [vmem:[%s10 + $0x20] sm:$0xff]
    %v1829 = vld [vmem:[%s10 + $0x28] sm:$0xff]
    %v1830 = vld [vmem:[%s10 + $0x30] sm:$0xff]
    %v1831 = vld [vmem:[%s10 + $0x38] sm:$0xff]
    %v1832 = vld [vmem:[%s11] sm:$0x1]
    %v1834 = vlaneseq
    %v1835 = vshrl.u32 %v1834, 7
    %v1836 = vsub.s32 0, %v1835
    %v1837 = vrot.slane %v1832, %v1836
    %vm1839 = vcmask 523264
    %v1841 = vsel %vm1839, %v1822, 0
    %v1844 = vsel %vm1839, %v1823, 0
    %1846 = vmatprep.subr.mxu0 0.0
    %1847 = vmatpush1.msra.mxu0 %v1824
    %1848 = vmatprep.subr.mxu0 0.0
    %1849 = vmatpush1.msra.mxu0 %v1825
    %1850 = vmatprep.subr.mxu0 0.0
    %1851 = vmatpush1.msra.mxu0 %v1826
    %1852 = vmatprep.subr.mxu0 0.0
    %1853 = vmatpush1.msra.mxu0 %v1827
    %1854 = vmatprep.subr.mxu0 0.0
    %1855 = vmatpush1.msra.mxu0 %v1828
    %1856 = vmatprep.subr.mxu0 0.0
    %1857 = vmatpush1.msra.mxu0 %v1829
    %1858 = vmatprep.subr.mxu0 0.0
    %1859 = vmatpush1.msra.mxu0 %v1830
    %1860 = vmatprep.subr.mxu0 0.0
    %1861 = vmatpush1.msra.mxu0 %v1831
    %1862 = vmatprep.subr.mxu0 0.0
    %1863 = vmatpush1.msra.mxu0 0.0
    %1864 = vmatprep.subr.mxu0 0.0
    %1865 = vmatpush1.msra.mxu0 0.0
    %1866 = vmatprep.subr.mxu0 0.0
    %1867 = vmatpush1.msra.mxu0 0.0
    %1868 = vmatprep.subr.mxu0 0.0
    %1869 = vmatpush1.msra.mxu0 0.0
    %1870 = vmatprep.subr.mxu0 0.0
    %1871 = vmatpush1.msra.mxu0 0.0
    %1872 = vmatprep.subr.mxu0 0.0
    %1873 = vmatpush1.msra.mxu0 0.0
    %1874 = vmatprep.subr.mxu0 0.0
    %1875 = vmatpush1.msra.mxu0 0.0
    %1876 = vmatprep.subr.mxu0 0.0
    %1877 = vmatpush1.msra.mxu0 0.0
    %1878 = vmatprep.subr.mxu0 0.0
    %1879 = vmatpush1.msra.mxu0 0.0
    %1880 = vmatprep.subr.mxu0 0.0
    %1881 = vmatpush1.msra.mxu0 0.0
    %1882 = vmatprep.subr.mxu0 0.0
    %1883 = vmatpush1.msra.mxu0 0.0
    %1884 = vmatprep.subr.mxu0 0.0
    %1885 = vmatpush1.msra.mxu0 0.0
    %1886 = vmatprep.subr.mxu0 0.0
    %1887 = vmatpush1.msra.mxu0 0.0
    %1888 = vmatprep.subr.mxu0 0.0
    %1889 = vmatpush1.msra.mxu0 0.0
    %1890 = vmatprep.subr.mxu0 0.0
    %1891 = vmatpush1.msra.mxu0 0.0
    %1892 = vmatprep.subr.mxu0 0.0
    %1893 = vmatpush1.msra.mxu0 0.0
    %1894 = vmatprep.subr.mxu0 0.0
    %1895 = vmatpush1.msra.mxu0 0.0
    %1896 = vmatprep.subr.mxu0 0.0
    %1897 = vmatpush1.msra.mxu0 0.0
    %1898 = vmatprep.subr.mxu0 0.0
    %1899 = vmatpush1.msra.mxu0 0.0
    %1900 = vmatprep.subr.mxu0 0.0
    %1901 = vmatpush1.msra.mxu0 0.0
    %1902 = vmatprep.subr.mxu0 0.0
    %1903 = vmatpush1.msra.mxu0 0.0
    %1904 = vmatprep.subr.mxu0 0.0
    %1905 = vmatpush1.msra.mxu0 0.0
    %1906 = vmatprep.subr.mxu0 0.0
    %1907 = vmatpush1.msra.mxu0 0.0
    %1908 = vmatprep.subr.mxu0 0.0
    %1909 = vmatpush1.msra.mxu0 0.0
    %1910 = vmatprep.mubr.f32.mxu0 0.0
    %1911 = vmatmul.mubr.f32.gmra.mrb[0].mxu0 %v1841
    %v1912 = vpop.f32.mrb[0].mxu0
    %v1913 = vadd.f32 %v1837, %v1912
    %v1914 = vpop.f32.mrb[0].mxu0
    %1915 = vmatprep.mubr.f32.mxu0 0.0
    %1916 = vmatmul.mubr.f32.gmra.mrb[0].mxu0 %v1844
    %v1917 = vpop.f32.mrb[0].mxu0
    %v1918 = vadd.f32 %v1837, %v1917
    %v1919 = vpop.f32.mrb[0].mxu0
    %1920 = vdwg.mxu0
    %v1921 = vadd.f32 %v1728, %v1913
    %v1922 = vadd.f32 %v1729, %v1918
    %v1923 = vld [vmem:[%s12] sm:$0x1]
    %v1924 = vld [vmem:[%s13] sm:$0x1]
    %v1925 = vsel %vm153, %v1921, 0.0
    %1926 = vadd.xlane.f32.xlu0 %v1925
    %v1927 = vpop.xlane.xlu0 %1926
    %v1928 = vsel %vm153, %v1922, 0.0
    %1929 = vadd.xlane.f32.xlu0 %v1928
    %v1930 = vpop.xlane.xlu0 %1929
    %v1931 = vmul.f32 %v1927, %v1693
    %v1932 = vmul.f32 %v1930, %v1693
    %v1933 = vsub.f32 %v1921, %v1931
    %v1934 = vsub.f32 %v1922, %v1932
    %v1935 = vmul.f32 %v1933, %v1933
    %v1936 = vmul.f32 %v1934, %v1934
    %v1937 = vsel %vm153, %v1935, 0.0
    %1938 = vadd.xlane.f32.xlu0 %v1937
    %v1939 = vpop.xlane.xlu0 %1938
    %v1940 = vsel %vm153, %v1936, 0.0
    %1941 = vadd.xlane.f32.xlu0 %v1940
    %v1942 = vpop.xlane.xlu0 %1941
    %v1943 = vmul.f32 %v1939, %v1693
    %v1944 = vmul.f32 %v1942, %v1693
    %v1945 = vadd.f32 %v1943, 1e-05
    %v1946 = vadd.f32 %v1944, 1e-05
    %v1947 = vrsqrt.pop %v1945
    %v1948 = vrsqrt.pop %v1946
    %v1949 = vmul.f32 %v1933, %v1947
    %v1950 = vmul.f32 %v1934, %v1948
    %v1952 = vlaneseq
    %v1953 = vshrl.u32 %v1952, 7
    %v1954 = vsub.s32 0, %v1953
    %v1955 = vrot.slane %v1923, %v1954
    %v1957 = vmul.f32 %v1949, %v1955
    %v1958 = vmul.f32 %v1950, %v1955
    %v1960 = vlaneseq
    %v1961 = vshrl.u32 %v1960, 7
    %v1962 = vsub.s32 0, %v1961
    %v1963 = vrot.slane %v1924, %v1962
    %v1965 = vadd.f32 %v1957, %v1963
    %v1966 = vadd.f32 %v1958, %v1963
    %s1967 = scalar_lea.vmem %s2, 32
    %v1968 = vld [vmem:[%s1967] sm:$0xff]
    %v1969 = vld [vmem:[%s1967 + $0x8] sm:$0xff]
    %v1970 = vld [vmem:[%s1967 + $0x10] sm:$0xff]
    %v1971 = vld [vmem:[%s1967 + $0x18] sm:$0xff]
    %s1972 = scalar_lea.vmem %s3, 1
    %v1973 = vld [vmem:[%s1972] sm:$0x1]
    %v1975 = vlaneseq
    %v1976 = vshrl.u32 %v1975, 7
    %v1977 = vsub.s32 0, %v1976
    %v1978 = vrot.slane %v1973, %v1977
    %v1981 = vsel %vm153, %v1965, 0
    %v1984 = vsel %vm153, %v1966, 0
    %1986 = vmatprep.subr.mxu0 0.0
    %1987 = vmatpush1.msra.mxu0 %v1968
    %1988 = vmatprep.subr.mxu0 0.0
    %1989 = vmatpush1.msra.mxu0 %v1969
    %1990 = vmatprep.subr.mxu0 0.0
    %1991 = vmatpush1.msra.mxu0 %v1970
    %1992 = vmatprep.subr.mxu0 0.0
    %1993 = vmatpush1.msra.mxu0 %v1971
    %1994 = vmatprep.subr.mxu0 0.0
    %1995 = vmatpush1.msra.mxu0 0.0
    %1996 = vmatprep.subr.mxu0 0.0
    %1997 = vmatpush1.msra.mxu0 0.0
    %1998 = vmatprep.subr.mxu0 0.0
    %1999 = vmatpush1.msra.mxu0 0.0
    %2000 = vmatprep.subr.mxu0 0.0
    %2001 = vmatpush1.msra.mxu0 0.0
    %2002 = vmatprep.subr.mxu0 0.0
    %2003 = vmatpush1.msra.mxu0 0.0
    %2004 = vmatprep.subr.mxu0 0.0
    %2005 = vmatpush1.msra.mxu0 0.0
    %2006 = vmatprep.subr.mxu0 0.0
    %2007 = vmatpush1.msra.mxu0 0.0
    %2008 = vmatprep.subr.mxu0 0.0
    %2009 = vmatpush1.msra.mxu0 0.0
    %2010 = vmatprep.subr.mxu0 0.0
    %2011 = vmatpush1.msra.mxu0 0.0
    %2012 = vmatprep.subr.mxu0 0.0
    %2013 = vmatpush1.msra.mxu0 0.0
    %2014 = vmatprep.subr.mxu0 0.0
    %2015 = vmatpush1.msra.mxu0 0.0
    %2016 = vmatprep.subr.mxu0 0.0
    %2017 = vmatpush1.msra.mxu0 0.0
    %2018 = vmatprep.subr.mxu0 0.0
    %2019 = vmatpush1.msra.mxu0 0.0
    %2020 = vmatprep.subr.mxu0 0.0
    %2021 = vmatpush1.msra.mxu0 0.0
    %2022 = vmatprep.subr.mxu0 0.0
    %2023 = vmatpush1.msra.mxu0 0.0
    %2024 = vmatprep.subr.mxu0 0.0
    %2025 = vmatpush1.msra.mxu0 0.0
    %2026 = vmatprep.subr.mxu0 0.0
    %2027 = vmatpush1.msra.mxu0 0.0
    %2028 = vmatprep.subr.mxu0 0.0
    %2029 = vmatpush1.msra.mxu0 0.0
    %2030 = vmatprep.subr.mxu0 0.0
    %2031 = vmatpush1.msra.mxu0 0.0
    %2032 = vmatprep.subr.mxu0 0.0
    %2033 = vmatpush1.msra.mxu0 0.0
    %2034 = vmatprep.subr.mxu0 0.0
    %2035 = vmatpush1.msra.mxu0 0.0
    %2036 = vmatprep.subr.mxu0 0.0
    %2037 = vmatpush1.msra.mxu0 0.0
    %2038 = vmatprep.subr.mxu0 0.0
    %2039 = vmatpush1.msra.mxu0 0.0
    %2040 = vmatprep.subr.mxu0 0.0
    %2041 = vmatpush1.msra.mxu0 0.0
    %2042 = vmatprep.subr.mxu0 0.0
    %2043 = vmatpush1.msra.mxu0 0.0
    %2044 = vmatprep.subr.mxu0 0.0
    %2045 = vmatpush1.msra.mxu0 0.0
    %2046 = vmatprep.subr.mxu0 0.0
    %2047 = vmatpush1.msra.mxu0 0.0
    %2048 = vmatprep.subr.mxu0 0.0
    %2049 = vmatpush1.msra.mxu0 0.0
    %2050 = vmatprep.mubr.f32.mxu0 0.0
    %2051 = vmatmul.mubr.f32.gmra.mrb[0].mxu0 %v1981
    %v2052 = vpop.f32.mrb[0].mxu0
    %v2053 = vadd.f32 %v1978, %v2052
    %v2054 = vpop.f32.mrb[0].mxu0
    %2055 = vmatprep.mubr.f32.mxu0 0.0
    %2056 = vmatmul.mubr.f32.gmra.mrb[0].mxu0 %v1984
    %v2057 = vpop.f32.mrb[0].mxu0
    %v2058 = vadd.f32 %v1978, %v2057
    %v2059 = vpop.f32.mrb[0].mxu0
    %2060 = vdwg.mxu0
    %2062 = vrot.lane.b32.xlu0 %v2053, 96
    %v2063 = vpop.permute.xlu0 %2062
    %v2064 = vsel %vm238, %v2053, 0
    %v2066 = vsel %vm238, %v2063, 0
    %2068 = vmatprep.subr.mxu0 0.0
    %2069 = vmatpush1.xpose.msra.mxu0 %v2066
    %2070 = vmatprep.subr.mxu0 0.0
    %2071 = vmatpush1.xpose.msra.mxu0 0.0
    %2072 = vmatprep.subr.mxu0 0.0
    %2073 = vmatpush1.xpose.msra.mxu0 0.0
    %2074 = vmatprep.subr.mxu0 0.0
    %2075 = vmatpush1.xpose.msra.mxu0 0.0
    %2076 = vmatprep.subr.mxu0 0.0
    %2077 = vmatpush1.xpose.msra.mxu0 0.0
    %2078 = vmatprep.subr.mxu0 0.0
    %2079 = vmatpush1.xpose.msra.mxu0 0.0
    %2080 = vmatprep.subr.mxu0 0.0
    %2081 = vmatpush1.xpose.msra.mxu0 0.0
    %2082 = vmatprep.subr.mxu0 0.0
    %2083 = vmatpush1.xpose.msra.mxu0 0.0
    %2084 = vmatprep.subr.mxu0 0.0
    %2085 = vmatpush1.xpose.msra.mxu0 0.0
    %2086 = vmatprep.subr.mxu0 0.0
    %2087 = vmatpush1.xpose.msra.mxu0 0.0
    %2088 = vmatprep.subr.mxu0 0.0
    %2089 = vmatpush1.xpose.msra.mxu0 0.0
    %2090 = vmatprep.subr.mxu0 0.0
    %2091 = vmatpush1.xpose.msra.mxu0 0.0
    %2092 = vmatprep.subr.mxu0 0.0
    %2093 = vmatpush1.xpose.msra.mxu0 0.0
    %2094 = vmatprep.subr.mxu0 0.0
    %2095 = vmatpush1.xpose.msra.mxu0 0.0
    %2096 = vmatprep.subr.mxu0 0.0
    %2097 = vmatpush1.xpose.msra.mxu0 0.0
    %2098 = vmatprep.subr.mxu0 0.0
    %2099 = vmatpush1.xpose.msra.mxu0 0.0
    %2100 = vmatprep.subr.mxu0 0.0
    %2101 = vmatpush1.xpose.msra.mxu0 0.0
    %2102 = vmatprep.subr.mxu0 0.0
    %2103 = vmatpush1.xpose.msra.mxu0 0.0
    %2104 = vmatprep.subr.mxu0 0.0
    %2105 = vmatpush1.xpose.msra.mxu0 0.0
    %2106 = vmatprep.subr.mxu0 0.0
    %2107 = vmatpush1.xpose.msra.mxu0 0.0
    %2108 = vmatprep.subr.mxu0 0.0
    %2109 = vmatpush1.xpose.msra.mxu0 0.0
    %2110 = vmatprep.subr.mxu0 0.0
    %2111 = vmatpush1.xpose.msra.mxu0 0.0
    %2112 = vmatprep.subr.mxu0 0.0
    %2113 = vmatpush1.xpose.msra.mxu0 0.0
    %2114 = vmatprep.subr.mxu0 0.0
    %2115 = vmatpush1.xpose.msra.mxu0 0.0
    %2116 = vmatprep.subr.mxu0 0.0
    %2117 = vmatpush1.xpose.msra.mxu0 0.0
    %2118 = vmatprep.subr.mxu0 0.0
    %2119 = vmatpush1.xpose.msra.mxu0 0.0
    %2120 = vmatprep.subr.mxu0 0.0
    %2121 = vmatpush1.xpose.msra.mxu0 0.0
    %2122 = vmatprep.subr.mxu0 0.0
    %2123 = vmatpush1.xpose.msra.mxu0 0.0
    %2124 = vmatprep.subr.mxu0 0.0
    %2125 = vmatpush1.xpose.msra.mxu0 0.0
    %2126 = vmatprep.subr.mxu0 0.0
    %2127 = vmatpush1.xpose.msra.mxu0 0.0
    %2128 = vmatprep.subr.mxu0 0.0
    %2129 = vmatpush1.xpose.msra.mxu0 0.0
    %2130 = vmatprep.subr.mxu0 0.0
    %2131 = vmatpush1.xpose.msra.mxu0 0.0
    %2132 = vmatprep.mubr.f32.mxu0 0.0
    %2133 = vmatmul.mubr.f32.gmra.mrb[0].mxu0 %v2064
    %v2134 = vpop.f32.mrb[0].mxu0
    %v2135 = vadd.f32 0.0, %v2134
    %v2136 = vpop.f32.mrb[0].mxu0
    %2137 = vdwg.mxu0
    %v2138 = vsel %vm238, %v2135, -inf
    %2139 = vmax.xlane.f32.xlu0 %v2138
    %v2140 = vpop.xlane.xlu0 %2139
    %v2141 = vsub.f32 %v2135, %v2140
    %v2142 = vmul.f32 %v2141, 1.442695
    %v2143 = vpow.pop %v2142
    %v2144 = vsel %vm238, %v2143, 0.0
    %2145 = vadd.xlane.f32.xlu0 %v2144
    %v2146 = vpop.xlane.xlu0 %2145
    %v2147 = vrcp.pop %v2146
    %v2148 = vmul.f32 %v2143, %v2147
    %2149 = vrot.lane.b32.xlu0 %v2053, 64
    %v2150 = vpop.permute.xlu0 %2149
    %v2153 = vsel %vm238, %v2148, 0
    %2155 = vmatprep.subr.mxu0 0.0
    %2156 = vmatpush1.msra.mxu0 %v2150
    %2157 = vmatprep.subr.mxu0 0.0
    %2158 = vmatpush1.msra.mxu0 0.0
    %2159 = vmatprep.subr.mxu0 0.0
    %2160 = vmatpush1.msra.mxu0 0.0
    %2161 = vmatprep.subr.mxu0 0.0
    %2162 = vmatpush1.msra.mxu0 0.0
    %2163 = vmatprep.subr.mxu0 0.0
    %2164 = vmatpush1.msra.mxu0 0.0
    %2165 = vmatprep.subr.mxu0 0.0
    %2166 = vmatpush1.msra.mxu0 0.0
    %2167 = vmatprep.subr.mxu0 0.0
    %2168 = vmatpush1.msra.mxu0 0.0
    %2169 = vmatprep.subr.mxu0 0.0
    %2170 = vmatpush1.msra.mxu0 0.0
    %2171 = vmatprep.subr.mxu0 0.0
    %2172 = vmatpush1.msra.mxu0 0.0
    %2173 = vmatprep.subr.mxu0 0.0
    %2174 = vmatpush1.msra.mxu0 0.0
    %2175 = vmatprep.subr.mxu0 0.0
    %2176 = vmatpush1.msra.mxu0 0.0
    %2177 = vmatprep.subr.mxu0 0.0
    %2178 = vmatpush1.msra.mxu0 0.0
    %2179 = vmatprep.subr.mxu0 0.0
    %2180 = vmatpush1.msra.mxu0 0.0
    %2181 = vmatprep.subr.mxu0 0.0
    %2182 = vmatpush1.msra.mxu0 0.0
    %2183 = vmatprep.subr.mxu0 0.0
    %2184 = vmatpush1.msra.mxu0 0.0
    %2185 = vmatprep.subr.mxu0 0.0
    %2186 = vmatpush1.msra.mxu0 0.0
    %2187 = vmatprep.subr.mxu0 0.0
    %2188 = vmatpush1.msra.mxu0 0.0
    %2189 = vmatprep.subr.mxu0 0.0
    %2190 = vmatpush1.msra.mxu0 0.0
    %2191 = vmatprep.subr.mxu0 0.0
    %2192 = vmatpush1.msra.mxu0 0.0
    %2193 = vmatprep.subr.mxu0 0.0
    %2194 = vmatpush1.msra.mxu0 0.0
    %2195 = vmatprep.subr.mxu0 0.0
    %2196 = vmatpush1.msra.mxu0 0.0
    %2197 = vmatprep.subr.mxu0 0.0
    %2198 = vmatpush1.msra.mxu0 0.0
    %2199 = vmatprep.subr.mxu0 0.0
    %2200 = vmatpush1.msra.mxu0 0.0
    %2201 = vmatprep.subr.mxu0 0.0
    %2202 = vmatpush1.msra.mxu0 0.0
    %2203 = vmatprep.subr.mxu0 0.0
    %2204 = vmatpush1.msra.mxu0 0.0
    %2205 = vmatprep.subr.mxu0 0.0
    %2206 = vmatpush1.msra.mxu0 0.0
    %2207 = vmatprep.subr.mxu0 0.0
    %2208 = vmatpush1.msra.mxu0 0.0
    %2209 = vmatprep.subr.mxu0 0.0
    %2210 = vmatpush1.msra.mxu0 0.0
    %2211 = vmatprep.subr.mxu0 0.0
    %2212 = vmatpush1.msra.mxu0 0.0
    %2213 = vmatprep.subr.mxu0 0.0
    %2214 = vmatpush1.msra.mxu0 0.0
    %2215 = vmatprep.subr.mxu0 0.0
    %2216 = vmatpush1.msra.mxu0 0.0
    %2217 = vmatprep.subr.mxu0 0.0
    %2218 = vmatpush1.msra.mxu0 0.0
    %2219 = vmatprep.mubr.f32.mxu0 0.0
    %2220 = vmatmul.mubr.f32.gmra.mrb[0].mxu0 %v2153
    %v2221 = vpop.f32.mrb[0].mxu0
    %v2222 = vadd.f32 0.0, %v2221
    %v2223 = vpop.f32.mrb[0].mxu0
    %2224 = vdwg.mxu0
    %2225 = vst.msk [vmem:[#allocation2] sm:$0xff] %vm238, %v2222
    %2226 = vrot.lane.b32.xlu0 %v2053, 120
    %v2227 = vpop.permute.xlu0 %2226
    %2228 = vrot.lane.b32.xlu0 %v2053, 88
    %v2229 = vpop.permute.xlu0 %2228
    %v2230 = vsel %vm238, %v2227, 0
    %v2232 = vsel %vm238, %v2229, 0
    %2234 = vmatprep.subr.mxu0 0.0
    %2235 = vmatpush1.xpose.msra.mxu0 %v2232
    %2236 = vmatprep.subr.mxu0 0.0
    %2237 = vmatpush1.xpose.msra.mxu0 0.0
    %2238 = vmatprep.subr.mxu0 0.0
    %2239 = vmatpush1.xpose.msra.mxu0 0.0
    %2240 = vmatprep.subr.mxu0 0.0
    %2241 = vmatpush1.xpose.msra.mxu0 0.0
    %2242 = vmatprep.subr.mxu0 0.0
    %2243 = vmatpush1.xpose.msra.mxu0 0.0
    %2244 = vmatprep.subr.mxu0 0.0
    %2245 = vmatpush1.xpose.msra.mxu0 0.0
    %2246 = vmatprep.subr.mxu0 0.0
    %2247 = vmatpush1.xpose.msra.mxu0 0.0
    %2248 = vmatprep.subr.mxu0 0.0
    %2249 = vmatpush1.xpose.msra.mxu0 0.0
    %2250 = vmatprep.subr.mxu0 0.0
    %2251 = vmatpush1.xpose.msra.mxu0 0.0
    %2252 = vmatprep.subr.mxu0 0.0
    %2253 = vmatpush1.xpose.msra.mxu0 0.0
    %2254 = vmatprep.subr.mxu0 0.0
    %2255 = vmatpush1.xpose.msra.mxu0 0.0
    %2256 = vmatprep.subr.mxu0 0.0
    %2257 = vmatpush1.xpose.msra.mxu0 0.0
    %2258 = vmatprep.subr.mxu0 0.0
    %2259 = vmatpush1.xpose.msra.mxu0 0.0
    %2260 = vmatprep.subr.mxu0 0.0
    %2261 = vmatpush1.xpose.msra.mxu0 0.0
    %2262 = vmatprep.subr.mxu0 0.0
    %2263 = vmatpush1.xpose.msra.mxu0 0.0
    %2264 = vmatprep.subr.mxu0 0.0
    %2265 = vmatpush1.xpose.msra.mxu0 0.0
    %2266 = vmatprep.subr.mxu0 0.0
    %2267 = vmatpush1.xpose.msra.mxu0 0.0
    %2268 = vmatprep.subr.mxu0 0.0
    %2269 = vmatpush1.xpose.msra.mxu0 0.0
    %2270 = vmatprep.subr.mxu0 0.0
    %2271 = vmatpush1.xpose.msra.mxu0 0.0
    %2272 = vmatprep.subr.mxu0 0.0
    %2273 = vmatpush1.xpose.msra.mxu0 0.0
    %2274 = vmatprep.subr.mxu0 0.0
    %2275 = vmatpush1.xpose.msra.mxu0 0.0
    %2276 = vmatprep.subr.mxu0 0.0
    %2277 = vmatpush1.xpose.msra.mxu0 0.0
    %2278 = vmatprep.subr.mxu0 0.0
    %2279 = vmatpush1.xpose.msra.mxu0 0.0
    %2280 = vmatprep.subr.mxu0 0.0
    %2281 = vmatpush1.xpose.msra.mxu0 0.0
    %2282 = vmatprep.subr.mxu0 0.0
    %2283 = vmatpush1.xpose.msra.mxu0 0.0
    %2284 = vmatprep.subr.mxu0 0.0
    %2285 = vmatpush1.xpose.msra.mxu0 0.0
    %2286 = vmatprep.subr.mxu0 0.0
    %2287 = vmatpush1.xpose.msra.mxu0 0.0
    %2288 = vmatprep.subr.mxu0 0.0
    %2289 = vmatpush1.xpose.msra.mxu0 0.0
    %2290 = vmatprep.subr.mxu0 0.0
    %2291 = vmatpush1.xpose.msra.mxu0 0.0
    %2292 = vmatprep.subr.mxu0 0.0
    %2293 = vmatpush1.xpose.msra.mxu0 0.0
    %2294 = vmatprep.subr.mxu0 0.0
    %2295 = vmatpush1.xpose.msra.mxu0 0.0
    %2296 = vmatprep.subr.mxu0 0.0
    %2297 = vmatpush1.xpose.msra.mxu0 0.0
    %2298 = vmatprep.mubr.f32.mxu0 0.0
    %2299 = vmatmul.mubr.f32.gmra.mrb[0].mxu0 %v2230
    %v2300 = vpop.f32.mrb[0].mxu0
    %v2301 = vadd.f32 0.0, %v2300
    %v2302 = vpop.f32.mrb[0].mxu0
    %2303 = vdwg.mxu0
    %v2304 = vsel %vm238, %v2301, -inf
    %2305 = vmax.xlane.f32.xlu0 %v2304
    %v2306 = vpop.xlane.xlu0 %2305
    %v2307 = vsub.f32 %v2301, %v2306
    %v2308 = vmul.f32 %v2307, 1.442695
    %v2309 = vpow.pop %v2308
    %v2310 = vsel %vm238, %v2309, 0.0
    %2311 = vadd.xlane.f32.xlu0 %v2310
    %v2312 = vpop.xlane.xlu0 %2311
    %v2313 = vrcp.pop %v2312
    %v2314 = vmul.f32 %v2309, %v2313
    %2315 = vrot.lane.b32.xlu0 %v2053, 56
    %v2316 = vpop.permute.xlu0 %2315
    %v2319 = vsel %vm238, %v2314, 0
    %2321 = vmatprep.subr.mxu0 0.0
    %2322 = vmatpush1.msra.mxu0 %v2316
    %2323 = vmatprep.subr.mxu0 0.0
    %2324 = vmatpush1.msra.mxu0 0.0
    %2325 = vmatprep.subr.mxu0 0.0
    %2326 = vmatpush1.msra.mxu0 0.0
    %2327 = vmatprep.subr.mxu0 0.0
    %2328 = vmatpush1.msra.mxu0 0.0
    %2329 = vmatprep.subr.mxu0 0.0
    %2330 = vmatpush1.msra.mxu0 0.0
    %2331 = vmatprep.subr.mxu0 0.0
    %2332 = vmatpush1.msra.mxu0 0.0
    %2333 = vmatprep.subr.mxu0 0.0
    %2334 = vmatpush1.msra.mxu0 0.0
    %2335 = vmatprep.subr.mxu0 0.0
    %2336 = vmatpush1.msra.mxu0 0.0
    %2337 = vmatprep.subr.mxu0 0.0
    %2338 = vmatpush1.msra.mxu0 0.0
    %2339 = vmatprep.subr.mxu0 0.0
    %2340 = vmatpush1.msra.mxu0 0.0
    %2341 = vmatprep.subr.mxu0 0.0
    %2342 = vmatpush1.msra.mxu0 0.0
    %2343 = vmatprep.subr.mxu0 0.0
    %2344 = vmatpush1.msra.mxu0 0.0
    %2345 = vmatprep.subr.mxu0 0.0
    %2346 = vmatpush1.msra.mxu0 0.0
    %2347 = vmatprep.subr.mxu0 0.0
    %2348 = vmatpush1.msra.mxu0 0.0
    %2349 = vmatprep.subr.mxu0 0.0
    %2350 = vmatpush1.msra.mxu0 0.0
    %2351 = vmatprep.subr.mxu0 0.0
    %2352 = vmatpush1.msra.mxu0 0.0
    %2353 = vmatprep.subr.mxu0 0.0
    %2354 = vmatpush1.msra.mxu0 0.0
    %2355 = vmatprep.subr.mxu0 0.0
    %2356 = vmatpush1.msra.mxu0 0.0
    %2357 = vmatprep.subr.mxu0 0.0
    %2358 = vmatpush1.msra.mxu0 0.0
    %2359 = vmatprep.subr.mxu0 0.0
    %2360 = vmatpush1.msra.mxu0 0.0
    %2361 = vmatprep.subr.mxu0 0.0
    %2362 = vmatpush1.msra.mxu0 0.0
    %2363 = vmatprep.subr.mxu0 0.0
    %2364 = vmatpush1.msra.mxu0 0.0
    %2365 = vmatprep.subr.mxu0 0.0
    %2366 = vmatpush1.msra.mxu0 0.0
    %2367 = vmatprep.subr.mxu0 0.0
    %2368 = vmatpush1.msra.mxu0 0.0
    %2369 = vmatprep.subr.mxu0 0.0
    %2370 = vmatpush1.msra.mxu0 0.0
    %2371 = vmatprep.subr.mxu0 0.0
    %2372 = vmatpush1.msra.mxu0 0.0
    %2373 = vmatprep.subr.mxu0 0.0
    %2374 = vmatpush1.msra.mxu0 0.0
    %2375 = vmatprep.subr.mxu0 0.0
    %2376 = vmatpush1.msra.mxu0 0.0
    %2377 = vmatprep.subr.mxu0 0.0
    %2378 = vmatpush1.msra.mxu0 0.0
    %2379 = vmatprep.subr.mxu0 0.0
    %2380 = vmatpush1.msra.mxu0 0.0
    %2381 = vmatprep.subr.mxu0 0.0
    %2382 = vmatpush1.msra.mxu0 0.0
    %2383 = vmatprep.subr.mxu0 0.0
    %2384 = vmatpush1.msra.mxu0 0.0
    %2385 = vmatprep.mubr.f32.mxu0 0.0
    %2386 = vmatmul.mubr.f32.gmra.mrb[0].mxu0 %v2319
    %v2387 = vpop.f32.mrb[0].mxu0
    %v2388 = vadd.f32 0.0, %v2387
    %v2389 = vpop.f32.mrb[0].mxu0
    %2390 = vdwg.mxu0
    %2392 = vrot.lane.b32.xlu0 %v2388, 8
    %v2393 = vpop.permute.xlu0 %2392
    %2395 = vst.msk [vmem:[#allocation2] sm:$0xff] %vm570, %v2393
    %2396 = vrot.lane.b32.xlu0 %v2053, 112
    %v2397 = vpop.permute.xlu0 %2396
    %2398 = vrot.lane.b32.xlu0 %v2053, 80
    %v2399 = vpop.permute.xlu0 %2398
    %v2400 = vsel %vm238, %v2397, 0
    %v2402 = vsel %vm238, %v2399, 0
    %2404 = vmatprep.subr.mxu0 0.0
    %2405 = vmatpush1.xpose.msra.mxu0 %v2402
    %2406 = vmatprep.subr.mxu0 0.0
    %2407 = vmatpush1.xpose.msra.mxu0 0.0
    %2408 = vmatprep.subr.mxu0 0.0
    %2409 = vmatpush1.xpose.msra.mxu0 0.0
    %2410 = vmatprep.subr.mxu0 0.0
    %2411 = vmatpush1.xpose.msra.mxu0 0.0
    %2412 = vmatprep.subr.mxu0 0.0
    %2413 = vmatpush1.xpose.msra.mxu0 0.0
    %2414 = vmatprep.subr.mxu0 0.0
    %2415 = vmatpush1.xpose.msra.mxu0 0.0
    %2416 = vmatprep.subr.mxu0 0.0
    %2417 = vmatpush1.xpose.msra.mxu0 0.0
    %2418 = vmatprep.subr.mxu0 0.0
    %2419 = vmatpush1.xpose.msra.mxu0 0.0
    %2420 = vmatprep.subr.mxu0 0.0
    %2421 = vmatpush1.xpose.msra.mxu0 0.0
    %2422 = vmatprep.subr.mxu0 0.0
    %2423 = vmatpush1.xpose.msra.mxu0 0.0
    %2424 = vmatprep.subr.mxu0 0.0
    %2425 = vmatpush1.xpose.msra.mxu0 0.0
    %2426 = vmatprep.subr.mxu0 0.0
    %2427 = vmatpush1.xpose.msra.mxu0 0.0
    %2428 = vmatprep.subr.mxu0 0.0
    %2429 = vmatpush1.xpose.msra.mxu0 0.0
    %2430 = vmatprep.subr.mxu0 0.0
    %2431 = vmatpush1.xpose.msra.mxu0 0.0
    %2432 = vmatprep.subr.mxu0 0.0
    %2433 = vmatpush1.xpose.msra.mxu0 0.0
    %2434 = vmatprep.subr.mxu0 0.0
    %2435 = vmatpush1.xpose.msra.mxu0 0.0
    %2436 = vmatprep.subr.mxu0 0.0
    %2437 = vmatpush1.xpose.msra.mxu0 0.0
    %2438 = vmatprep.subr.mxu0 0.0
    %2439 = vmatpush1.xpose.msra.mxu0 0.0
    %2440 = vmatprep.subr.mxu0 0.0
    %2441 = vmatpush1.xpose.msra.mxu0 0.0
    %2442 = vmatprep.subr.mxu0 0.0
    %2443 = vmatpush1.xpose.msra.mxu0 0.0
    %2444 = vmatprep.subr.mxu0 0.0
    %2445 = vmatpush1.xpose.msra.mxu0 0.0
    %2446 = vmatprep.subr.mxu0 0.0
    %2447 = vmatpush1.xpose.msra.mxu0 0.0
    %2448 = vmatprep.subr.mxu0 0.0
    %2449 = vmatpush1.xpose.msra.mxu0 0.0
    %2450 = vmatprep.subr.mxu0 0.0
    %2451 = vmatpush1.xpose.msra.mxu0 0.0
    %2452 = vmatprep.subr.mxu0 0.0
    %2453 = vmatpush1.xpose.msra.mxu0 0.0
    %2454 = vmatprep.subr.mxu0 0.0
    %2455 = vmatpush1.xpose.msra.mxu0 0.0
    %2456 = vmatprep.subr.mxu0 0.0
    %2457 = vmatpush1.xpose.msra.mxu0 0.0
    %2458 = vmatprep.subr.mxu0 0.0
    %2459 = vmatpush1.xpose.msra.mxu0 0.0
    %2460 = vmatprep.subr.mxu0 0.0
    %2461 = vmatpush1.xpose.msra.mxu0 0.0
    %2462 = vmatprep.subr.mxu0 0.0
    %2463 = vmatpush1.xpose.msra.mxu0 0.0
    %2464 = vmatprep.subr.mxu0 0.0
    %2465 = vmatpush1.xpose.msra.mxu0 0.0
    %2466 = vmatprep.subr.mxu0 0.0
    %2467 = vmatpush1.xpose.msra.mxu0 0.0
    %2468 = vmatprep.mubr.f32.mxu0 0.0
    %2469 = vmatmul.mubr.f32.gmra.mrb[0].mxu0 %v2400
    %v2470 = vpop.f32.mrb[0].mxu0
    %v2471 = vadd.f32 0.0, %v2470
    %v2472 = vpop.f32.mrb[0].mxu0
    %2473 = vdwg.mxu0
    %v2474 = vsel %vm238, %v2471, -inf
    %2475 = vmax.xlane.f32.xlu0 %v2474
    %v2476 = vpop.xlane.xlu0 %2475
    %v2477 = vsub.f32 %v2471, %v2476
    %v2478 = vmul.f32 %v2477, 1.442695
    %v2479 = vpow.pop %v2478
    %v2480 = vsel %vm238, %v2479, 0.0
    %2481 = vadd.xlane.f32.xlu0 %v2480
    %v2482 = vpop.xlane.xlu0 %2481
    %v2483 = vrcp.pop %v2482
    %v2484 = vmul.f32 %v2479, %v2483
    %2485 = vrot.lane.b32.xlu0 %v2053, 48
    %v2486 = vpop.permute.xlu0 %2485
    %v2489 = vsel %vm238, %v2484, 0
    %2491 = vmatprep.subr.mxu0 0.0
    %2492 = vmatpush1.msra.mxu0 %v2486
    %2493 = vmatprep.subr.mxu0 0.0
    %2494 = vmatpush1.msra.mxu0 0.0
    %2495 = vmatprep.subr.mxu0 0.0
    %2496 = vmatpush1.msra.mxu0 0.0
    %2497 = vmatprep.subr.mxu0 0.0
    %2498 = vmatpush1.msra.mxu0 0.0
    %2499 = vmatprep.subr.mxu0 0.0
    %2500 = vmatpush1.msra.mxu0 0.0
    %2501 = vmatprep.subr.mxu0 0.0
    %2502 = vmatpush1.msra.mxu0 0.0
    %2503 = vmatprep.subr.mxu0 0.0
    %2504 = vmatpush1.msra.mxu0 0.0
    %2505 = vmatprep.subr.mxu0 0.0
    %2506 = vmatpush1.msra.mxu0 0.0
    %2507 = vmatprep.subr.mxu0 0.0
    %2508 = vmatpush1.msra.mxu0 0.0
    %2509 = vmatprep.subr.mxu0 0.0
    %2510 = vmatpush1.msra.mxu0 0.0
    %2511 = vmatprep.subr.mxu0 0.0
    %2512 = vmatpush1.msra.mxu0 0.0
    %2513 = vmatprep.subr.mxu0 0.0
    %2514 = vmatpush1.msra.mxu0 0.0
    %2515 = vmatprep.subr.mxu0 0.0
    %2516 = vmatpush1.msra.mxu0 0.0
    %2517 = vmatprep.subr.mxu0 0.0
    %2518 = vmatpush1.msra.mxu0 0.0
    %2519 = vmatprep.subr.mxu0 0.0
    %2520 = vmatpush1.msra.mxu0 0.0
    %2521 = vmatprep.subr.mxu0 0.0
    %2522 = vmatpush1.msra.mxu0 0.0
    %2523 = vmatprep.subr.mxu0 0.0
    %2524 = vmatpush1.msra.mxu0 0.0
    %2525 = vmatprep.subr.mxu0 0.0
    %2526 = vmatpush1.msra.mxu0 0.0
    %2527 = vmatprep.subr.mxu0 0.0
    %2528 = vmatpush1.msra.mxu0 0.0
    %2529 = vmatprep.subr.mxu0 0.0
    %2530 = vmatpush1.msra.mxu0 0.0
    %2531 = vmatprep.subr.mxu0 0.0
    %2532 = vmatpush1.msra.mxu0 0.0
    %2533 = vmatprep.subr.mxu0 0.0
    %2534 = vmatpush1.msra.mxu0 0.0
    %2535 = vmatprep.subr.mxu0 0.0
    %2536 = vmatpush1.msra.mxu0 0.0
    %2537 = vmatprep.subr.mxu0 0.0
    %2538 = vmatpush1.msra.mxu0 0.0
    %2539 = vmatprep.subr.mxu0 0.0
    %2540 = vmatpush1.msra.mxu0 0.0
    %2541 = vmatprep.subr.mxu0 0.0
    %2542 = vmatpush1.msra.mxu0 0.0
    %2543 = vmatprep.subr.mxu0 0.0
    %2544 = vmatpush1.msra.mxu0 0.0
    %2545 = vmatprep.subr.mxu0 0.0
    %2546 = vmatpush1.msra.mxu0 0.0
    %2547 = vmatprep.subr.mxu0 0.0
    %2548 = vmatpush1.msra.mxu0 0.0
    %2549 = vmatprep.subr.mxu0 0.0
    %2550 = vmatpush1.msra.mxu0 0.0
    %2551 = vmatprep.subr.mxu0 0.0
    %2552 = vmatpush1.msra.mxu0 0.0
    %2553 = vmatprep.subr.mxu0 0.0
    %2554 = vmatpush1.msra.mxu0 0.0
    %2555 = vmatprep.mubr.f32.mxu0 0.0
    %2556 = vmatmul.mubr.f32.gmra.mrb[0].mxu0 %v2489
    %v2557 = vpop.f32.mrb[0].mxu0
    %v2558 = vadd.f32 0.0, %v2557
    %v2559 = vpop.f32.mrb[0].mxu0
    %2560 = vdwg.mxu0
    %2562 = vrot.lane.b32.xlu0 %v2558, 16
    %v2563 = vpop.permute.xlu0 %2562
    %2565 = vst.msk [vmem:[#allocation2] sm:$0xff] %vm741, %v2563
    %2566 = vrot.lane.b32.xlu0 %v2053, 104
    %v2567 = vpop.permute.xlu0 %2566
    %2568 = vrot.lane.b32.xlu0 %v2053, 72
    %v2569 = vpop.permute.xlu0 %2568
    %v2570 = vsel %vm238, %v2567, 0
    %v2572 = vsel %vm238, %v2569, 0
    %2574 = vmatprep.subr.mxu0 0.0
    %2575 = vmatpush1.xpose.msra.mxu0 %v2572
    %2576 = vmatprep.subr.mxu0 0.0
    %2577 = vmatpush1.xpose.msra.mxu0 0.0
    %2578 = vmatprep.subr.mxu0 0.0
    %2579 = vmatpush1.xpose.msra.mxu0 0.0
    %2580 = vmatprep.subr.mxu0 0.0
    %2581 = vmatpush1.xpose.msra.mxu0 0.0
    %2582 = vmatprep.subr.mxu0 0.0
    %2583 = vmatpush1.xpose.msra.mxu0 0.0
    %2584 = vmatprep.subr.mxu0 0.0
    %2585 = vmatpush1.xpose.msra.mxu0 0.0
    %2586 = vmatprep.subr.mxu0 0.0
    %2587 = vmatpush1.xpose.msra.mxu0 0.0
    %2588 = vmatprep.subr.mxu0 0.0
    %2589 = vmatpush1.xpose.msra.mxu0 0.0
    %2590 = vmatprep.subr.mxu0 0.0
    %2591 = vmatpush1.xpose.msra.mxu0 0.0
    %2592 = vmatprep.subr.mxu0 0.0
    %2593 = vmatpush1.xpose.msra.mxu0 0.0
    %2594 = vmatprep.subr.mxu0 0.0
    %2595 = vmatpush1.xpose.msra.mxu0 0.0
    %2596 = vmatprep.subr.mxu0 0.0
    %2597 = vmatpush1.xpose.msra.mxu0 0.0
    %2598 = vmatprep.subr.mxu0 0.0
    %2599 = vmatpush1.xpose.msra.mxu0 0.0
    %2600 = vmatprep.subr.mxu0 0.0
    %2601 = vmatpush1.xpose.msra.mxu0 0.0
    %2602 = vmatprep.subr.mxu0 0.0
    %2603 = vmatpush1.xpose.msra.mxu0 0.0
    %2604 = vmatprep.subr.mxu0 0.0
    %2605 = vmatpush1.xpose.msra.mxu0 0.0
    %2606 = vmatprep.subr.mxu0 0.0
    %2607 = vmatpush1.xpose.msra.mxu0 0.0
    %2608 = vmatprep.subr.mxu0 0.0
    %2609 = vmatpush1.xpose.msra.mxu0 0.0
    %2610 = vmatprep.subr.mxu0 0.0
    %2611 = vmatpush1.xpose.msra.mxu0 0.0
    %2612 = vmatprep.subr.mxu0 0.0
    %2613 = vmatpush1.xpose.msra.mxu0 0.0
    %2614 = vmatprep.subr.mxu0 0.0
    %2615 = vmatpush1.xpose.msra.mxu0 0.0
    %2616 = vmatprep.subr.mxu0 0.0
    %2617 = vmatpush1.xpose.msra.mxu0 0.0
    %2618 = vmatprep.subr.mxu0 0.0
    %2619 = vmatpush1.xpose.msra.mxu0 0.0
    %2620 = vmatprep.subr.mxu0 0.0
    %2621 = vmatpush1.xpose.msra.mxu0 0.0
    %2622 = vmatprep.subr.mxu0 0.0
    %2623 = vmatpush1.xpose.msra.mxu0 0.0
    %2624 = vmatprep.subr.mxu0 0.0
    %2625 = vmatpush1.xpose.msra.mxu0 0.0
    %2626 = vmatprep.subr.mxu0 0.0
    %2627 = vmatpush1.xpose.msra.mxu0 0.0
    %2628 = vmatprep.subr.mxu0 0.0
    %2629 = vmatpush1.xpose.msra.mxu0 0.0
    %2630 = vmatprep.subr.mxu0 0.0
    %2631 = vmatpush1.xpose.msra.mxu0 0.0
    %2632 = vmatprep.subr.mxu0 0.0
    %2633 = vmatpush1.xpose.msra.mxu0 0.0
    %2634 = vmatprep.subr.mxu0 0.0
    %2635 = vmatpush1.xpose.msra.mxu0 0.0
    %2636 = vmatprep.subr.mxu0 0.0
    %2637 = vmatpush1.xpose.msra.mxu0 0.0
    %2638 = vmatprep.mubr.f32.mxu0 0.0
    %2639 = vmatmul.mubr.f32.gmra.mrb[0].mxu0 %v2570
    %v2640 = vpop.f32.mrb[0].mxu0
    %v2641 = vadd.f32 0.0, %v2640
    %v2642 = vpop.f32.mrb[0].mxu0
    %2643 = vdwg.mxu0
    %v2644 = vsel %vm238, %v2641, -inf
    %2645 = vmax.xlane.f32.xlu0 %v2644
    %v2646 = vpop.xlane.xlu0 %2645
    %v2647 = vsub.f32 %v2641, %v2646
    %v2648 = vmul.f32 %v2647, 1.442695
    %v2649 = vpow.pop %v2648
    %v2650 = vsel %vm238, %v2649, 0.0
    %2651 = vadd.xlane.f32.xlu0 %v2650
    %v2652 = vpop.xlane.xlu0 %2651
    %v2653 = vrcp.pop %v2652
    %v2654 = vmul.f32 %v2649, %v2653
    %2655 = vrot.lane.b32.xlu0 %v2053, 40
    %v2656 = vpop.permute.xlu0 %2655
    %v2659 = vsel %vm238, %v2654, 0
    %2661 = vmatprep.subr.mxu0 0.0
    %2662 = vmatpush1.msra.mxu0 %v2656
    %2663 = vmatprep.subr.mxu0 0.0
    %2664 = vmatpush1.msra.mxu0 0.0
    %2665 = vmatprep.subr.mxu0 0.0
    %2666 = vmatpush1.msra.mxu0 0.0
    %2667 = vmatprep.subr.mxu0 0.0
    %2668 = vmatpush1.msra.mxu0 0.0
    %2669 = vmatprep.subr.mxu0 0.0
    %2670 = vmatpush1.msra.mxu0 0.0
    %2671 = vmatprep.subr.mxu0 0.0
    %2672 = vmatpush1.msra.mxu0 0.0
    %2673 = vmatprep.subr.mxu0 0.0
    %2674 = vmatpush1.msra.mxu0 0.0
    %2675 = vmatprep.subr.mxu0 0.0
    %2676 = vmatpush1.msra.mxu0 0.0
    %2677 = vmatprep.subr.mxu0 0.0
    %2678 = vmatpush1.msra.mxu0 0.0
    %2679 = vmatprep.subr.mxu0 0.0
    %2680 = vmatpush1.msra.mxu0 0.0
    %2681 = vmatprep.subr.mxu0 0.0
    %2682 = vmatpush1.msra.mxu0 0.0
    %2683 = vmatprep.subr.mxu0 0.0
    %2684 = vmatpush1.msra.mxu0 0.0
    %2685 = vmatprep.subr.mxu0 0.0
    %2686 = vmatpush1.msra.mxu0 0.0
    %2687 = vmatprep.subr.mxu0 0.0
    %2688 = vmatpush1.msra.mxu0 0.0
    %2689 = vmatprep.subr.mxu0 0.0
    %2690 = vmatpush1.msra.mxu0 0.0
    %2691 = vmatprep.subr.mxu0 0.0
    %2692 = vmatpush1.msra.mxu0 0.0
    %2693 = vmatprep.subr.mxu0 0.0
    %2694 = vmatpush1.msra.mxu0 0.0
    %2695 = vmatprep.subr.mxu0 0.0
    %2696 = vmatpush1.msra.mxu0 0.0
    %2697 = vmatprep.subr.mxu0 0.0
    %2698 = vmatpush1.msra.mxu0 0.0
    %2699 = vmatprep.subr.mxu0 0.0
    %2700 = vmatpush1.msra.mxu0 0.0
    %2701 = vmatprep.subr.mxu0 0.0
    %2702 = vmatpush1.msra.mxu0 0.0
    %2703 = vmatprep.subr.mxu0 0.0
    %2704 = vmatpush1.msra.mxu0 0.0
    %2705 = vmatprep.subr.mxu0 0.0
    %2706 = vmatpush1.msra.mxu0 0.0
    %2707 = vmatprep.subr.mxu0 0.0
    %2708 = vmatpush1.msra.mxu0 0.0
    %2709 = vmatprep.subr.mxu0 0.0
    %2710 = vmatpush1.msra.mxu0 0.0
    %2711 = vmatprep.subr.mxu0 0.0
    %2712 = vmatpush1.msra.mxu0 0.0
    %2713 = vmatprep.subr.mxu0 0.0
    %2714 = vmatpush1.msra.mxu0 0.0
    %2715 = vmatprep.subr.mxu0 0.0
    %2716 = vmatpush1.msra.mxu0 0.0
    %2717 = vmatprep.subr.mxu0 0.0
    %2718 = vmatpush1.msra.mxu0 0.0
    %2719 = vmatprep.subr.mxu0 0.0
    %2720 = vmatpush1.msra.mxu0 0.0
    %2721 = vmatprep.subr.mxu0 0.0
    %2722 = vmatpush1.msra.mxu0 0.0
    %2723 = vmatprep.subr.mxu0 0.0
    %2724 = vmatpush1.msra.mxu0 0.0
    %2725 = vmatprep.mubr.f32.mxu0 0.0
    %2726 = vmatmul.mubr.f32.gmra.mrb[0].mxu0 %v2659
    %v2727 = vpop.f32.mrb[0].mxu0
    %v2728 = vadd.f32 0.0, %v2727
    %v2729 = vpop.f32.mrb[0].mxu0
    %2730 = vdwg.mxu0
    %2732 = vrot.lane.b32.xlu0 %v2728, 24
    %v2733 = vpop.permute.xlu0 %2732
    %2735 = vst.msk [vmem:[#allocation2] sm:$0xff] %vm912, %v2733
    %2737 = vrot.lane.b32.xlu0 %v2058, 96
    %v2738 = vpop.permute.xlu0 %2737
    %v2739 = vsel %vm238, %v2058, 0
    %v2741 = vsel %vm238, %v2738, 0
    %2743 = vmatprep.subr.mxu0 0.0
    %2744 = vmatpush1.xpose.msra.mxu0 %v2741
    %2745 = vmatprep.subr.mxu0 0.0
    %2746 = vmatpush1.xpose.msra.mxu0 0.0
    %2747 = vmatprep.subr.mxu0 0.0
    %2748 = vmatpush1.xpose.msra.mxu0 0.0
    %2749 = vmatprep.subr.mxu0 0.0
    %2750 = vmatpush1.xpose.msra.mxu0 0.0
    %2751 = vmatprep.subr.mxu0 0.0
    %2752 = vmatpush1.xpose.msra.mxu0 0.0
    %2753 = vmatprep.subr.mxu0 0.0
    %2754 = vmatpush1.xpose.msra.mxu0 0.0
    %2755 = vmatprep.subr.mxu0 0.0
    %2756 = vmatpush1.xpose.msra.mxu0 0.0
    %2757 = vmatprep.subr.mxu0 0.0
    %2758 = vmatpush1.xpose.msra.mxu0 0.0
    %2759 = vmatprep.subr.mxu0 0.0
    %2760 = vmatpush1.xpose.msra.mxu0 0.0
    %2761 = vmatprep.subr.mxu0 0.0
    %2762 = vmatpush1.xpose.msra.mxu0 0.0
    %2763 = vmatprep.subr.mxu0 0.0
    %2764 = vmatpush1.xpose.msra.mxu0 0.0
    %2765 = vmatprep.subr.mxu0 0.0
    %2766 = vmatpush1.xpose.msra.mxu0 0.0
    %2767 = vmatprep.subr.mxu0 0.0
    %2768 = vmatpush1.xpose.msra.mxu0 0.0
    %2769 = vmatprep.subr.mxu0 0.0
    %2770 = vmatpush1.xpose.msra.mxu0 0.0
    %2771 = vmatprep.subr.mxu0 0.0
    %2772 = vmatpush1.xpose.msra.mxu0 0.0
    %2773 = vmatprep.subr.mxu0 0.0
    %2774 = vmatpush1.xpose.msra.mxu0 0.0
    %2775 = vmatprep.subr.mxu0 0.0
    %2776 = vmatpush1.xpose.msra.mxu0 0.0
    %2777 = vmatprep.subr.mxu0 0.0
    %2778 = vmatpush1.xpose.msra.mxu0 0.0
    %2779 = vmatprep.subr.mxu0 0.0
    %2780 = vmatpush1.xpose.msra.mxu0 0.0
    %2781 = vmatprep.subr.mxu0 0.0
    %2782 = vmatpush1.xpose.msra.mxu0 0.0
    %2783 = vmatprep.subr.mxu0 0.0
    %2784 = vmatpush1.xpose.msra.mxu0 0.0
    %2785 = vmatprep.subr.mxu0 0.0
    %2786 = vmatpush1.xpose.msra.mxu0 0.0
    %2787 = vmatprep.subr.mxu0 0.0
    %2788 = vmatpush1.xpose.msra.mxu0 0.0
    %2789 = vmatprep.subr.mxu0 0.0
    %2790 = vmatpush1.xpose.msra.mxu0 0.0
    %2791 = vmatprep.subr.mxu0 0.0
    %2792 = vmatpush1.xpose.msra.mxu0 0.0
    %2793 = vmatprep.subr.mxu0 0.0
    %2794 = vmatpush1.xpose.msra.mxu0 0.0
    %2795 = vmatprep.subr.mxu0 0.0
    %2796 = vmatpush1.xpose.msra.mxu0 0.0
    %2797 = vmatprep.subr.mxu0 0.0
    %2798 = vmatpush1.xpose.msra.mxu0 0.0
    %2799 = vmatprep.subr.mxu0 0.0
    %2800 = vmatpush1.xpose.msra.mxu0 0.0
    %2801 = vmatprep.subr.mxu0 0.0
    %2802 = vmatpush1.xpose.msra.mxu0 0.0
    %2803 = vmatprep.subr.mxu0 0.0
    %2804 = vmatpush1.xpose.msra.mxu0 0.0
    %2805 = vmatprep.subr.mxu0 0.0
    %2806 = vmatpush1.xpose.msra.mxu0 0.0
    %2807 = vmatprep.mubr.f32.mxu0 0.0
    %2808 = vmatmul.mubr.f32.gmra.mrb[0].mxu0 %v2739
    %v2809 = vpop.f32.mrb[0].mxu0
    %v2810 = vadd.f32 0.0, %v2809
    %v2811 = vpop.f32.mrb[0].mxu0
    %2812 = vdwg.mxu0
    %v2813 = vsel %vm238, %v2810, -inf
    %2814 = vmax.xlane.f32.xlu0 %v2813
    %v2815 = vpop.xlane.xlu0 %2814
    %v2816 = vsub.f32 %v2810, %v2815
    %v2817 = vmul.f32 %v2816, 1.442695
    %v2818 = vpow.pop %v2817
    %v2819 = vsel %vm238, %v2818, 0.0
    %2820 = vadd.xlane.f32.xlu0 %v2819
    %v2821 = vpop.xlane.xlu0 %2820
    %v2822 = vrcp.pop %v2821
    %v2823 = vmul.f32 %v2818, %v2822
    %2824 = vrot.lane.b32.xlu0 %v2058, 64
    %v2825 = vpop.permute.xlu0 %2824
    %v2828 = vsel %vm238, %v2823, 0
    %2830 = vmatprep.subr.mxu0 0.0
    %2831 = vmatpush1.msra.mxu0 %v2825
    %2832 = vmatprep.subr.mxu0 0.0
    %2833 = vmatpush1.msra.mxu0 0.0
    %2834 = vmatprep.subr.mxu0 0.0
    %2835 = vmatpush1.msra.mxu0 0.0
    %2836 = vmatprep.subr.mxu0 0.0
    %2837 = vmatpush1.msra.mxu0 0.0
    %2838 = vmatprep.subr.mxu0 0.0
    %2839 = vmatpush1.msra.mxu0 0.0
    %2840 = vmatprep.subr.mxu0 0.0
    %2841 = vmatpush1.msra.mxu0 0.0
    %2842 = vmatprep.subr.mxu0 0.0
    %2843 = vmatpush1.msra.mxu0 0.0
    %2844 = vmatprep.subr.mxu0 0.0
    %2845 = vmatpush1.msra.mxu0 0.0
    %2846 = vmatprep.subr.mxu0 0.0
    %2847 = vmatpush1.msra.mxu0 0.0
    %2848 = vmatprep.subr.mxu0 0.0
    %2849 = vmatpush1.msra.mxu0 0.0
    %2850 = vmatprep.subr.mxu0 0.0
    %2851 = vmatpush1.msra.mxu0 0.0
    %2852 = vmatprep.subr.mxu0 0.0
    %2853 = vmatpush1.msra.mxu0 0.0
    %2854 = vmatprep.subr.mxu0 0.0
    %2855 = vmatpush1.msra.mxu0 0.0
    %2856 = vmatprep.subr.mxu0 0.0
    %2857 = vmatpush1.msra.mxu0 0.0
    %2858 = vmatprep.subr.mxu0 0.0
    %2859 = vmatpush1.msra.mxu0 0.0
    %2860 = vmatprep.subr.mxu0 0.0
    %2861 = vmatpush1.msra.mxu0 0.0
    %2862 = vmatprep.subr.mxu0 0.0
    %2863 = vmatpush1.msra.mxu0 0.0
    %2864 = vmatprep.subr.mxu0 0.0
    %2865 = vmatpush1.msra.mxu0 0.0
    %2866 = vmatprep.subr.mxu0 0.0
    %2867 = vmatpush1.msra.mxu0 0.0
    %2868 = vmatprep.subr.mxu0 0.0
    %2869 = vmatpush1.msra.mxu0 0.0
    %2870 = vmatprep.subr.mxu0 0.0
    %2871 = vmatpush1.msra.mxu0 0.0
    %2872 = vmatprep.subr.mxu0 0.0
    %2873 = vmatpush1.msra.mxu0 0.0
    %2874 = vmatprep.subr.mxu0 0.0
    %2875 = vmatpush1.msra.mxu0 0.0
    %2876 = vmatprep.subr.mxu0 0.0
    %2877 = vmatpush1.msra.mxu0 0.0
    %2878 = vmatprep.subr.mxu0 0.0
    %2879 = vmatpush1.msra.mxu0 0.0
    %2880 = vmatprep.subr.mxu0 0.0
    %2881 = vmatpush1.msra.mxu0 0.0
    %2882 = vmatprep.subr.mxu0 0.0
    %2883 = vmatpush1.msra.mxu0 0.0
    %2884 = vmatprep.subr.mxu0 0.0
    %2885 = vmatpush1.msra.mxu0 0.0
    %2886 = vmatprep.subr.mxu0 0.0
    %2887 = vmatpush1.msra.mxu0 0.0
    %2888 = vmatprep.subr.mxu0 0.0
    %2889 = vmatpush1.msra.mxu0 0.0
    %2890 = vmatprep.subr.mxu0 0.0
    %2891 = vmatpush1.msra.mxu0 0.0
    %2892 = vmatprep.subr.mxu0 0.0
    %2893 = vmatpush1.msra.mxu0 0.0
    %2894 = vmatprep.mubr.f32.mxu0 0.0
    %2895 = vmatmul.mubr.f32.gmra.mrb[0].mxu0 %v2828
    %v2896 = vpop.f32.mrb[0].mxu0
    %v2897 = vadd.f32 0.0, %v2896
    %v2898 = vpop.f32.mrb[0].mxu0
    %2899 = vdwg.mxu0
    %2900 = vst.msk [vmem:[#allocation2 + $0x8] sm:$0xff] %vm238, %v2897
    %2901 = vrot.lane.b32.xlu0 %v2058, 120
    %v2902 = vpop.permute.xlu0 %2901
    %2903 = vrot.lane.b32.xlu0 %v2058, 88
    %v2904 = vpop.permute.xlu0 %2903
    %v2905 = vsel %vm238, %v2902, 0
    %v2907 = vsel %vm238, %v2904, 0
    %2909 = vmatprep.subr.mxu0 0.0
    %2910 = vmatpush1.xpose.msra.mxu0 %v2907
    %2911 = vmatprep.subr.mxu0 0.0
    %2912 = vmatpush1.xpose.msra.mxu0 0.0
    %2913 = vmatprep.subr.mxu0 0.0
    %2914 = vmatpush1.xpose.msra.mxu0 0.0
    %2915 = vmatprep.subr.mxu0 0.0
    %2916 = vmatpush1.xpose.msra.mxu0 0.0
    %2917 = vmatprep.subr.mxu0 0.0
    %2918 = vmatpush1.xpose.msra.mxu0 0.0
    %2919 = vmatprep.subr.mxu0 0.0
    %2920 = vmatpush1.xpose.msra.mxu0 0.0
    %2921 = vmatprep.subr.mxu0 0.0
    %2922 = vmatpush1.xpose.msra.mxu0 0.0
    %2923 = vmatprep.subr.mxu0 0.0
    %2924 = vmatpush1.xpose.msra.mxu0 0.0
    %2925 = vmatprep.subr.mxu0 0.0
    %2926 = vmatpush1.xpose.msra.mxu0 0.0
    %2927 = vmatprep.subr.mxu0 0.0
    %2928 = vmatpush1.xpose.msra.mxu0 0.0
    %2929 = vmatprep.subr.mxu0 0.0
    %2930 = vmatpush1.xpose.msra.mxu0 0.0
    %2931 = vmatprep.subr.mxu0 0.0
    %2932 = vmatpush1.xpose.msra.mxu0 0.0
    %2933 = vmatprep.subr.mxu0 0.0
    %2934 = vmatpush1.xpose.msra.mxu0 0.0
    %2935 = vmatprep.subr.mxu0 0.0
    %2936 = vmatpush1.xpose.msra.mxu0 0.0
    %2937 = vmatprep.subr.mxu0 0.0
    %2938 = vmatpush1.xpose.msra.mxu0 0.0
    %2939 = vmatprep.subr.mxu0 0.0
    %2940 = vmatpush1.xpose.msra.mxu0 0.0
    %2941 = vmatprep.subr.mxu0 0.0
    %2942 = vmatpush1.xpose.msra.mxu0 0.0
    %2943 = vmatprep.subr.mxu0 0.0
    %2944 = vmatpush1.xpose.msra.mxu0 0.0
    %2945 = vmatprep.subr.mxu0 0.0
    %2946 = vmatpush1.xpose.msra.mxu0 0.0
    %2947 = vmatprep.subr.mxu0 0.0
    %2948 = vmatpush1.xpose.msra.mxu0 0.0
    %2949 = vmatprep.subr.mxu0 0.0
    %2950 = vmatpush1.xpose.msra.mxu0 0.0
    %2951 = vmatprep.subr.mxu0 0.0
    %2952 = vmatpush1.xpose.msra.mxu0 0.0
    %2953 = vmatprep.subr.mxu0 0.0
    %2954 = vmatpush1.xpose.msra.mxu0 0.0
    %2955 = vmatprep.subr.mxu0 0.0
    %2956 = vmatpush1.xpose.msra.mxu0 0.0
    %2957 = vmatprep.subr.mxu0 0.0
    %2958 = vmatpush1.xpose.msra.mxu0 0.0
    %2959 = vmatprep.subr.mxu0 0.0
    %2960 = vmatpush1.xpose.msra.mxu0 0.0
    %2961 = vmatprep.subr.mxu0 0.0
    %2962 = vmatpush1.xpose.msra.mxu0 0.0
    %2963 = vmatprep.subr.mxu0 0.0
    %2964 = vmatpush1.xpose.msra.mxu0 0.0
    %2965 = vmatprep.subr.mxu0 0.0
    %2966 = vmatpush1.xpose.msra.mxu0 0.0
    %2967 = vmatprep.subr.mxu0 0.0
    %2968 = vmatpush1.xpose.msra.mxu0 0.0
    %2969 = vmatprep.subr.mxu0 0.0
    %2970 = vmatpush1.xpose.msra.mxu0 0.0
    %2971 = vmatprep.subr.mxu0 0.0
    %2972 = vmatpush1.xpose.msra.mxu0 0.0
    %2973 = vmatprep.mubr.f32.mxu0 0.0
    %2974 = vmatmul.mubr.f32.gmra.mrb[0].mxu0 %v2905
    %v2975 = vpop.f32.mrb[0].mxu0
    %v2976 = vadd.f32 0.0, %v2975
    %v2977 = vpop.f32.mrb[0].mxu0
    %2978 = vdwg.mxu0
    %v2979 = vsel %vm238, %v2976, -inf
    %2980 = vmax.xlane.f32.xlu0 %v2979
    %v2981 = vpop.xlane.xlu0 %2980
    %v2982 = vsub.f32 %v2976, %v2981
    %v2983 = vmul.f32 %v2982, 1.442695
    %v2984 = vpow.pop %v2983
    %v2985 = vsel %vm238, %v2984, 0.0
    %2986 = vadd.xlane.f32.xlu0 %v2985
    %v2987 = vpop.xlane.xlu0 %2986
    %v2988 = vrcp.pop %v2987
    %v2989 = vmul.f32 %v2984, %v2988
    %2990 = vrot.lane.b32.xlu0 %v2058, 56
    %v2991 = vpop.permute.xlu0 %2990
    %v2994 = vsel %vm238, %v2989, 0
    %2996 = vmatprep.subr.mxu0 0.0
    %2997 = vmatpush1.msra.mxu0 %v2991
    %2998 = vmatprep.subr.mxu0 0.0
    %2999 = vmatpush1.msra.mxu0 0.0
    %3000 = vmatprep.subr.mxu0 0.0
    %3001 = vmatpush1.msra.mxu0 0.0
    %3002 = vmatprep.subr.mxu0 0.0
    %3003 = vmatpush1.msra.mxu0 0.0
    %3004 = vmatprep.subr.mxu0 0.0
    %3005 = vmatpush1.msra.mxu0 0.0
    %3006 = vmatprep.subr.mxu0 0.0
    %3007 = vmatpush1.msra.mxu0 0.0
    %3008 = vmatprep.subr.mxu0 0.0
    %3009 = vmatpush1.msra.mxu0 0.0
    %3010 = vmatprep.subr.mxu0 0.0
    %3011 = vmatpush1.msra.mxu0 0.0
    %3012 = vmatprep.subr.mxu0 0.0
    %3013 = vmatpush1.msra.mxu0 0.0
    %3014 = vmatprep.subr.mxu0 0.0
    %3015 = vmatpush1.msra.mxu0 0.0
    %3016 = vmatprep.subr.mxu0 0.0
    %3017 = vmatpush1.msra.mxu0 0.0
    %3018 = vmatprep.subr.mxu0 0.0
    %3019 = vmatpush1.msra.mxu0 0.0
    %3020 = vmatprep.subr.mxu0 0.0
    %3021 = vmatpush1.msra.mxu0 0.0
    %3022 = vmatprep.subr.mxu0 0.0
    %3023 = vmatpush1.msra.mxu0 0.0
    %3024 = vmatprep.subr.mxu0 0.0
    %3025 = vmatpush1.msra.mxu0 0.0
    %3026 = vmatprep.subr.mxu0 0.0
    %3027 = vmatpush1.msra.mxu0 0.0
    %3028 = vmatprep.subr.mxu0 0.0
    %3029 = vmatpush1.msra.mxu0 0.0
    %3030 = vmatprep.subr.mxu0 0.0
    %3031 = vmatpush1.msra.mxu0 0.0
    %3032 = vmatprep.subr.mxu0 0.0
    %3033 = vmatpush1.msra.mxu0 0.0
    %3034 = vmatprep.subr.mxu0 0.0
    %3035 = vmatpush1.msra.mxu0 0.0
    %3036 = vmatprep.subr.mxu0 0.0
    %3037 = vmatpush1.msra.mxu0 0.0
    %3038 = vmatprep.subr.mxu0 0.0
    %3039 = vmatpush1.msra.mxu0 0.0
    %3040 = vmatprep.subr.mxu0 0.0
    %3041 = vmatpush1.msra.mxu0 0.0
    %3042 = vmatprep.subr.mxu0 0.0
    %3043 = vmatpush1.msra.mxu0 0.0
    %3044 = vmatprep.subr.mxu0 0.0
    %3045 = vmatpush1.msra.mxu0 0.0
    %3046 = vmatprep.subr.mxu0 0.0
    %3047 = vmatpush1.msra.mxu0 0.0
    %3048 = vmatprep.subr.mxu0 0.0
    %3049 = vmatpush1.msra.mxu0 0.0
    %3050 = vmatprep.subr.mxu0 0.0
    %3051 = vmatpush1.msra.mxu0 0.0
    %3052 = vmatprep.subr.mxu0 0.0
    %3053 = vmatpush1.msra.mxu0 0.0
    %3054 = vmatprep.subr.mxu0 0.0
    %3055 = vmatpush1.msra.mxu0 0.0
    %3056 = vmatprep.subr.mxu0 0.0
    %3057 = vmatpush1.msra.mxu0 0.0
    %3058 = vmatprep.subr.mxu0 0.0
    %3059 = vmatpush1.msra.mxu0 0.0
    %3060 = vmatprep.mubr.f32.mxu0 0.0
    %3061 = vmatmul.mubr.f32.gmra.mrb[0].mxu0 %v2994
    %v3062 = vpop.f32.mrb[0].mxu0
    %v3063 = vadd.f32 0.0, %v3062
    %v3064 = vpop.f32.mrb[0].mxu0
    %3065 = vdwg.mxu0
    %3067 = vrot.lane.b32.xlu0 %v3063, 8
    %v3068 = vpop.permute.xlu0 %3067
    %3070 = vst.msk [vmem:[#allocation2 + $0x8] sm:$0xff] %vm570, %v3068
    %3071 = vrot.lane.b32.xlu0 %v2058, 112
    %v3072 = vpop.permute.xlu0 %3071
    %3073 = vrot.lane.b32.xlu0 %v2058, 80
    %v3074 = vpop.permute.xlu0 %3073
    %v3075 = vsel %vm238, %v3072, 0
    %v3077 = vsel %vm238, %v3074, 0
    %3079 = vmatprep.subr.mxu0 0.0
    %3080 = vmatpush1.xpose.msra.mxu0 %v3077
    %3081 = vmatprep.subr.mxu0 0.0
    %3082 = vmatpush1.xpose.msra.mxu0 0.0
    %3083 = vmatprep.subr.mxu0 0.0
    %3084 = vmatpush1.xpose.msra.mxu0 0.0
    %3085 = vmatprep.subr.mxu0 0.0
    %3086 = vmatpush1.xpose.msra.mxu0 0.0
    %3087 = vmatprep.subr.mxu0 0.0
    %3088 = vmatpush1.xpose.msra.mxu0 0.0
    %3089 = vmatprep.subr.mxu0 0.0
    %3090 = vmatpush1.xpose.msra.mxu0 0.0
    %3091 = vmatprep.subr.mxu0 0.0
    %3092 = vmatpush1.xpose.msra.mxu0 0.0
    %3093 = vmatprep.subr.mxu0 0.0
    %3094 = vmatpush1.xpose.msra.mxu0 0.0
    %3095 = vmatprep.subr.mxu0 0.0
    %3096 = vmatpush1.xpose.msra.mxu0 0.0
    %3097 = vmatprep.subr.mxu0 0.0
    %3098 = vmatpush1.xpose.msra.mxu0 0.0
    %3099 = vmatprep.subr.mxu0 0.0
    %3100 = vmatpush1.xpose.msra.mxu0 0.0
    %3101 = vmatprep.subr.mxu0 0.0
    %3102 = vmatpush1.xpose.msra.mxu0 0.0
    %3103 = vmatprep.subr.mxu0 0.0
    %3104 = vmatpush1.xpose.msra.mxu0 0.0
    %3105 = vmatprep.subr.mxu0 0.0
    %3106 = vmatpush1.xpose.msra.mxu0 0.0
    %3107 = vmatprep.subr.mxu0 0.0
    %3108 = vmatpush1.xpose.msra.mxu0 0.0
    %3109 = vmatprep.subr.mxu0 0.0
    %3110 = vmatpush1.xpose.msra.mxu0 0.0
    %3111 = vmatprep.subr.mxu0 0.0
    %3112 = vmatpush1.xpose.msra.mxu0 0.0
    %3113 = vmatprep.subr.mxu0 0.0
    %3114 = vmatpush1.xpose.msra.mxu0 0.0
    %3115 = vmatprep.subr.mxu0 0.0
    %3116 = vmatpush1.xpose.msra.mxu0 0.0
    %3117 = vmatprep.subr.mxu0 0.0
    %3118 = vmatpush1.xpose.msra.mxu0 0.0
    %3119 = vmatprep.subr.mxu0 0.0
    %3120 = vmatpush1.xpose.msra.mxu0 0.0
    %3121 = vmatprep.subr.mxu0 0.0
    %3122 = vmatpush1.xpose.msra.mxu0 0.0
    %3123 = vmatprep.subr.mxu0 0.0
    %3124 = vmatpush1.xpose.msra.mxu0 0.0
    %3125 = vmatprep.subr.mxu0 0.0
    %3126 = vmatpush1.xpose.msra.mxu0 0.0
    %3127 = vmatprep.subr.mxu0 0.0
    %3128 = vmatpush1.xpose.msra.mxu0 0.0
    %3129 = vmatprep.subr.mxu0 0.0
    %3130 = vmatpush1.xpose.msra.mxu0 0.0
    %3131 = vmatprep.subr.mxu0 0.0
    %3132 = vmatpush1.xpose.msra.mxu0 0.0
    %3133 = vmatprep.subr.mxu0 0.0
    %3134 = vmatpush1.xpose.msra.mxu0 0.0
    %3135 = vmatprep.subr.mxu0 0.0
    %3136 = vmatpush1.xpose.msra.mxu0 0.0
    %3137 = vmatprep.subr.mxu0 0.0
    %3138 = vmatpush1.xpose.msra.mxu0 0.0
    %3139 = vmatprep.subr.mxu0 0.0
    %3140 = vmatpush1.xpose.msra.mxu0 0.0
    %3141 = vmatprep.subr.mxu0 0.0
    %3142 = vmatpush1.xpose.msra.mxu0 0.0
    %3143 = vmatprep.mubr.f32.mxu0 0.0
    %3144 = vmatmul.mubr.f32.gmra.mrb[0].mxu0 %v3075
    %v3145 = vpop.f32.mrb[0].mxu0
    %v3146 = vadd.f32 0.0, %v3145
    %v3147 = vpop.f32.mrb[0].mxu0
    %3148 = vdwg.mxu0
    %v3149 = vsel %vm238, %v3146, -inf
    %3150 = vmax.xlane.f32.xlu0 %v3149
    %v3151 = vpop.xlane.xlu0 %3150
    %v3152 = vsub.f32 %v3146, %v3151
    %v3153 = vmul.f32 %v3152, 1.442695
    %v3154 = vpow.pop %v3153
    %v3155 = vsel %vm238, %v3154, 0.0
    %3156 = vadd.xlane.f32.xlu0 %v3155
    %v3157 = vpop.xlane.xlu0 %3156
    %v3158 = vrcp.pop %v3157
    %v3159 = vmul.f32 %v3154, %v3158
    %3160 = vrot.lane.b32.xlu0 %v2058, 48
    %v3161 = vpop.permute.xlu0 %3160
    %v3164 = vsel %vm238, %v3159, 0
    %3166 = vmatprep.subr.mxu0 0.0
    %3167 = vmatpush1.msra.mxu0 %v3161
    %3168 = vmatprep.subr.mxu0 0.0
    %3169 = vmatpush1.msra.mxu0 0.0
    %3170 = vmatprep.subr.mxu0 0.0
    %3171 = vmatpush1.msra.mxu0 0.0
    %3172 = vmatprep.subr.mxu0 0.0
    %3173 = vmatpush1.msra.mxu0 0.0
    %3174 = vmatprep.subr.mxu0 0.0
    %3175 = vmatpush1.msra.mxu0 0.0
    %3176 = vmatprep.subr.mxu0 0.0
    %3177 = vmatpush1.msra.mxu0 0.0
    %3178 = vmatprep.subr.mxu0 0.0
    %3179 = vmatpush1.msra.mxu0 0.0
    %3180 = vmatprep.subr.mxu0 0.0
    %3181 = vmatpush1.msra.mxu0 0.0
    %3182 = vmatprep.subr.mxu0 0.0
    %3183 = vmatpush1.msra.mxu0 0.0
    %3184 = vmatprep.subr.mxu0 0.0
    %3185 = vmatpush1.msra.mxu0 0.0
    %3186 = vmatprep.subr.mxu0 0.0
    %3187 = vmatpush1.msra.mxu0 0.0
    %3188 = vmatprep.subr.mxu0 0.0
    %3189 = vmatpush1.msra.mxu0 0.0
    %3190 = vmatprep.subr.mxu0 0.0
    %3191 = vmatpush1.msra.mxu0 0.0
    %3192 = vmatprep.subr.mxu0 0.0
    %3193 = vmatpush1.msra.mxu0 0.0
    %3194 = vmatprep.subr.mxu0 0.0
    %3195 = vmatpush1.msra.mxu0 0.0
    %3196 = vmatprep.subr.mxu0 0.0
    %3197 = vmatpush1.msra.mxu0 0.0
    %3198 = vmatprep.subr.mxu0 0.0
    %3199 = vmatpush1.msra.mxu0 0.0
    %3200 = vmatprep.subr.mxu0 0.0
    %3201 = vmatpush1.msra.mxu0 0.0
    %3202 = vmatprep.subr.mxu0 0.0
    %3203 = vmatpush1.msra.mxu0 0.0
    %3204 = vmatprep.subr.mxu0 0.0
    %3205 = vmatpush1.msra.mxu0 0.0
    %3206 = vmatprep.subr.mxu0 0.0
    %3207 = vmatpush1.msra.mxu0 0.0
    %3208 = vmatprep.subr.mxu0 0.0
    %3209 = vmatpush1.msra.mxu0 0.0
    %3210 = vmatprep.subr.mxu0 0.0
    %3211 = vmatpush1.msra.mxu0 0.0
    %3212 = vmatprep.subr.mxu0 0.0
    %3213 = vmatpush1.msra.mxu0 0.0
    %3214 = vmatprep.subr.mxu0 0.0
    %3215 = vmatpush1.msra.mxu0 0.0
    %3216 = vmatprep.subr.mxu0 0.0
    %3217 = vmatpush1.msra.mxu0 0.0
    %3218 = vmatprep.subr.mxu0 0.0
    %3219 = vmatpush1.msra.mxu0 0.0
    %3220 = vmatprep.subr.mxu0 0.0
    %3221 = vmatpush1.msra.mxu0 0.0
    %3222 = vmatprep.subr.mxu0 0.0
    %3223 = vmatpush1.msra.mxu0 0.0
    %3224 = vmatprep.subr.mxu0 0.0
    %3225 = vmatpush1.msra.mxu0 0.0
    %3226 = vmatprep.subr.mxu0 0.0
    %3227 = vmatpush1.msra.mxu0 0.0
    %3228 = vmatprep.subr.mxu0 0.0
    %3229 = vmatpush1.msra.mxu0 0.0
    %3230 = vmatprep.mubr.f32.mxu0 0.0
    %3231 = vmatmul.mubr.f32.gmra.mrb[0].mxu0 %v3164
    %v3232 = vpop.f32.mrb[0].mxu0
    %v3233 = vadd.f32 0.0, %v3232
    %v3234 = vpop.f32.mrb[0].mxu0
    %3235 = vdwg.mxu0
    %3237 = vrot.lane.b32.xlu0 %v3233, 16
    %v3238 = vpop.permute.xlu0 %3237
    %3240 = vst.msk [vmem:[#allocation2 + $0x8] sm:$0xff] %vm741, %v3238
    %3241 = vrot.lane.b32.xlu0 %v2058, 104
    %v3242 = vpop.permute.xlu0 %3241
    %3243 = vrot.lane.b32.xlu0 %v2058, 72
    %v3244 = vpop.permute.xlu0 %3243
    %v3245 = vsel %vm238, %v3242, 0
    %v3247 = vsel %vm238, %v3244, 0
    %3249 = vmatprep.subr.mxu0 0.0
    %3250 = vmatpush1.xpose.msra.mxu0 %v3247
    %3251 = vmatprep.subr.mxu0 0.0
    %3252 = vmatpush1.xpose.msra.mxu0 0.0
    %3253 = vmatprep.subr.mxu0 0.0
    %3254 = vmatpush1.xpose.msra.mxu0 0.0
    %3255 = vmatprep.subr.mxu0 0.0
    %3256 = vmatpush1.xpose.msra.mxu0 0.0
    %3257 = vmatprep.subr.mxu0 0.0
    %3258 = vmatpush1.xpose.msra.mxu0 0.0
    %3259 = vmatprep.subr.mxu0 0.0
    %3260 = vmatpush1.xpose.msra.mxu0 0.0
    %3261 = vmatprep.subr.mxu0 0.0
    %3262 = vmatpush1.xpose.msra.mxu0 0.0
    %3263 = vmatprep.subr.mxu0 0.0
    %3264 = vmatpush1.xpose.msra.mxu0 0.0
    %3265 = vmatprep.subr.mxu0 0.0
    %3266 = vmatpush1.xpose.msra.mxu0 0.0
    %3267 = vmatprep.subr.mxu0 0.0
    %3268 = vmatpush1.xpose.msra.mxu0 0.0
    %3269 = vmatprep.subr.mxu0 0.0
    %3270 = vmatpush1.xpose.msra.mxu0 0.0
    %3271 = vmatprep.subr.mxu0 0.0
    %3272 = vmatpush1.xpose.msra.mxu0 0.0
    %3273 = vmatprep.subr.mxu0 0.0
    %3274 = vmatpush1.xpose.msra.mxu0 0.0
    %3275 = vmatprep.subr.mxu0 0.0
    %3276 = vmatpush1.xpose.msra.mxu0 0.0
    %3277 = vmatprep.subr.mxu0 0.0
    %3278 = vmatpush1.xpose.msra.mxu0 0.0
    %3279 = vmatprep.subr.mxu0 0.0
    %3280 = vmatpush1.xpose.msra.mxu0 0.0
    %3281 = vmatprep.subr.mxu0 0.0
    %3282 = vmatpush1.xpose.msra.mxu0 0.0
    %3283 = vmatprep.subr.mxu0 0.0
    %3284 = vmatpush1.xpose.msra.mxu0 0.0
    %3285 = vmatprep.subr.mxu0 0.0
    %3286 = vmatpush1.xpose.msra.mxu0 0.0
    %3287 = vmatprep.subr.mxu0 0.0
    %3288 = vmatpush1.xpose.msra.mxu0 0.0
    %3289 = vmatprep.subr.mxu0 0.0
    %3290 = vmatpush1.xpose.msra.mxu0 0.0
    %3291 = vmatprep.subr.mxu0 0.0
    %3292 = vmatpush1.xpose.msra.mxu0 0.0
    %3293 = vmatprep.subr.mxu0 0.0
    %3294 = vmatpush1.xpose.msra.mxu0 0.0
    %3295 = vmatprep.subr.mxu0 0.0
    %3296 = vmatpush1.xpose.msra.mxu0 0.0
    %3297 = vmatprep.subr.mxu0 0.0
    %3298 = vmatpush1.xpose.msra.mxu0 0.0
    %3299 = vmatprep.subr.mxu0 0.0
    %3300 = vmatpush1.xpose.msra.mxu0 0.0
    %3301 = vmatprep.subr.mxu0 0.0
    %3302 = vmatpush1.xpose.msra.mxu0 0.0
    %3303 = vmatprep.subr.mxu0 0.0
    %3304 = vmatpush1.xpose.msra.mxu0 0.0
    %3305 = vmatprep.subr.mxu0 0.0
    %3306 = vmatpush1.xpose.msra.mxu0 0.0
    %3307 = vmatprep.subr.mxu0 0.0
    %3308 = vmatpush1.xpose.msra.mxu0 0.0
    %3309 = vmatprep.subr.mxu0 0.0
    %3310 = vmatpush1.xpose.msra.mxu0 0.0
    %3311 = vmatprep.subr.mxu0 0.0
    %3312 = vmatpush1.xpose.msra.mxu0 0.0
    %3313 = vmatprep.mubr.f32.mxu0 0.0
    %3314 = vmatmul.mubr.f32.gmra.mrb[0].mxu0 %v3245
    %v3315 = vpop.f32.mrb[0].mxu0
    %v3316 = vadd.f32 0.0, %v3315
    %v3317 = vpop.f32.mrb[0].mxu0
    %3318 = vdwg.mxu0
    %v3319 = vsel %vm238, %v3316, -inf
    %3320 = vmax.xlane.f32.xlu0 %v3319
    %v3321 = vpop.xlane.xlu0 %3320
    %v3322 = vsub.f32 %v3316, %v3321
    %v3323 = vmul.f32 %v3322, 1.442695
    %v3324 = vpow.pop %v3323
    %v3325 = vsel %vm238, %v3324, 0.0
    %3326 = vadd.xlane.f32.xlu0 %v3325
    %v3327 = vpop.xlane.xlu0 %3326
    %v3328 = vrcp.pop %v3327
    %v3329 = vmul.f32 %v3324, %v3328
    %3330 = vrot.lane.b32.xlu0 %v2058, 40
    %v3331 = vpop.permute.xlu0 %3330
    %v3334 = vsel %vm238, %v3329, 0
    %3336 = vmatprep.subr.mxu0 0.0
    %3337 = vmatpush1.msra.mxu0 %v3331
    %3338 = vmatprep.subr.mxu0 0.0
    %3339 = vmatpush1.msra.mxu0 0.0
    %3340 = vmatprep.subr.mxu0 0.0
    %3341 = vmatpush1.msra.mxu0 0.0
    %3342 = vmatprep.subr.mxu0 0.0
    %3343 = vmatpush1.msra.mxu0 0.0
    %3344 = vmatprep.subr.mxu0 0.0
    %3345 = vmatpush1.msra.mxu0 0.0
    %3346 = vmatprep.subr.mxu0 0.0
    %3347 = vmatpush1.msra.mxu0 0.0
    %3348 = vmatprep.subr.mxu0 0.0
    %3349 = vmatpush1.msra.mxu0 0.0
    %3350 = vmatprep.subr.mxu0 0.0
    %3351 = vmatpush1.msra.mxu0 0.0
    %3352 = vmatprep.subr.mxu0 0.0
    %3353 = vmatpush1.msra.mxu0 0.0
    %3354 = vmatprep.subr.mxu0 0.0
    %3355 = vmatpush1.msra.mxu0 0.0
    %3356 = vmatprep.subr.mxu0 0.0
    %3357 = vmatpush1.msra.mxu0 0.0
    %3358 = vmatprep.subr.mxu0 0.0
    %3359 = vmatpush1.msra.mxu0 0.0
    %3360 = vmatprep.subr.mxu0 0.0
    %3361 = vmatpush1.msra.mxu0 0.0
    %3362 = vmatprep.subr.mxu0 0.0
    %3363 = vmatpush1.msra.mxu0 0.0
    %3364 = vmatprep.subr.mxu0 0.0
    %3365 = vmatpush1.msra.mxu0 0.0
    %3366 = vmatprep.subr.mxu0 0.0
    %3367 = vmatpush1.msra.mxu0 0.0
    %3368 = vmatprep.subr.mxu0 0.0
    %3369 = vmatpush1.msra.mxu0 0.0
    %3370 = vmatprep.subr.mxu0 0.0
    %3371 = vmatpush1.msra.mxu0 0.0
    %3372 = vmatprep.subr.mxu0 0.0
    %3373 = vmatpush1.msra.mxu0 0.0
    %3374 = vmatprep.subr.mxu0 0.0
    %3375 = vmatpush1.msra.mxu0 0.0
    %3376 = vmatprep.subr.mxu0 0.0
    %3377 = vmatpush1.msra.mxu0 0.0
    %3378 = vmatprep.subr.mxu0 0.0
    %3379 = vmatpush1.msra.mxu0 0.0
    %3380 = vmatprep.subr.mxu0 0.0
    %3381 = vmatpush1.msra.mxu0 0.0
    %3382 = vmatprep.subr.mxu0 0.0
    %3383 = vmatpush1.msra.mxu0 0.0
    %3384 = vmatprep.subr.mxu0 0.0
    %3385 = vmatpush1.msra.mxu0 0.0
    %3386 = vmatprep.subr.mxu0 0.0
    %3387 = vmatpush1.msra.mxu0 0.0
    %3388 = vmatprep.subr.mxu0 0.0
    %3389 = vmatpush1.msra.mxu0 0.0
    %3390 = vmatprep.subr.mxu0 0.0
    %3391 = vmatpush1.msra.mxu0 0.0
    %3392 = vmatprep.subr.mxu0 0.0
    %3393 = vmatpush1.msra.mxu0 0.0
    %3394 = vmatprep.subr.mxu0 0.0
    %3395 = vmatpush1.msra.mxu0 0.0
    %3396 = vmatprep.subr.mxu0 0.0
    %3397 = vmatpush1.msra.mxu0 0.0
    %3398 = vmatprep.subr.mxu0 0.0
    %3399 = vmatpush1.msra.mxu0 0.0
    %3400 = vmatprep.mubr.f32.mxu0 0.0
    %3401 = vmatmul.mubr.f32.gmra.mrb[0].mxu0 %v3334
    %v3402 = vpop.f32.mrb[0].mxu0
    %v3403 = vadd.f32 0.0, %v3402
    %v3404 = vpop.f32.mrb[0].mxu0
    %3405 = vdwg.mxu0
    %3407 = vrot.lane.b32.xlu0 %v3403, 24
    %v3408 = vpop.permute.xlu0 %3407
    %3410 = vst.msk [vmem:[#allocation2 + $0x8] sm:$0xff] %vm912, %v3408
    %v3411 = vld [vmem:[#allocation2] sm:$0xff]
    %v3412 = vld [vmem:[#allocation2 + $0x8] sm:$0xff]
    %s3413 = scalar_lea.vmem %s4, 32
    %v3414 = vld [vmem:[%s3413] sm:$0xff]
    %v3415 = vld [vmem:[%s3413 + $0x8] sm:$0xff]
    %v3416 = vld [vmem:[%s3413 + $0x10] sm:$0xff]
    %v3417 = vld [vmem:[%s3413 + $0x18] sm:$0xff]
    %s3418 = scalar_lea.vmem [#allocation9], 1
    %v3419 = vld [vmem:[%s3418] sm:$0x1]
    %v3421 = vlaneseq
    %v3422 = vshrl.u32 %v3421, 7
    %v3423 = vsub.s32 0, %v3422
    %v3424 = vrot.slane %v3419, %v3423
    %v3427 = vsel %vm153, %v3411, 0
    %v3430 = vsel %vm153, %v3412, 0
    %3432 = vmatprep.subr.mxu0 0.0
    %3433 = vmatpush1.msra.mxu0 %v3414
    %3434 = vmatprep.subr.mxu0 0.0
    %3435 = vmatpush1.msra.mxu0 %v3415
    %3436 = vmatprep.subr.mxu0 0.0
    %3437 = vmatpush1.msra.mxu0 %v3416
    %3438 = vmatprep.subr.mxu0 0.0
    %3439 = vmatpush1.msra.mxu0 %v3417
    %3440 = vmatprep.subr.mxu0 0.0
    %3441 = vmatpush1.msra.mxu0 0.0
    %3442 = vmatprep.subr.mxu0 0.0
    %3443 = vmatpush1.msra.mxu0 0.0
    %3444 = vmatprep.subr.mxu0 0.0
    %3445 = vmatpush1.msra.mxu0 0.0
    %3446 = vmatprep.subr.mxu0 0.0
    %3447 = vmatpush1.msra.mxu0 0.0
    %3448 = vmatprep.subr.mxu0 0.0
    %3449 = vmatpush1.msra.mxu0 0.0
    %3450 = vmatprep.subr.mxu0 0.0
    %3451 = vmatpush1.msra.mxu0 0.0
    %3452 = vmatprep.subr.mxu0 0.0
    %3453 = vmatpush1.msra.mxu0 0.0
    %3454 = vmatprep.subr.mxu0 0.0
    %3455 = vmatpush1.msra.mxu0 0.0
    %3456 = vmatprep.subr.mxu0 0.0
    %3457 = vmatpush1.msra.mxu0 0.0
    %3458 = vmatprep.subr.mxu0 0.0
    %3459 = vmatpush1.msra.mxu0 0.0
    %3460 = vmatprep.subr.mxu0 0.0
    %3461 = vmatpush1.msra.mxu0 0.0
    %3462 = vmatprep.subr.mxu0 0.0
    %3463 = vmatpush1.msra.mxu0 0.0
    %3464 = vmatprep.subr.mxu0 0.0
    %3465 = vmatpush1.msra.mxu0 0.0
    %3466 = vmatprep.subr.mxu0 0.0
    %3467 = vmatpush1.msra.mxu0 0.0
    %3468 = vmatprep.subr.mxu0 0.0
    %3469 = vmatpush1.msra.mxu0 0.0
    %3470 = vmatprep.subr.mxu0 0.0
    %3471 = vmatpush1.msra.mxu0 0.0
    %3472 = vmatprep.subr.mxu0 0.0
    %3473 = vmatpush1.msra.mxu0 0.0
    %3474 = vmatprep.subr.mxu0 0.0
    %3475 = vmatpush1.msra.mxu0 0.0
    %3476 = vmatprep.subr.mxu0 0.0
    %3477 = vmatpush1.msra.mxu0 0.0
    %3478 = vmatprep.subr.mxu0 0.0
    %3479 = vmatpush1.msra.mxu0 0.0
    %3480 = vmatprep.subr.mxu0 0.0
    %3481 = vmatpush1.msra.mxu0 0.0
    %3482 = vmatprep.subr.mxu0 0.0
    %3483 = vmatpush1.msra.mxu0 0.0
    %3484 = vmatprep.subr.mxu0 0.0
    %3485 = vmatpush1.msra.mxu0 0.0
    %3486 = vmatprep.subr.mxu0 0.0
    %3487 = vmatpush1.msra.mxu0 0.0
    %3488 = vmatprep.subr.mxu0 0.0
    %3489 = vmatpush1.msra.mxu0 0.0
    %3490 = vmatprep.subr.mxu0 0.0
    %3491 = vmatpush1.msra.mxu0 0.0
    %3492 = vmatprep.subr.mxu0 0.0
    %3493 = vmatpush1.msra.mxu0 0.0
    %3494 = vmatprep.subr.mxu0 0.0
    %3495 = vmatpush1.msra.mxu0 0.0
    %3496 = vmatprep.mubr.f32.mxu0 0.0
    %3497 = vmatmul.mubr.f32.gmra.mrb[0].mxu0 %v3427
    %v3498 = vpop.f32.mrb[0].mxu0
    %v3499 = vadd.f32 %v3424, %v3498
    %v3500 = vpop.f32.mrb[0].mxu0
    %3501 = vmatprep.mubr.f32.mxu0 0.0
    %3502 = vmatmul.mubr.f32.gmra.mrb[0].mxu0 %v3430
    %v3503 = vpop.f32.mrb[0].mxu0
    %v3504 = vadd.f32 %v3424, %v3503
    %v3505 = vpop.f32.mrb[0].mxu0
    %3506 = vdwg.mxu0
    %v3507 = vadd.f32 %v1965, %v3499
    %v3508 = vadd.f32 %v1966, %v3504
    %s3509 = scalar_lea.vmem [#allocation10], 1
    %v3510 = vld [vmem:[%s3509] sm:$0x1]
    %s3511 = scalar_lea.vmem [#allocation12], 1
    %v3512 = vld [vmem:[%s3511] sm:$0x1]
    %v3513 = vsel %vm153, %v3507, 0.0
    %3514 = vadd.xlane.f32.xlu0 %v3513
    %v3515 = vpop.xlane.xlu0 %3514
    %v3516 = vsel %vm153, %v3508, 0.0
    %3517 = vadd.xlane.f32.xlu0 %v3516
    %v3518 = vpop.xlane.xlu0 %3517
    %v3519 = vmul.f32 %v3515, %v1693
    %v3520 = vmul.f32 %v3518, %v1693
    %v3521 = vsub.f32 %v3507, %v3519
    %v3522 = vsub.f32 %v3508, %v3520
    %v3523 = vmul.f32 %v3521, %v3521
    %v3524 = vmul.f32 %v3522, %v3522
    %v3525 = vsel %vm153, %v3523, 0.0
    %3526 = vadd.xlane.f32.xlu0 %v3525
    %v3527 = vpop.xlane.xlu0 %3526
    %v3528 = vsel %vm153, %v3524, 0.0
    %3529 = vadd.xlane.f32.xlu0 %v3528
    %v3530 = vpop.xlane.xlu0 %3529
    %v3531 = vmul.f32 %v3527, %v1693
    %v3532 = vmul.f32 %v3530, %v1693
    %v3533 = vadd.f32 %v3531, 1e-05
    %v3534 = vadd.f32 %v3532, 1e-05
    %v3535 = vrsqrt.pop %v3533
    %v3536 = vrsqrt.pop %v3534
    %v3537 = vmul.f32 %v3521, %v3535
    %v3538 = vmul.f32 %v3522, %v3536
    %v3540 = vlaneseq
    %v3541 = vshrl.u32 %v3540, 7
    %v3542 = vsub.s32 0, %v3541
    %v3543 = vrot.slane %v3510, %v3542
    %v3545 = vmul.f32 %v3537, %v3543
    %v3546 = vmul.f32 %v3538, %v3543
    %v3548 = vlaneseq
    %v3549 = vshrl.u32 %v3548, 7
    %v3550 = vsub.s32 0, %v3549
    %v3551 = vrot.slane %v3512, %v3550
    %v3553 = vadd.f32 %v3545, %v3551
    %v3554 = vadd.f32 %v3546, %v3551
    %s3555 = scalar_lea.vmem %s8, 32
    %v3556 = vld [vmem:[%s3555] sm:$0xff]
    %v3557 = vld [vmem:[%s3555 + $0x8] sm:$0xff]
    %v3558 = vld [vmem:[%s3555 + $0x10] sm:$0xff]
    %v3559 = vld [vmem:[%s3555 + $0x18] sm:$0xff]
    %s3560 = scalar_lea.vmem [#allocation13], 1
    %v3561 = vld [vmem:[%s3560] sm:$0x1]
    %v3563 = vlaneseq
    %v3564 = vshrl.u32 %v3563, 7
    %v3565 = vsub.s32 0, %v3564
    %v3566 = vrot.slane %v3561, %v3565
    %v3569 = vsel %vm153, %v3553, 0
    %v3572 = vsel %vm153, %v3554, 0
    %3574 = vmatprep.subr.mxu0 0.0
    %3575 = vmatpush1.msra.mxu0 %v3556
    %3576 = vmatprep.subr.mxu0 0.0
    %3577 = vmatpush1.msra.mxu0 %v3557
    %3578 = vmatprep.subr.mxu0 0.0
    %3579 = vmatpush1.msra.mxu0 %v3558
    %3580 = vmatprep.subr.mxu0 0.0
    %3581 = vmatpush1.msra.mxu0 %v3559
    %3582 = vmatprep.subr.mxu0 0.0
    %3583 = vmatpush1.msra.mxu0 0.0
    %3584 = vmatprep.subr.mxu0 0.0
    %3585 = vmatpush1.msra.mxu0 0.0
    %3586 = vmatprep.subr.mxu0 0.0
    %3587 = vmatpush1.msra.mxu0 0.0
    %3588 = vmatprep.subr.mxu0 0.0
    %3589 = vmatpush1.msra.mxu0 0.0
    %3590 = vmatprep.subr.mxu0 0.0
    %3591 = vmatpush1.msra.mxu0 0.0
    %3592 = vmatprep.subr.mxu0 0.0
    %3593 = vmatpush1.msra.mxu0 0.0
    %3594 = vmatprep.subr.mxu0 0.0
    %3595 = vmatpush1.msra.mxu0 0.0
    %3596 = vmatprep.subr.mxu0 0.0
    %3597 = vmatpush1.msra.mxu0 0.0
    %3598 = vmatprep.subr.mxu0 0.0
    %3599 = vmatpush1.msra.mxu0 0.0
    %3600 = vmatprep.subr.mxu0 0.0
    %3601 = vmatpush1.msra.mxu0 0.0
    %3602 = vmatprep.subr.mxu0 0.0
    %3603 = vmatpush1.msra.mxu0 0.0
    %3604 = vmatprep.subr.mxu0 0.0
    %3605 = vmatpush1.msra.mxu0 0.0
    %3606 = vmatprep.subr.mxu0 0.0
    %3607 = vmatpush1.msra.mxu0 0.0
    %3608 = vmatprep.subr.mxu0 0.0
    %3609 = vmatpush1.msra.mxu0 0.0
    %3610 = vmatprep.subr.mxu0 0.0
    %3611 = vmatpush1.msra.mxu0 0.0
    %3612 = vmatprep.subr.mxu0 0.0
    %3613 = vmatpush1.msra.mxu0 0.0
    %3614 = vmatprep.subr.mxu0 0.0
    %3615 = vmatpush1.msra.mxu0 0.0
    %3616 = vmatprep.subr.mxu0 0.0
    %3617 = vmatpush1.msra.mxu0 0.0
    %3618 = vmatprep.subr.mxu0 0.0
    %3619 = vmatpush1.msra.mxu0 0.0
    %3620 = vmatprep.subr.mxu0 0.0
    %3621 = vmatpush1.msra.mxu0 0.0
    %3622 = vmatprep.subr.mxu0 0.0
    %3623 = vmatpush1.msra.mxu0 0.0
    %3624 = vmatprep.subr.mxu0 0.0
    %3625 = vmatpush1.msra.mxu0 0.0
    %3626 = vmatprep.subr.mxu0 0.0
    %3627 = vmatpush1.msra.mxu0 0.0
    %3628 = vmatprep.subr.mxu0 0.0
    %3629 = vmatpush1.msra.mxu0 0.0
    %3630 = vmatprep.subr.mxu0 0.0
    %3631 = vmatpush1.msra.mxu0 0.0
    %3632 = vmatprep.subr.mxu0 0.0
    %3633 = vmatpush1.msra.mxu0 0.0
    %3634 = vmatprep.subr.mxu0 0.0
    %3635 = vmatpush1.msra.mxu0 0.0
    %3636 = vmatprep.subr.mxu0 0.0
    %3637 = vmatpush1.msra.mxu0 0.0
    %3638 = vmatprep.mubr.f32.mxu0 0.0
    %3639 = vmatmul.mubr.f32.gmra.mrb[0].mxu0 %v3569
    %v3640 = vpop.f32.mrb[0].mxu0
    %v3641 = vadd.f32 %v3566, %v3640
    %v3642 = vpop.f32.mrb[0].mxu0
    %3643 = vmatprep.mubr.f32.mxu0 0.0
    %3644 = vmatmul.mubr.f32.gmra.mrb[0].mxu0 %v3572
    %v3645 = vpop.f32.mrb[0].mxu0
    %v3646 = vadd.f32 %v3566, %v3645
    %v3647 = vpop.f32.mrb[0].mxu0
    %3648 = vdwg.mxu0
    %v3649 = vmax.f32 %v3641, 0.0
    %v3650 = vmax.f32 %v3646, 0.0
    %s3651 = scalar_lea.vmem %s10, 64
    %v3652 = vld [vmem:[%s3651] sm:$0xff]
    %v3653 = vld [vmem:[%s3651 + $0x8] sm:$0xff]
    %v3654 = vld [vmem:[%s3651 + $0x10] sm:$0xff]
    %v3655 = vld [vmem:[%s3651 + $0x18] sm:$0xff]
    %v3656 = vld [vmem:[%s3651 + $0x20] sm:$0xff]
    %v3657 = vld [vmem:[%s3651 + $0x28] sm:$0xff]
    %v3658 = vld [vmem:[%s3651 + $0x30] sm:$0xff]
    %v3659 = vld [vmem:[%s3651 + $0x38] sm:$0xff]
    %s3660 = scalar_lea.vmem %s11, 1
    %v3661 = vld [vmem:[%s3660] sm:$0x1]
    %v3663 = vlaneseq
    %v3664 = vshrl.u32 %v3663, 7
    %v3665 = vsub.s32 0, %v3664
    %v3666 = vrot.slane %v3661, %v3665
    %v3669 = vsel %vm1839, %v3649, 0
    %v3672 = vsel %vm1839, %v3650, 0
    %3674 = vmatprep.subr.mxu0 0.0
    %3675 = vmatpush1.msra.mxu0 %v3652
    %3676 = vmatprep.subr.mxu0 0.0
    %3677 = vmatpush1.msra.mxu0 %v3653
    %3678 = vmatprep.subr.mxu0 0.0
    %3679 = vmatpush1.msra.mxu0 %v3654
    %3680 = vmatprep.subr.mxu0 0.0
    %3681 = vmatpush1.msra.mxu0 %v3655
    %3682 = vmatprep.subr.mxu0 0.0
    %3683 = vmatpush1.msra.mxu0 %v3656
    %3684 = vmatprep.subr.mxu0 0.0
    %3685 = vmatpush1.msra.mxu0 %v3657
    %3686 = vmatprep.subr.mxu0 0.0
    %3687 = vmatpush1.msra.mxu0 %v3658
    %3688 = vmatprep.subr.mxu0 0.0
    %3689 = vmatpush1.msra.mxu0 %v3659
    %3690 = vmatprep.subr.mxu0 0.0
    %3691 = vmatpush1.msra.mxu0 0.0
    %3692 = vmatprep.subr.mxu0 0.0
    %3693 = vmatpush1.msra.mxu0 0.0
    %3694 = vmatprep.subr.mxu0 0.0
    %3695 = vmatpush1.msra.mxu0 0.0
    %3696 = vmatprep.subr.mxu0 0.0
    %3697 = vmatpush1.msra.mxu0 0.0
    %3698 = vmatprep.subr.mxu0 0.0
    %3699 = vmatpush1.msra.mxu0 0.0
    %3700 = vmatprep.subr.mxu0 0.0
    %3701 = vmatpush1.msra.mxu0 0.0
    %3702 = vmatprep.subr.mxu0 0.0
    %3703 = vmatpush1.msra.mxu0 0.0
    %3704 = vmatprep.subr.mxu0 0.0
    %3705 = vmatpush1.msra.mxu0 0.0
    %3706 = vmatprep.subr.mxu0 0.0
    %3707 = vmatpush1.msra.mxu0 0.0
    %3708 = vmatprep.subr.mxu0 0.0
    %3709 = vmatpush1.msra.mxu0 0.0
    %3710 = vmatprep.subr.mxu0 0.0
    %3711 = vmatpush1.msra.mxu0 0.0
    %3712 = vmatprep.subr.mxu0 0.0
    %3713 = vmatpush1.msra.mxu0 0.0
    %3714 = vmatprep.subr.mxu0 0.0
    %3715 = vmatpush1.msra.mxu0 0.0
    %3716 = vmatprep.subr.mxu0 0.0
    %3717 = vmatpush1.msra.mxu0 0.0
    %3718 = vmatprep.subr.mxu0 0.0
    %3719 = vmatpush1.msra.mxu0 0.0
    %3720 = vmatprep.subr.mxu0 0.0
    %3721 = vmatpush1.msra.mxu0 0.0
    %3722 = vmatprep.subr.mxu0 0.0
    %3723 = vmatpush1.msra.mxu0 0.0
    %3724 = vmatprep.subr.mxu0 0.0
    %3725 = vmatpush1.msra.mxu0 0.0
    %3726 = vmatprep.subr.mxu0 0.0
    %3727 = vmatpush1.msra.mxu0 0.0
    %3728 = vmatprep.subr.mxu0 0.0
    %3729 = vmatpush1.msra.mxu0 0.0
    %3730 = vmatprep.subr.mxu0 0.0
    %3731 = vmatpush1.msra.mxu0 0.0
    %3732 = vmatprep.subr.mxu0 0.0
    %3733 = vmatpush1.msra.mxu0 0.0
    %3734 = vmatprep.subr.mxu0 0.0
    %3735 = vmatpush1.msra.mxu0 0.0
    %3736 = vmatprep.subr.mxu0 0.0
    %3737 = vmatpush1.msra.mxu0 0.0
    %3738 = vmatprep.mubr.f32.mxu0 0.0
    %3739 = vmatmul.mubr.f32.gmra.mrb[0].mxu0 %v3669
    %v3740 = vpop.f32.mrb[0].mxu0
    %v3741 = vadd.f32 %v3666, %v3740
    %v3742 = vpop.f32.mrb[0].mxu0
    %3743 = vmatprep.mubr.f32.mxu0 0.0
    %3744 = vmatmul.mubr.f32.gmra.mrb[0].mxu0 %v3672
    %v3745 = vpop.f32.mrb[0].mxu0
    %v3746 = vadd.f32 %v3666, %v3745
    %v3747 = vpop.f32.mrb[0].mxu0
    %3748 = vdwg.mxu0
    %v3749 = vadd.f32 %v3553, %v3741
    %v3750 = vadd.f32 %v3554, %v3746
    %s3751 = scalar_lea.vmem %s12, 1
    %v3752 = vld [vmem:[%s3751] sm:$0x1]
    %s3753 = scalar_lea.vmem %s13, 1
    %v3754 = vld [vmem:[%s3753] sm:$0x1]
    %v3755 = vsel %vm153, %v3749, 0.0
    %3756 = vadd.xlane.f32.xlu0 %v3755
    %v3757 = vpop.xlane.xlu0 %3756
    %v3758 = vsel %vm153, %v3750, 0.0
    %3759 = vadd.xlane.f32.xlu0 %v3758
    %v3760 = vpop.xlane.xlu0 %3759
    %v3761 = vmul.f32 %v3757, %v1693
    %v3762 = vmul.f32 %v3760, %v1693
    %v3763 = vsub.f32 %v3749, %v3761
    %v3764 = vsub.f32 %v3750, %v3762
    %v3765 = vmul.f32 %v3763, %v3763
    %v3766 = vmul.f32 %v3764, %v3764
    %v3767 = vsel %vm153, %v3765, 0.0
    %3768 = vadd.xlane.f32.xlu0 %v3767
    %v3769 = vpop.xlane.xlu0 %3768
    %v3770 = vsel %vm153, %v3766, 0.0
    %3771 = vadd.xlane.f32.xlu0 %v3770
    %v3772 = vpop.xlane.xlu0 %3771
    %v3773 = vmul.f32 %v3769, %v1693
    %v3774 = vmul.f32 %v3772, %v1693
    %v3775 = vadd.f32 %v3773, 1e-05
    %v3776 = vadd.f32 %v3774, 1e-05
    %v3777 = vrsqrt.pop %v3775
    %v3778 = vrsqrt.pop %v3776
    %v3779 = vmul.f32 %v3763, %v3777
    %v3780 = vmul.f32 %v3764, %v3778
    %v3782 = vlaneseq
    %v3783 = vshrl.u32 %v3782, 7
    %v3784 = vsub.s32 0, %v3783
    %v3785 = vrot.slane %v3752, %v3784
    %v3787 = vmul.f32 %v3779, %v3785
    %v3788 = vmul.f32 %v3780, %v3785
    %v3790 = vlaneseq
    %v3791 = vshrl.u32 %v3790, 7
    %v3792 = vsub.s32 0, %v3791
    %v3793 = vrot.slane %v3754, %v3792
    %v3795 = vadd.f32 %v3787, %v3793
    %v3796 = vadd.f32 %v3788, %v3793
    %vm3797 = vcmask 253952
    %3798 = vst.msk [vmem:[#allocation3] sm:$0x1] %vm3797, %v3795
    %3799 = vst.msk [vmem:[#allocation3 + $0x1] sm:$0x1] %vm3797, %v3796
    %v3800 = vld [vmem:[#allocation3] sm:$0x3]
    %v3801 = vld [vmem:[%s14] sm:$0xff]
    %v3802 = vld [vmem:[%s14 + $0x8] sm:$0xff]
    %v3803 = vld [vmem:[%s14 + $0x10] sm:$0xff]
    %v3804 = vld [vmem:[%s14 + $0x18] sm:$0xff]
    %v3805 = vld [vmem:[%s15] sm:$0x1]
    %v3807 = vlaneseq
    %v3808 = vshrl.u32 %v3807, 7
    %v3809 = vsub.s32 0, %v3808
    %v3810 = vrot.slane %v3805, %v3809
    %v3813 = vsel %vm153, %v3800, 0
    %3815 = vmatprep.subr.mxu0 0.0
    %3816 = vmatpush1.msra.mxu0 %v3801
    %3817 = vmatprep.subr.mxu0 0.0
    %3818 = vmatpush1.msra.mxu0 %v3802
    %3819 = vmatprep.subr.mxu0 0.0
    %3820 = vmatpush1.msra.mxu0 %v3803
    %3821 = vmatprep.subr.mxu0 0.0
    %3822 = vmatpush1.msra.mxu0 %v3804
    %3823 = vmatprep.subr.mxu0 0.0
    %3824 = vmatpush1.msra.mxu0 0.0
    %3825 = vmatprep.subr.mxu0 0.0
    %3826 = vmatpush1.msra.mxu0 0.0
    %3827 = vmatprep.subr.mxu0 0.0
    %3828 = vmatpush1.msra.mxu0 0.0
    %3829 = vmatprep.subr.mxu0 0.0
    %3830 = vmatpush1.msra.mxu0 0.0
    %3831 = vmatprep.subr.mxu0 0.0
    %3832 = vmatpush1.msra.mxu0 0.0
    %3833 = vmatprep.subr.mxu0 0.0
    %3834 = vmatpush1.msra.mxu0 0.0
    %3835 = vmatprep.subr.mxu0 0.0
    %3836 = vmatpush1.msra.mxu0 0.0
    %3837 = vmatprep.subr.mxu0 0.0
    %3838 = vmatpush1.msra.mxu0 0.0
    %3839 = vmatprep.subr.mxu0 0.0
    %3840 = vmatpush1.msra.mxu0 0.0
    %3841 = vmatprep.subr.mxu0 0.0
    %3842 = vmatpush1.msra.mxu0 0.0
    %3843 = vmatprep.subr.mxu0 0.0
    %3844 = vmatpush1.msra.mxu0 0.0
    %3845 = vmatprep.subr.mxu0 0.0
    %3846 = vmatpush1.msra.mxu0 0.0
    %3847 = vmatprep.subr.mxu0 0.0
    %3848 = vmatpush1.msra.mxu0 0.0
    %3849 = vmatprep.subr.mxu0 0.0
    %3850 = vmatpush1.msra.mxu0 0.0
    %3851 = vmatprep.subr.mxu0 0.0
    %3852 = vmatpush1.msra.mxu0 0.0
    %3853 = vmatprep.subr.mxu0 0.0
    %3854 = vmatpush1.msra.mxu0 0.0
    %3855 = vmatprep.subr.mxu0 0.0
    %3856 = vmatpush1.msra.mxu0 0.0
    %3857 = vmatprep.subr.mxu0 0.0
    %3858 = vmatpush1.msra.mxu0 0.0
    %3859 = vmatprep.subr.mxu0 0.0
    %3860 = vmatpush1.msra.mxu0 0.0
    %3861 = vmatprep.subr.mxu0 0.0
    %3862 = vmatpush1.msra.mxu0 0.0
    %3863 = vmatprep.subr.mxu0 0.0
    %3864 = vmatpush1.msra.mxu0 0.0
    %3865 = vmatprep.subr.mxu0 0.0
    %3866 = vmatpush1.msra.mxu0 0.0
    %3867 = vmatprep.subr.mxu0 0.0
    %3868 = vmatpush1.msra.mxu0 0.0
    %3869 = vmatprep.subr.mxu0 0.0
    %3870 = vmatpush1.msra.mxu0 0.0
    %3871 = vmatprep.subr.mxu0 0.0
    %3872 = vmatpush1.msra.mxu0 0.0
    %3873 = vmatprep.subr.mxu0 0.0
    %3874 = vmatpush1.msra.mxu0 0.0
    %3875 = vmatprep.subr.mxu0 0.0
    %3876 = vmatpush1.msra.mxu0 0.0
    %3877 = vmatprep.subr.mxu0 0.0
    %3878 = vmatpush1.msra.mxu0 0.0
    %3879 = vmatprep.mubr.f32.mxu0 0.0
    %3880 = vmatmul.mubr.f32.gmra.mrb[0].mxu0 %v3813
    %v3881 = vpop.f32.mrb[0].mxu0
    %v3882 = vadd.f32 %v3810, %v3881
    %v3883 = vpop.f32.mrb[0].mxu0
    %3884 = vdwg.mxu0
    %3885 = vst [vmem:[#allocation15] sm:$0x3] %v3882
    // Predicated region
    $region90: #{tpu_custom_call.1} parent=1 // pred_check
      _
    $region91: #{tpu_custom_call.1} parent=1 // pred_check_branch
      %3887 = sbr.rel (0) target = $region93
    $region92: #{tpu_custom_call.1} parent=1 // pred_region
      %s3889 = ssub.s32 32, 32
      %3890 = vsyncadd [#allocation6], %s3889
      %s3892 = sshll.u32 [#allocation15], 4
      %s3893 = int_to_ptr.vmem [resolvable:$true] %s3892
      %3895 = dma.vmem_to_hbm [thread:$0]  %s3893, 32, %s16, [#allocation6]
    $region93: #{tpu_custom_call.1} parent=1 // pred_fallthru
      _
    // Predicated region
    $region94: #{tpu_custom_call.1} parent=1 // pred_check
      _
    $region95: #{tpu_custom_call.1} parent=1 // pred_check_branch
      %3897 = sbr.rel (0) target = $region97
    $region96: #{tpu_custom_call.1} parent=1 // pred_region
      %3898 = dma.done [#allocation6], 32
    $region97: #{tpu_custom_call.1} parent=1 // pred_fallthru
      _
    %3899 = vsyncpa [#allocation5], 1
    %3900 = vsyncpa [#allocation8], 1
    %3901 = vsyncpa [#allocation11], 1
    %3902 = vsyncpa [#allocation14], 1
    %3903 = vsyncpa [#allocation6], 1

</llo_original>
